<compile_context>
chip_gen: v7x
topology: tpu7x:2x2x1
jax: 0.10.0
libtpu: 0.0.40
codegen_flags: <defaults>
</compile_context>

<pallas_src>
import functools

import numpy as np
import jax
import jax.numpy as jnp
from jax import lax
from jax.experimental import pallas as pl
from jax.experimental.pallas import tpu as pltpu

# ---------------- config (synthetic SparseInst) ----------------
PATCH = 4            # backbone stride
HIDDEN = 32          # feature / kernel dim
NUM_INST = 8         # number of instance queries (IAM groups)
NUM_CLASSES = 8
CLS_THRESHOLD = 0.005
MASK_THRESHOLD = 0.45
RESCORE_THRESHOLD = 0.45   # hard-coded in inference_single: pred_masks > 0.45


# ================= fused kernel: dense chain + postproc + resize ==============
def _fused_kernel(num_classes, cls_threshold, mask_threshold,
                  patches_ref, w_bb_ref, w_enc_ref, w_mask_ref, w_iam_ref,
                  w_heads_ref, r_t_ref, packed_ref, masks_ref):
    f32 = jnp.float32

    # backbone (stride-PATCH patch embedding) + encoder (1x1 conv) -> MXU matmuls
    patches = patches_ref[...]                                            # [HW, K]
    feat = jax.nn.relu(jnp.dot(patches, w_bb_ref[...],
                               preferred_element_type=f32))               # [HW, D]
    feat = jax.nn.relu(jnp.dot(feat, w_enc_ref[...],
                               preferred_element_type=f32))               # [HW, D]

    # decoder: mask features + instance activation maps
    mask_feat = jax.nn.relu(jnp.dot(feat, w_mask_ref[...],
                                    preferred_element_type=f32))          # [HW, D]
    iam = jax.nn.sigmoid(jnp.dot(feat, w_iam_ref[...],
                                 preferred_element_type=f32))             # [HW, N]

    # instance features: normalized iam^T @ feat (contract dim 0 of both
    # operands -- no transposed copy is ever materialised).
    denom = jnp.sum(iam, axis=0, keepdims=True) + 1e-6                    # [1, N]
    iam_n = iam * pl.reciprocal(denom, approx=True)                       # [HW, N]
    inst = lax.dot_general(iam_n, feat, (((0,), (0,)), ((), ())),
                           preferred_element_type=f32)                    # [N, D]

    # prediction heads: [class logits | objectness | mask kernels]
    heads = jnp.dot(inst, w_heads_ref[...], preferred_element_type=f32)   # [N, C+1+D]
    pred_logits = heads[:, :num_classes]                                  # [N, C]
    pred_obj = heads[:, num_classes:num_classes + 1]                      # [N, 1]
    kernels = heads[:, num_classes + 1:]                                  # [N, D]

    # mask logits: kernels @ mask_feat^T (contract dim 1 of both operands)
    mask_logits = lax.dot_general(kernels, mask_feat, (((1,), (1,)), ((), ())),
                                  preferred_element_type=f32)             # [N, HW]

    # ---------------- inference_single / rescoring_mask ----------------------
    cls = jax.nn.sigmoid(pred_logits)                                     # [N, C]
    cls_scores = jnp.max(cls, axis=-1, keepdims=True)                     # [N, 1]
    col = lax.broadcasted_iota(jnp.int32, cls.shape, 1)
    labels = jnp.min(jnp.where(cls >= cls_scores, col, num_classes),
                     axis=-1, keepdims=True)                              # [N, 1]
    obj = jax.nn.sigmoid(pred_obj)                                        # [N, 1]
    keep = cls_scores > cls_threshold                                     # [N, 1]
    comb = jnp.sqrt(cls_scores * obj)                                     # [N, 1]

    m = jax.nn.sigmoid(mask_logits)                                       # [N, HW]
    mp = (m > RESCORE_THRESHOLD).astype(f32)
    num = jnp.sum(m * mp, axis=-1, keepdims=True)
    den = jnp.sum(mp, axis=-1, keepdims=True) + 1e-6
    rescored = comb * num * pl.reciprocal(den, approx=True)
    scores = jnp.where(keep, rescored, 0.0)

    # lane-dense packed scalar output: lane 0 = score, lane 1 = label, lane 2 = keep
    lane = lax.broadcasted_iota(jnp.int32, packed_ref.shape, 1)           # [N, 128]
    packed = jnp.where(lane == 0, scores,
             jnp.where(lane == 1, labels.astype(f32),
             jnp.where(lane == 2, keep.astype(f32), 0.0)))
    packed_ref[...] = packed

    # fused resize(pad) -> crop -> resize(ori) -> threshold via the composed
    # Kronecker operator R^T [HW, oh*ow] acting on the flat [N, HW] masks.
    resized = jnp.dot(m, r_t_ref[...], preferred_element_type=f32)        # [N, oh*ow]
    masks_ref[...] = (resized > mask_threshold).astype(jnp.int32)


def _run_fused(patches, params, r_t):
    hw, kdim = patches.shape
    n, c, d = NUM_INST, NUM_CLASSES, HIDDEN
    n_out = r_t.shape[1]

    def full_spec(shape):
        nd = len(shape)
        return pl.BlockSpec(shape, lambda i, _nd=nd: (0,) * _nd)

    # NOTE: at these shapes everything (including the 2.5 MiB Kronecker resize
    # matrix) fits trivially in VMEM, so a single full-array block (grid=(1,))
    # is the right plan.  At realistic image sizes the HW axis would get an
    # M-tiled "parallel" grid, bf16 MXU inputs, and a VMEM budget re-derived
    # for v7x's 64 MiB VMEM.
    kernel = functools.partial(_fused_kernel, c, CLS_THRESHOLD, MASK_THRESHOLD)
    return pl.pallas_call(
        kernel,
        grid=(1,),
        in_specs=[full_spec((hw, kdim)), full_spec((kdim, d)), full_spec((d, d)),
                  full_spec((d, d)), full_spec((d, n)), full_spec((d, c + 1 + d)),
                  full_spec((hw, n_out))],
        out_specs=[full_spec((n, 128)), full_spec((n, n_out))],
        out_shape=(jax.ShapeDtypeStruct((n, 128), jnp.float32),
                   jax.ShapeDtypeStruct((n, n_out), jnp.int32)),
        compiler_params=pltpu.CompilerParams(dimension_semantics=("arbitrary",)),
    )(patches.astype(jnp.float32), params["w_bb"], params["w_enc"],
      params["w_mask"], params["w_iam"], params["w_heads"], r_t)


# -------- composed interpolation matrices (trace-time numpy constants) --------
def _bilinear_matrix_np(out_size, in_size):
    # PyTorch F.interpolate(mode="bilinear", align_corners=False)
    scale = in_size / out_size
    src = (np.arange(out_size, dtype=np.float64) + 0.5) * scale - 0.5
    src = np.clip(src, 0.0, in_size - 1)
    lo = np.floor(src).astype(np.int64)
    hi = np.minimum(lo + 1, in_size - 1)
    w_hi = src - lo
    w_lo = 1.0 - w_hi
    mat = np.zeros((out_size, in_size), np.float64)
    rows = np.arange(out_size)
    np.add.at(mat, (rows, lo), w_lo)
    np.add.at(mat, (rows, hi), w_hi)
    return mat


def _composed_resize_matrix(feat_size, pad_size, crop_size, ori_size):
    # resize(feat -> pad) -> crop[:crop] -> resize(crop -> ori) are all linear,
    # so they compose into a single [ori, feat] matrix.
    m_pad = _bilinear_matrix_np(pad_size, feat_size)        # [pad, feat]
    m_ori = _bilinear_matrix_np(ori_size, crop_size)        # [ori, crop]
    return m_ori @ m_pad[:crop_size]                        # [ori, feat]


@functools.lru_cache(maxsize=None)
def _kron_resize_matrix(hf, wf, pad_h, pad_w, crop_h, crop_w, ori_h, ori_w):
    # Full 2-D resize chain as ONE flat linear operator:
    #   out[a*ow + b] = sum_{i,j} A_h[a,i] * A_w[b,j] * m[i*wf + j]
    # i.e. out_flat = (A_h ⊗ A_w) @ m_flat.  Returned transposed ([HW, oh*ow])
    # so the kernel does a plain row-major [N, HW] @ [HW, oh*ow] MXU matmul.
    a_h = _composed_resize_matrix(hf, pad_h, crop_h, ori_h)  # [oh, hf]
    a_w = _composed_resize_matrix(wf, pad_w, crop_w, ori_w)  # [ow, wf]
    return np.ascontiguousarray(np.kron(a_h, a_w).T).astype(np.float32)


# ---------------- synthetic SparseInst parameters -----------------------------
def init_params(key):
    ks = jax.random.split(key, 5)
    s = 0.1
    return {
        "w_bb":   s * jax.random.normal(ks[0], (3 * PATCH * PATCH, HIDDEN), jnp.float32),
        "w_enc":  s * jax.random.normal(ks[1], (HIDDEN, HIDDEN), jnp.float32),
        "w_mask": s * jax.random.normal(ks[2], (HIDDEN, HIDDEN), jnp.float32),
        "w_iam":  s * jax.random.normal(ks[3], (HIDDEN, NUM_INST), jnp.float32),
        # heads: [cls (C) | objectness (1) | mask kernel (HIDDEN)]
        "w_heads": s * jax.random.normal(ks[4], (HIDDEN, NUM_CLASSES + 1 + HIDDEN), jnp.float32),
    }


# ---------------- forward ------------------------------------------------------
def sparseinst_forward(params, image, resized_size, ori_size):
    pad_shape = (image.shape[2], image.shape[3])     # max_size = image.shape[2:]
    _, cch, h0, w0 = image.shape
    hf, wf = h0 // PATCH, w0 // PATCH
    hw = hf * wf
    oh, ow = ori_size

    # patchify: pure layout op kept in XLA; every matmul lives in the fused kernel.
    x = image[0].transpose(1, 2, 0)                                       # [H0, W0, 3]
    x = x.reshape(hf, PATCH, wf, PATCH, cch).transpose(0, 2, 1, 3, 4)
    patches = x.reshape(hw, PATCH * PATCH * cch)

    # composed Kronecker resize matrix (static trace-time constant, cached)
    r_t = jnp.asarray(_kron_resize_matrix(hf, wf, pad_shape[0], pad_shape[1],
                                          resized_size[0], resized_size[1],
                                          oh, ow))                        # [HW, oh*ow]

    # ONE pallas_call: backbone -> encoder -> decoder -> postproc -> resize+threshold
    packed, masks_flat = _run_fused(patches, params, r_t)

    # TODO(synk): boolean `keep` indexing (variable-length outputs) and the
    # `scores.size(0) == 0 -> return None` branch have no static-shape TPU
    # equivalent; we return fixed-size outputs plus a `keep` mask instead.
    return {
        "scores": packed[:, 0],
        "pred_classes": packed[:, 1].astype(jnp.int32),
        "keep": packed[:, 2] > 0.5,
        "pred_masks": masks_flat.reshape(NUM_INST, oh, ow) > 0,  # tiny XLA reshape
    }


if __name__ == "__main__":
    key = jax.random.PRNGKey(0)
    k_param, k_img = jax.random.split(key)
    params = init_params(k_param)

    image = jax.random.normal(k_img, (1, 3, 64, 64), jnp.float32)   # NCHW
    resized_size = (56, 60)   # (h1, w1)
    ori_size = (48, 52)       # (h3, w3), h3*w3 < h1*w1 < h2*w2 = 64*64

    result = sparseinst_forward(params, image, resized_size, ori_size)
    result = jax.block_until_ready(result)

    assert result["scores"].shape == (NUM_INST,)
    assert result["pred_classes"].shape == (NUM_INST,)
    assert result["keep"].shape == (NUM_INST,)
    assert result["pred_masks"].shape == (NUM_INST, ori_size[0], ori_size[1])
    assert result["pred_masks"].dtype == jnp.bool_
    print("KERNEL_OK")
</pallas_src>

<mosaic_0001>
module attributes {stable_mosaic.version = 11 : i64} {
  func.func @_fused_kernel(%arg0: i32, %arg1: memref<256x48xf32, #tpu.memory_space<vmem>>, %arg2: memref<48x32xf32, #tpu.memory_space<vmem>>, %arg3: memref<32x32xf32, #tpu.memory_space<vmem>>, %arg4: memref<32x32xf32, #tpu.memory_space<vmem>>, %arg5: memref<32x8xf32, #tpu.memory_space<vmem>>, %arg6: memref<32x41xf32, #tpu.memory_space<vmem>>, %arg7: memref<256x2496xf32, #tpu.memory_space<vmem>>, %arg8: memref<8x128xf32, #tpu.memory_space<vmem>>, %arg9: memref<8x2496xi32, #tpu.memory_space<vmem>>) attributes {dimension_semantics = [#tpu.dimension_semantics<arbitrary>], iteration_bounds = array<i64: 1>, scalar_prefetch = 0 : i64, scratch_operands = 0 : i64, tpu.core_type = #tpu.core_type<tc>, window_params = [{pipeline_mode = #tpu.pipeline_mode<synchronous>, transform_indices = @transform_0, window_bounds = array<i64: 256, 48>}, {pipeline_mode = #tpu.pipeline_mode<synchronous>, transform_indices = @transform_1, window_bounds = array<i64: 48, 32>}, {pipeline_mode = #tpu.pipeline_mode<synchronous>, transform_indices = @transform_2, window_bounds = array<i64: 32, 32>}, {pipeline_mode = #tpu.pipeline_mode<synchronous>, transform_indices = @transform_3, window_bounds = array<i64: 32, 32>}, {pipeline_mode = #tpu.pipeline_mode<synchronous>, transform_indices = @transform_4, window_bounds = array<i64: 32, 8>}, {pipeline_mode = #tpu.pipeline_mode<synchronous>, transform_indices = @transform_5, window_bounds = array<i64: 32, 41>}, {pipeline_mode = #tpu.pipeline_mode<synchronous>, transform_indices = @transform_6, window_bounds = array<i64: 256, 2496>}, {pipeline_mode = #tpu.pipeline_mode<synchronous>, transform_indices = @transform_7, window_bounds = array<i64: 8, 128>}, {pipeline_mode = #tpu.pipeline_mode<synchronous>, transform_indices = @transform_8, window_bounds = array<i64: 8, 2496>}]} {
    %c0 = arith.constant 0 : index
    %c0_0 = arith.constant 0 : index
    %0 = vector.load %arg1[%c0, %c0_0] : memref<256x48xf32, #tpu.memory_space<vmem>>, vector<256x48xf32>
    %c0_1 = arith.constant 0 : index
    %c0_2 = arith.constant 0 : index
    %1 = vector.load %arg2[%c0_1, %c0_2] : memref<48x32xf32, #tpu.memory_space<vmem>>, vector<48x32xf32>
    %cst = arith.constant dense<0.000000e+00> : vector<256x32xf32>
    %2 = tpu.matmul %0, %1, %cst {dimension_numbers = #tpu.dot_dimension_numbers<[1], [0], [0], [1], [0, 0, 1, 1], [], []>} : vector<256x48xf32>, vector<48x32xf32>, vector<256x32xf32> -> vector<256x32xf32>
    %cst_3 = arith.constant 0.000000e+00 : f32
    %3 = vector.broadcast %cst_3 : f32 to vector<256x32xf32>
    %4 = arith.maximumf %2, %3 : vector<256x32xf32>
    %c0_4 = arith.constant 0 : index
    %c0_5 = arith.constant 0 : index
    %5 = vector.load %arg3[%c0_4, %c0_5] : memref<32x32xf32, #tpu.memory_space<vmem>>, vector<32x32xf32>
    %cst_6 = arith.constant dense<0.000000e+00> : vector<256x32xf32>
    %6 = tpu.matmul %4, %5, %cst_6 {dimension_numbers = #tpu.dot_dimension_numbers<[1], [0], [0], [1], [0, 0, 1, 1], [], []>} : vector<256x32xf32>, vector<32x32xf32>, vector<256x32xf32> -> vector<256x32xf32>
    %cst_7 = arith.constant 0.000000e+00 : f32
    %7 = vector.broadcast %cst_7 : f32 to vector<256x32xf32>
    %8 = arith.maximumf %6, %7 : vector<256x32xf32>
    %c0_8 = arith.constant 0 : index
    %c0_9 = arith.constant 0 : index
    %9 = vector.load %arg4[%c0_8, %c0_9] : memref<32x32xf32, #tpu.memory_space<vmem>>, vector<32x32xf32>
    %cst_10 = arith.constant dense<0.000000e+00> : vector<256x32xf32>
    %10 = tpu.matmul %8, %9, %cst_10 {dimension_numbers = #tpu.dot_dimension_numbers<[1], [0], [0], [1], [0, 0, 1, 1], [], []>} : vector<256x32xf32>, vector<32x32xf32>, vector<256x32xf32> -> vector<256x32xf32>
    %cst_11 = arith.constant 0.000000e+00 : f32
    %11 = vector.broadcast %cst_11 : f32 to vector<256x32xf32>
    %12 = arith.maximumf %10, %11 : vector<256x32xf32>
    %c0_12 = arith.constant 0 : index
    %c0_13 = arith.constant 0 : index
    %13 = vector.load %arg5[%c0_12, %c0_13] : memref<32x8xf32, #tpu.memory_space<vmem>>, vector<32x8xf32>
    %cst_14 = arith.constant dense<0.000000e+00> : vector<256x8xf32>
    %14 = tpu.matmul %8, %13, %cst_14 {dimension_numbers = #tpu.dot_dimension_numbers<[1], [0], [0], [1], [0, 0, 1, 1], [], []>} : vector<256x32xf32>, vector<32x8xf32>, vector<256x8xf32> -> vector<256x8xf32>
    %15 = arith.negf %14 : vector<256x8xf32>
    %16 = math.exp %15 : vector<256x8xf32>
    %cst_15 = arith.constant 1.000000e+00 : f32
    %17 = vector.broadcast %cst_15 : f32 to vector<256x8xf32>
    %18 = arith.addf %17, %16 : vector<256x8xf32>
    %19 = arith.divf %17, %18 : vector<256x8xf32>
    %cst_16 = arith.constant dense<0.000000e+00> : vector<8xf32>
    %20 = vector.multi_reduction <add>, %19, %cst_16 [0] : vector<256x8xf32> to vector<8xf32>
    %21 = vector.shape_cast %20 : vector<8xf32> to vector<1x8xf32>
    %cst_17 = arith.constant 9.99999997E-7 : f32
    %22 = vector.broadcast %cst_17 : f32 to vector<1x8xf32>
    %23 = arith.addf %21, %22 : vector<1x8xf32>
    %24 = tpu.reciprocal %23 {approx = true} : vector<1x8xf32> -> vector<1x8xf32>
    %25 = vector.broadcast %24 : vector<1x8xf32> to vector<256x8xf32>
    %26 = arith.mulf %19, %25 : vector<256x8xf32>
    %cst_18 = arith.constant dense<0.000000e+00> : vector<8x32xf32>
    %27 = tpu.matmul %26, %8, %cst_18 {dimension_numbers = #tpu.dot_dimension_numbers<[0], [0], [1], [1], [0, 1, 1, 1], [], []>} : vector<256x8xf32>, vector<256x32xf32>, vector<8x32xf32> -> vector<8x32xf32>
    %c0_19 = arith.constant 0 : index
    %c0_20 = arith.constant 0 : index
    %28 = vector.load %arg6[%c0_19, %c0_20] : memref<32x41xf32, #tpu.memory_space<vmem>>, vector<32x41xf32>
    %cst_21 = arith.constant dense<0.000000e+00> : vector<8x41xf32>
    %29 = tpu.matmul %27, %28, %cst_21 {dimension_numbers = #tpu.dot_dimension_numbers<[1], [0], [0], [1], [0, 0, 1, 1], [], []>} : vector<8x32xf32>, vector<32x41xf32>, vector<8x41xf32> -> vector<8x41xf32>
    %30 = vector.extract_strided_slice %29 {offsets = [0, 0], sizes = [8, 8], strides = [1, 1]} : vector<8x41xf32> to vector<8x8xf32>
    %31 = vector.extract_strided_slice %29 {offsets = [0, 8], sizes = [8, 1], strides = [1, 1]} : vector<8x41xf32> to vector<8x1xf32>
    %32 = vector.extract_strided_slice %29 {offsets = [0, 9], sizes = [8, 32], strides = [1, 1]} : vector<8x41xf32> to vector<8x32xf32>
    %cst_22 = arith.constant dense<0.000000e+00> : vector<8x256xf32>
    %33 = tpu.matmul %32, %12, %cst_22 {dimension_numbers = #tpu.dot_dimension_numbers<[1], [1], [0], [0], [0, 0, 1, 0], [], []>} : vector<8x32xf32>, vector<256x32xf32>, vector<8x256xf32> -> vector<8x256xf32>
    %34 = arith.negf %30 : vector<8x8xf32>
    %35 = math.exp %34 : vector<8x8xf32>
    %cst_23 = arith.constant 1.000000e+00 : f32
    %36 = vector.broadcast %cst_23 : f32 to vector<8x8xf32>
    %37 = arith.addf %36, %35 : vector<8x8xf32>
    %38 = arith.divf %36, %37 : vector<8x8xf32>
    %cst_24 = arith.constant dense<0xFF800000> : vector<8xf32>
    %39 = vector.multi_reduction <maximumf>, %38, %cst_24 [1] : vector<8x8xf32> to vector<8xf32>
    %40 = vector.shape_cast %39 : vector<8xf32> to vector<8x1xf32>
    %41 = tpu.iota {dimensions = array<i32: 1>} : vector<8x8xi32>
    %42 = vector.broadcast %40 : vector<8x1xf32> to vector<8x8xf32>
    %43 = arith.cmpf oge, %38, %42 : vector<8x8xf32>
    %c8_i32 = arith.constant 8 : i32
    %44 = vector.broadcast %c8_i32 : i32 to vector<8x8xi32>
    %45 = arith.select %43, %41, %44 : vector<8x8xi1>, vector<8x8xi32>
    %cst_25 = arith.constant dense<2147483647> : vector<8xi32>
    %46 = vector.multi_reduction <minsi>, %45, %cst_25 [1] : vector<8x8xi32> to vector<8xi32>
    %47 = vector.shape_cast %46 : vector<8xi32> to vector<8x1xi32>
    %48 = arith.negf %31 : vector<8x1xf32>
    %49 = math.exp %48 : vector<8x1xf32>
    %cst_26 = arith.constant 1.000000e+00 : f32
    %50 = vector.broadcast %cst_26 : f32 to vector<8x1xf32>
    %51 = arith.addf %50, %49 : vector<8x1xf32>
    %52 = arith.divf %50, %51 : vector<8x1xf32>
    %cst_27 = arith.constant 5.000000e-03 : f32
    %53 = vector.broadcast %cst_27 : f32 to vector<8x1xf32>
    %54 = arith.cmpf ogt, %40, %53 : vector<8x1xf32>
    %55 = arith.mulf %40, %52 : vector<8x1xf32>
    %56 = math.sqrt %55 : vector<8x1xf32>
    %57 = arith.negf %33 : vector<8x256xf32>
    %58 = math.exp %57 : vector<8x256xf32>
    %cst_28 = arith.constant 1.000000e+00 : f32
    %59 = vector.broadcast %cst_28 : f32 to vector<8x256xf32>
    %60 = arith.addf %59, %58 : vector<8x256xf32>
    %61 = arith.divf %59, %60 : vector<8x256xf32>
    %cst_29 = arith.constant 4.500000e-01 : f32
    %62 = vector.broadcast %cst_29 : f32 to vector<8x256xf32>
    %63 = arith.cmpf ogt, %61, %62 : vector<8x256xf32>
    %64 = arith.extui %63 : vector<8x256xi1> to vector<8x256xi32>
    %65 = arith.sitofp %64 : vector<8x256xi32> to vector<8x256xf32>
    %66 = arith.mulf %61, %65 : vector<8x256xf32>
    %cst_30 = arith.constant dense<0.000000e+00> : vector<8xf32>
    %67 = vector.multi_reduction <add>, %66, %cst_30 [1] : vector<8x256xf32> to vector<8xf32>
    %68 = vector.shape_cast %67 : vector<8xf32> to vector<8x1xf32>
    %cst_31 = arith.constant dense<0.000000e+00> : vector<8xf32>
    %69 = vector.multi_reduction <add>, %65, %cst_31 [1] : vector<8x256xf32> to vector<8xf32>
    %70 = vector.shape_cast %69 : vector<8xf32> to vector<8x1xf32>
    %cst_32 = arith.constant 9.99999997E-7 : f32
    %71 = vector.broadcast %cst_32 : f32 to vector<8x1xf32>
    %72 = arith.addf %70, %71 : vector<8x1xf32>
    %73 = arith.mulf %56, %68 : vector<8x1xf32>
    %74 = tpu.reciprocal %72 {approx = true} : vector<8x1xf32> -> vector<8x1xf32>
    %75 = arith.mulf %73, %74 : vector<8x1xf32>
    %cst_33 = arith.constant 0.000000e+00 : f32
    %76 = vector.broadcast %cst_33 : f32 to vector<8x1xf32>
    %77 = arith.select %54, %75, %76 : vector<8x1xi1>, vector<8x1xf32>
    %78 = tpu.iota {dimensions = array<i32: 1>} : vector<8x128xi32>
    %c0_i32 = arith.constant 0 : i32
    %79 = vector.broadcast %c0_i32 : i32 to vector<8x128xi32>
    %80 = arith.cmpi eq, %78, %79 : vector<8x128xi32>
    %c1_i32 = arith.constant 1 : i32
    %81 = vector.broadcast %c1_i32 : i32 to vector<8x128xi32>
    %82 = arith.cmpi eq, %78, %81 : vector<8x128xi32>
    %83 = arith.sitofp %47 : vector<8x1xi32> to vector<8x1xf32>
    %c2_i32 = arith.constant 2 : i32
    %84 = vector.broadcast %c2_i32 : i32 to vector<8x128xi32>
    %85 = arith.cmpi eq, %78, %84 : vector<8x128xi32>
    %86 = arith.extui %54 : vector<8x1xi1> to vector<8x1xi32>
    %87 = arith.sitofp %86 : vector<8x1xi32> to vector<8x1xf32>
    %cst_34 = arith.constant 0.000000e+00 : f32
    %88 = vector.shape_cast %87 : vector<8x1xf32> to vector<8x1xf32>
    %89 = vector.broadcast %88 : vector<8x1xf32> to vector<8x128xf32>
    %90 = vector.broadcast %cst_34 : f32 to vector<8x128xf32>
    %91 = arith.select %85, %89, %90 : vector<8x128xi1>, vector<8x128xf32>
    %92 = vector.shape_cast %83 : vector<8x1xf32> to vector<8x1xf32>
    %93 = vector.broadcast %92 : vector<8x1xf32> to vector<8x128xf32>
    %94 = arith.select %82, %93, %91 : vector<8x128xi1>, vector<8x128xf32>
    %95 = vector.shape_cast %77 : vector<8x1xf32> to vector<8x1xf32>
    %96 = vector.broadcast %95 : vector<8x1xf32> to vector<8x128xf32>
    %97 = arith.select %80, %96, %94 : vector<8x128xi1>, vector<8x128xf32>
    %c0_35 = arith.constant 0 : index
    %c0_36 = arith.constant 0 : index
    %98 = vector.load %arg8[%c0_35, %c0_36] : memref<8x128xf32, #tpu.memory_space<vmem>>, vector<8x128xf32>
    tpu.vector_store %arg8[%c0_35, %c0_36], %97 {strides = array<i32>} : memref<8x128xf32, #tpu.memory_space<vmem>>, vector<8x128xf32>,
    %c0_37 = arith.constant 0 : index
    %c0_38 = arith.constant 0 : index
    %99 = vector.load %arg7[%c0_37, %c0_38] : memref<256x2496xf32, #tpu.memory_space<vmem>>, vector<256x2496xf32>
    %cst_39 = arith.constant dense<0.000000e+00> : vector<8x2496xf32>
    %100 = tpu.matmul %61, %99, %cst_39 {dimension_numbers = #tpu.dot_dimension_numbers<[1], [0], [0], [1], [0, 0, 1, 1], [], []>} : vector<8x256xf32>, vector<256x2496xf32>, vector<8x2496xf32> -> vector<8x2496xf32>
    %cst_40 = arith.constant 4.500000e-01 : f32
    %101 = vector.broadcast %cst_40 : f32 to vector<8x2496xf32>
    %102 = arith.cmpf ogt, %100, %101 : vector<8x2496xf32>
    %103 = arith.extui %102 : vector<8x2496xi1> to vector<8x2496xi32>
    %c0_41 = arith.constant 0 : index
    %c0_42 = arith.constant 0 : index
    %104 = vector.load %arg9[%c0_41, %c0_42] : memref<8x2496xi32, #tpu.memory_space<vmem>>, vector<8x2496xi32>
    tpu.vector_store %arg9[%c0_41, %c0_42], %103 {strides = array<i32>} : memref<8x2496xi32, #tpu.memory_space<vmem>>, vector<8x2496xi32>,
    return
  }
  func.func @transform_0(%arg0: i32) -> (i32, i32) {
    %c0_i32 = arith.constant 0 : i32
    %c0_i32_0 = arith.constant 0 : i32
    %c0_i32_1 = arith.constant 0 : i32
    return %c0_i32, %c0_i32_0 : i32, i32
  }
  func.func @transform_1(%arg0: i32) -> (i32, i32) {
    %c0_i32 = arith.constant 0 : i32
    %c0_i32_0 = arith.constant 0 : i32
    %c0_i32_1 = arith.constant 0 : i32
    return %c0_i32, %c0_i32_0 : i32, i32
  }
  func.func @transform_2(%arg0: i32) -> (i32, i32) {
    %c0_i32 = arith.constant 0 : i32
    %c0_i32_0 = arith.constant 0 : i32
    %c0_i32_1 = arith.constant 0 : i32
    return %c0_i32, %c0_i32_0 : i32, i32
  }
  func.func @transform_3(%arg0: i32) -> (i32, i32) {
    %c0_i32 = arith.constant 0 : i32
    %c0_i32_0 = arith.constant 0 : i32
    %c0_i32_1 = arith.constant 0 : i32
    return %c0_i32, %c0_i32_0 : i32, i32
  }
  func.func @transform_4(%arg0: i32) -> (i32, i32) {
    %c0_i32 = arith.constant 0 : i32
    %c0_i32_0 = arith.constant 0 : i32
    %c0_i32_1 = arith.constant 0 : i32
    return %c0_i32, %c0_i32_0 : i32, i32
  }
  func.func @transform_5(%arg0: i32) -> (i32, i32) {
    %c0_i32 = arith.constant 0 : i32
    %c0_i32_0 = arith.constant 0 : i32
    %c0_i32_1 = arith.constant 0 : i32
    return %c0_i32, %c0_i32_0 : i32, i32
  }
  func.func @transform_6(%arg0: i32) -> (i32, i32) {
    %c0_i32 = arith.constant 0 : i32
    %c0_i32_0 = arith.constant 0 : i32
    %c0_i32_1 = arith.constant 0 : i32
    return %c0_i32, %c0_i32_0 : i32, i32
  }
  func.func @transform_7(%arg0: i32) -> (i32, i32) {
    %c0_i32 = arith.constant 0 : i32
    %c0_i32_0 = arith.constant 0 : i32
    %c0_i32_1 = arith.constant 0 : i32
    return %c0_i32, %c0_i32_0 : i32, i32
  }
  func.func @transform_8(%arg0: i32) -> (i32, i32) {
    %c0_i32 = arith.constant 0 : i32
    %c0_i32_0 = arith.constant 0 : i32
    %c0_i32_1 = arith.constant 0 : i32
    return %c0_i32, %c0_i32_0 : i32, i32
  }
}

</mosaic_0001>

<llo_original>
// kernel: tpu_custom_call.1
$region0: #{tpu_custom_call.1}
  #allocation0 [shape = 'u32[]', space=smem, size = 0x4, offset = 0x4, fixed_abs, tag = 'smem constant byte address 0x4 - core index']
  #allocation1 [shape = 'u32[144,128]{1,0:T(1,128)}', space=vmem, size = 0x12000, scoped, tag = 'internal scratch']
  %s0 = inlined_call_operand.vmem [shape: f32[256,48], index: 0, kind: input, shape index: {}]
  %s1 = inlined_call_operand.vmem [shape: f32[48,32], index: 1, kind: input, shape index: {}]
  %s2 = inlined_call_operand.vmem [shape: f32[32,32], index: 2, kind: input, shape index: {}]
  %s3 = inlined_call_operand.vmem [shape: f32[32,32], index: 3, kind: input, shape index: {}]
  %s4 = inlined_call_operand.vmem [shape: f32[32,8], index: 4, kind: input, shape index: {}]
  %s5 = inlined_call_operand.vmem [shape: f32[32,41], index: 5, kind: input, shape index: {}]
  %s6 = inlined_call_operand.vmem [shape: f32[256,2496], index: 6, kind: input, shape index: {}]
  %s7 = inlined_call_operand.hbm [shape: f32[8,128], index: 7, kind: output, shape index: {0}]
  %s8 = inlined_call_operand.hbm [shape: s32[8,2496], index: 8, kind: output, shape index: {1}]
  %9 = xla_tuple %s7, %s8
  %s10 = sld [smem:[#allocation0]]
  $region46: #{tpu_custom_call.1} parent=0
    _
  %s12 = ssub.s32 1, %s10
  %s13 = scalar_select 0, %s12, %s10
  $region1: #{tpu_custom_call.1} parent=0
    #allocation2 [shape = 'u8[4096]{0}', space=vmem, size = 0x1000, scoped, tag = 'output window, operand 0, single buffered']
    #allocation3 [shape = 's32[1]{0}', space=sflag, size = 0x4, scoped, tag = 'scoped memory for tpu_custom_call.1']
    #allocation4 [shape = 'u8[81920]{0}', space=vmem, size = 0x14000, scoped, tag = 'output window, operand 1, single buffered']
    #allocation5 [shape = 's32[1]{0}', space=sflag, size = 0x4, scoped, tag = 'scoped memory for tpu_custom_call.1']
    %14 = vsyncpa [#allocation3], 0
    %15 = vsyncpa [#allocation5], 0
    // Predicated region
    $region2: #{tpu_custom_call.1} parent=1 // pred_check
      _
    $region3: #{tpu_custom_call.1} parent=1 // pred_check_branch
      %17 = sbr.rel (0) target = $region5
    $region4: #{tpu_custom_call.1} parent=1 // pred_region
      _
    $region5: #{tpu_custom_call.1} parent=1 // pred_fallthru
      _
    // Predicated region
    $region6: #{tpu_custom_call.1} parent=1 // pred_check
      _
    $region7: #{tpu_custom_call.1} parent=1 // pred_check_branch
      %19 = sbr.rel (0) target = $region9
    $region8: #{tpu_custom_call.1} parent=1 // pred_region
      _
    $region9: #{tpu_custom_call.1} parent=1 // pred_fallthru
      _
    // Predicated region
    $region10: #{tpu_custom_call.1} parent=1 // pred_check
      _
    $region11: #{tpu_custom_call.1} parent=1 // pred_check_branch
      %21 = sbr.rel (0) target = $region13
    $region12: #{tpu_custom_call.1} parent=1 // pred_region
      _
    $region13: #{tpu_custom_call.1} parent=1 // pred_fallthru
      _
    // Predicated region
    $region14: #{tpu_custom_call.1} parent=1 // pred_check
      _
    $region15: #{tpu_custom_call.1} parent=1 // pred_check_branch
      %23 = sbr.rel (0) target = $region17
    $region16: #{tpu_custom_call.1} parent=1 // pred_region
      _
    $region17: #{tpu_custom_call.1} parent=1 // pred_fallthru
      _
    // Predicated region
    $region18: #{tpu_custom_call.1} parent=1 // pred_check
      _
    $region19: #{tpu_custom_call.1} parent=1 // pred_check_branch
      %25 = sbr.rel (0) target = $region21
    $region20: #{tpu_custom_call.1} parent=1 // pred_region
      _
    $region21: #{tpu_custom_call.1} parent=1 // pred_fallthru
      _
    // Predicated region
    $region22: #{tpu_custom_call.1} parent=1 // pred_check
      _
    $region23: #{tpu_custom_call.1} parent=1 // pred_check_branch
      %27 = sbr.rel (0) target = $region25
    $region24: #{tpu_custom_call.1} parent=1 // pred_region
      _
    $region25: #{tpu_custom_call.1} parent=1 // pred_fallthru
      _
    // Predicated region
    $region26: #{tpu_custom_call.1} parent=1 // pred_check
      _
    $region27: #{tpu_custom_call.1} parent=1 // pred_check_branch
      %29 = sbr.rel (0) target = $region29
    $region28: #{tpu_custom_call.1} parent=1 // pred_region
      _
    $region29: #{tpu_custom_call.1} parent=1 // pred_fallthru
      _
    %v30 = vld [vmem:[%s0] sm:$0xff]
    %v31 = vld [vmem:[%s0 + $0x8] sm:$0xff]
    %v32 = vld [vmem:[%s0 + $0x10] sm:$0xff]
    %v33 = vld [vmem:[%s0 + $0x18] sm:$0xff]
    %v34 = vld [vmem:[%s0 + $0x20] sm:$0xff]
    %v35 = vld [vmem:[%s0 + $0x28] sm:$0xff]
    %v36 = vld [vmem:[%s0 + $0x30] sm:$0xff]
    %v37 = vld [vmem:[%s0 + $0x38] sm:$0xff]
    %v38 = vld [vmem:[%s0 + $0x40] sm:$0xff]
    %v39 = vld [vmem:[%s0 + $0x48] sm:$0xff]
    %v40 = vld [vmem:[%s0 + $0x50] sm:$0xff]
    %v41 = vld [vmem:[%s0 + $0x58] sm:$0xff]
    %v42 = vld [vmem:[%s0 + $0x60] sm:$0xff]
    %v43 = vld [vmem:[%s0 + $0x68] sm:$0xff]
    %v44 = vld [vmem:[%s0 + $0x70] sm:$0xff]
    %v45 = vld [vmem:[%s0 + $0x78] sm:$0xff]
    %v46 = vld [vmem:[%s0 + $0x80] sm:$0xff]
    %v47 = vld [vmem:[%s0 + $0x88] sm:$0xff]
    %v48 = vld [vmem:[%s0 + $0x90] sm:$0xff]
    %v49 = vld [vmem:[%s0 + $0x98] sm:$0xff]
    %v50 = vld [vmem:[%s0 + $0xa0] sm:$0xff]
    %v51 = vld [vmem:[%s0 + $0xa8] sm:$0xff]
    %v52 = vld [vmem:[%s0 + $0xb0] sm:$0xff]
    %v53 = vld [vmem:[%s0 + $0xb8] sm:$0xff]
    %v54 = vld [vmem:[%s0 + $0xc0] sm:$0xff]
    %v55 = vld [vmem:[%s0 + $0xc8] sm:$0xff]
    %v56 = vld [vmem:[%s0 + $0xd0] sm:$0xff]
    %v57 = vld [vmem:[%s0 + $0xd8] sm:$0xff]
    %v58 = vld [vmem:[%s0 + $0xe0] sm:$0xff]
    %v59 = vld [vmem:[%s0 + $0xe8] sm:$0xff]
    %v60 = vld [vmem:[%s0 + $0xf0] sm:$0xff]
    %v61 = vld [vmem:[%s0 + $0xf8] sm:$0xff]
    %v62 = vld [vmem:[%s1] sm:$0xff]
    %v63 = vld [vmem:[%s1 + $0x8] sm:$0xff]
    %v64 = vld [vmem:[%s1 + $0x10] sm:$0xff]
    %v65 = vld [vmem:[%s1 + $0x18] sm:$0xff]
    %v66 = vld [vmem:[%s1 + $0x20] sm:$0xff]
    %v67 = vld [vmem:[%s1 + $0x28] sm:$0xff]
    %vm68 = vcmask 392192
    %v70 = vsel %vm68, %v30, 0
    %v73 = vsel %vm68, %v31, 0
    %v76 = vsel %vm68, %v32, 0
    %v79 = vsel %vm68, %v33, 0
    %v82 = vsel %vm68, %v34, 0
    %v85 = vsel %vm68, %v35, 0
    %v88 = vsel %vm68, %v36, 0
    %v91 = vsel %vm68, %v37, 0
    %v94 = vsel %vm68, %v38, 0
    %v97 = vsel %vm68, %v39, 0
    %v100 = vsel %vm68, %v40, 0
    %v103 = vsel %vm68, %v41, 0
    %v106 = vsel %vm68, %v42, 0
    %v109 = vsel %vm68, %v43, 0
    %v112 = vsel %vm68, %v44, 0
    %v115 = vsel %vm68, %v45, 0
    %v118 = vsel %vm68, %v46, 0
    %v121 = vsel %vm68, %v47, 0
    %v124 = vsel %vm68, %v48, 0
    %v127 = vsel %vm68, %v49, 0
    %v130 = vsel %vm68, %v50, 0
    %v133 = vsel %vm68, %v51, 0
    %v136 = vsel %vm68, %v52, 0
    %v139 = vsel %vm68, %v53, 0
    %v142 = vsel %vm68, %v54, 0
    %v145 = vsel %vm68, %v55, 0
    %v148 = vsel %vm68, %v56, 0
    %v151 = vsel %vm68, %v57, 0
    %v154 = vsel %vm68, %v58, 0
    %v157 = vsel %vm68, %v59, 0
    %v160 = vsel %vm68, %v60, 0
    %v163 = vsel %vm68, %v61, 0
    %165 = vmatprep.subr.mxu0 0.0
    %166 = vmatpush1.msra.mxu0 %v62
    %167 = vmatprep.subr.mxu0 0.0
    %168 = vmatpush1.msra.mxu0 %v63
    %169 = vmatprep.subr.mxu0 0.0
    %170 = vmatpush1.msra.mxu0 %v64
    %171 = vmatprep.subr.mxu0 0.0
    %172 = vmatpush1.msra.mxu0 %v65
    %173 = vmatprep.subr.mxu0 0.0
    %174 = vmatpush1.msra.mxu0 %v66
    %175 = vmatprep.subr.mxu0 0.0
    %176 = vmatpush1.msra.mxu0 %v67
    %177 = vmatprep.subr.mxu0 0.0
    %178 = vmatpush1.msra.mxu0 0.0
    %179 = vmatprep.subr.mxu0 0.0
    %180 = vmatpush1.msra.mxu0 0.0
    %181 = vmatprep.subr.mxu0 0.0
    %182 = vmatpush1.msra.mxu0 0.0
    %183 = vmatprep.subr.mxu0 0.0
    %184 = vmatpush1.msra.mxu0 0.0
    %185 = vmatprep.subr.mxu0 0.0
    %186 = vmatpush1.msra.mxu0 0.0
    %187 = vmatprep.subr.mxu0 0.0
    %188 = vmatpush1.msra.mxu0 0.0
    %189 = vmatprep.subr.mxu0 0.0
    %190 = vmatpush1.msra.mxu0 0.0
    %191 = vmatprep.subr.mxu0 0.0
    %192 = vmatpush1.msra.mxu0 0.0
    %193 = vmatprep.subr.mxu0 0.0
    %194 = vmatpush1.msra.mxu0 0.0
    %195 = vmatprep.subr.mxu0 0.0
    %196 = vmatpush1.msra.mxu0 0.0
    %197 = vmatprep.subr.mxu0 0.0
    %198 = vmatpush1.msra.mxu0 0.0
    %199 = vmatprep.subr.mxu0 0.0
    %200 = vmatpush1.msra.mxu0 0.0
    %201 = vmatprep.subr.mxu0 0.0
    %202 = vmatpush1.msra.mxu0 0.0
    %203 = vmatprep.subr.mxu0 0.0
    %204 = vmatpush1.msra.mxu0 0.0
    %205 = vmatprep.subr.mxu0 0.0
    %206 = vmatpush1.msra.mxu0 0.0
    %207 = vmatprep.subr.mxu0 0.0
    %208 = vmatpush1.msra.mxu0 0.0
    %209 = vmatprep.subr.mxu0 0.0
    %210 = vmatpush1.msra.mxu0 0.0
    %211 = vmatprep.subr.mxu0 0.0
    %212 = vmatpush1.msra.mxu0 0.0
    %213 = vmatprep.subr.mxu0 0.0
    %214 = vmatpush1.msra.mxu0 0.0
    %215 = vmatprep.subr.mxu0 0.0
    %216 = vmatpush1.msra.mxu0 0.0
    %217 = vmatprep.subr.mxu0 0.0
    %218 = vmatpush1.msra.mxu0 0.0
    %219 = vmatprep.subr.mxu0 0.0
    %220 = vmatpush1.msra.mxu0 0.0
    %221 = vmatprep.subr.mxu0 0.0
    %222 = vmatpush1.msra.mxu0 0.0
    %223 = vmatprep.subr.mxu0 0.0
    %224 = vmatpush1.msra.mxu0 0.0
    %225 = vmatprep.subr.mxu0 0.0
    %226 = vmatpush1.msra.mxu0 0.0
    %227 = vmatprep.subr.mxu0 0.0
    %228 = vmatpush1.msra.mxu0 0.0
    %229 = vmatprep.mubr.f32.mxu0 0.0
    %230 = vmatmul.mubr.f32.gmra.mrb[0].mxu0 %v70
    %v231 = vpop.f32.mrb[0].mxu0
    %v232 = vadd.f32 0.0, %v231
    %v233 = vpop.f32.mrb[0].mxu0
    %234 = vmatprep.mubr.f32.mxu0 0.0
    %235 = vmatmul.mubr.f32.gmra.mrb[0].mxu0 %v73
    %v236 = vpop.f32.mrb[0].mxu0
    %v237 = vadd.f32 0.0, %v236
    %v238 = vpop.f32.mrb[0].mxu0
    %239 = vmatprep.mubr.f32.mxu0 0.0
    %240 = vmatmul.mubr.f32.gmra.mrb[0].mxu0 %v76
    %v241 = vpop.f32.mrb[0].mxu0
    %v242 = vadd.f32 0.0, %v241
    %v243 = vpop.f32.mrb[0].mxu0
    %244 = vmatprep.mubr.f32.mxu0 0.0
    %245 = vmatmul.mubr.f32.gmra.mrb[0].mxu0 %v79
    %v246 = vpop.f32.mrb[0].mxu0
    %v247 = vadd.f32 0.0, %v246
    %v248 = vpop.f32.mrb[0].mxu0
    %249 = vmatprep.mubr.f32.mxu0 0.0
    %250 = vmatmul.mubr.f32.gmra.mrb[0].mxu0 %v82
    %v251 = vpop.f32.mrb[0].mxu0
    %v252 = vadd.f32 0.0, %v251
    %v253 = vpop.f32.mrb[0].mxu0
    %254 = vmatprep.mubr.f32.mxu0 0.0
    %255 = vmatmul.mubr.f32.gmra.mrb[0].mxu0 %v85
    %v256 = vpop.f32.mrb[0].mxu0
    %v257 = vadd.f32 0.0, %v256
    %v258 = vpop.f32.mrb[0].mxu0
    %259 = vmatprep.mubr.f32.mxu0 0.0
    %260 = vmatmul.mubr.f32.gmra.mrb[0].mxu0 %v88
    %v261 = vpop.f32.mrb[0].mxu0
    %v262 = vadd.f32 0.0, %v261
    %v263 = vpop.f32.mrb[0].mxu0
    %264 = vmatprep.mubr.f32.mxu0 0.0
    %265 = vmatmul.mubr.f32.gmra.mrb[0].mxu0 %v91
    %v266 = vpop.f32.mrb[0].mxu0
    %v267 = vadd.f32 0.0, %v266
    %v268 = vpop.f32.mrb[0].mxu0
    %269 = vmatprep.mubr.f32.mxu0 0.0
    %270 = vmatmul.mubr.f32.gmra.mrb[0].mxu0 %v94
    %v271 = vpop.f32.mrb[0].mxu0
    %v272 = vadd.f32 0.0, %v271
    %v273 = vpop.f32.mrb[0].mxu0
    %274 = vmatprep.mubr.f32.mxu0 0.0
    %275 = vmatmul.mubr.f32.gmra.mrb[0].mxu0 %v97
    %v276 = vpop.f32.mrb[0].mxu0
    %v277 = vadd.f32 0.0, %v276
    %v278 = vpop.f32.mrb[0].mxu0
    %279 = vmatprep.mubr.f32.mxu0 0.0
    %280 = vmatmul.mubr.f32.gmra.mrb[0].mxu0 %v100
    %v281 = vpop.f32.mrb[0].mxu0
    %v282 = vadd.f32 0.0, %v281
    %v283 = vpop.f32.mrb[0].mxu0
    %284 = vmatprep.mubr.f32.mxu0 0.0
    %285 = vmatmul.mubr.f32.gmra.mrb[0].mxu0 %v103
    %v286 = vpop.f32.mrb[0].mxu0
    %v287 = vadd.f32 0.0, %v286
    %v288 = vpop.f32.mrb[0].mxu0
    %289 = vmatprep.mubr.f32.mxu0 0.0
    %290 = vmatmul.mubr.f32.gmra.mrb[0].mxu0 %v106
    %v291 = vpop.f32.mrb[0].mxu0
    %v292 = vadd.f32 0.0, %v291
    %v293 = vpop.f32.mrb[0].mxu0
    %294 = vmatprep.mubr.f32.mxu0 0.0
    %295 = vmatmul.mubr.f32.gmra.mrb[0].mxu0 %v109
    %v296 = vpop.f32.mrb[0].mxu0
    %v297 = vadd.f32 0.0, %v296
    %v298 = vpop.f32.mrb[0].mxu0
    %299 = vmatprep.mubr.f32.mxu0 0.0
    %300 = vmatmul.mubr.f32.gmra.mrb[0].mxu0 %v112
    %v301 = vpop.f32.mrb[0].mxu0
    %v302 = vadd.f32 0.0, %v301
    %v303 = vpop.f32.mrb[0].mxu0
    %304 = vmatprep.mubr.f32.mxu0 0.0
    %305 = vmatmul.mubr.f32.gmra.mrb[0].mxu0 %v115
    %v306 = vpop.f32.mrb[0].mxu0
    %v307 = vadd.f32 0.0, %v306
    %v308 = vpop.f32.mrb[0].mxu0
    %309 = vmatprep.mubr.f32.mxu0 0.0
    %310 = vmatmul.mubr.f32.gmra.mrb[0].mxu0 %v118
    %v311 = vpop.f32.mrb[0].mxu0
    %v312 = vadd.f32 0.0, %v311
    %v313 = vpop.f32.mrb[0].mxu0
    %314 = vmatprep.mubr.f32.mxu0 0.0
    %315 = vmatmul.mubr.f32.gmra.mrb[0].mxu0 %v121
    %v316 = vpop.f32.mrb[0].mxu0
    %v317 = vadd.f32 0.0, %v316
    %v318 = vpop.f32.mrb[0].mxu0
    %319 = vmatprep.mubr.f32.mxu0 0.0
    %320 = vmatmul.mubr.f32.gmra.mrb[0].mxu0 %v124
    %v321 = vpop.f32.mrb[0].mxu0
    %v322 = vadd.f32 0.0, %v321
    %v323 = vpop.f32.mrb[0].mxu0
    %324 = vmatprep.mubr.f32.mxu0 0.0
    %325 = vmatmul.mubr.f32.gmra.mrb[0].mxu0 %v127
    %v326 = vpop.f32.mrb[0].mxu0
    %v327 = vadd.f32 0.0, %v326
    %v328 = vpop.f32.mrb[0].mxu0
    %329 = vmatprep.mubr.f32.mxu0 0.0
    %330 = vmatmul.mubr.f32.gmra.mrb[0].mxu0 %v130
    %v331 = vpop.f32.mrb[0].mxu0
    %v332 = vadd.f32 0.0, %v331
    %v333 = vpop.f32.mrb[0].mxu0
    %334 = vmatprep.mubr.f32.mxu0 0.0
    %335 = vmatmul.mubr.f32.gmra.mrb[0].mxu0 %v133
    %v336 = vpop.f32.mrb[0].mxu0
    %v337 = vadd.f32 0.0, %v336
    %v338 = vpop.f32.mrb[0].mxu0
    %339 = vmatprep.mubr.f32.mxu0 0.0
    %340 = vmatmul.mubr.f32.gmra.mrb[0].mxu0 %v136
    %v341 = vpop.f32.mrb[0].mxu0
    %v342 = vadd.f32 0.0, %v341
    %v343 = vpop.f32.mrb[0].mxu0
    %344 = vmatprep.mubr.f32.mxu0 0.0
    %345 = vmatmul.mubr.f32.gmra.mrb[0].mxu0 %v139
    %v346 = vpop.f32.mrb[0].mxu0
    %v347 = vadd.f32 0.0, %v346
    %v348 = vpop.f32.mrb[0].mxu0
    %349 = vmatprep.mubr.f32.mxu0 0.0
    %350 = vmatmul.mubr.f32.gmra.mrb[0].mxu0 %v142
    %v351 = vpop.f32.mrb[0].mxu0
    %v352 = vadd.f32 0.0, %v351
    %v353 = vpop.f32.mrb[0].mxu0
    %354 = vmatprep.mubr.f32.mxu0 0.0
    %355 = vmatmul.mubr.f32.gmra.mrb[0].mxu0 %v145
    %v356 = vpop.f32.mrb[0].mxu0
    %v357 = vadd.f32 0.0, %v356
    %v358 = vpop.f32.mrb[0].mxu0
    %359 = vmatprep.mubr.f32.mxu0 0.0
    %360 = vmatmul.mubr.f32.gmra.mrb[0].mxu0 %v148
    %v361 = vpop.f32.mrb[0].mxu0
    %v362 = vadd.f32 0.0, %v361
    %v363 = vpop.f32.mrb[0].mxu0
    %364 = vmatprep.mubr.f32.mxu0 0.0
    %365 = vmatmul.mubr.f32.gmra.mrb[0].mxu0 %v151
    %v366 = vpop.f32.mrb[0].mxu0
    %v367 = vadd.f32 0.0, %v366
    %v368 = vpop.f32.mrb[0].mxu0
    %369 = vmatprep.mubr.f32.mxu0 0.0
    %370 = vmatmul.mubr.f32.gmra.mrb[0].mxu0 %v154
    %v371 = vpop.f32.mrb[0].mxu0
    %v372 = vadd.f32 0.0, %v371
    %v373 = vpop.f32.mrb[0].mxu0
    %374 = vmatprep.mubr.f32.mxu0 0.0
    %375 = vmatmul.mubr.f32.gmra.mrb[0].mxu0 %v157
    %v376 = vpop.f32.mrb[0].mxu0
    %v377 = vadd.f32 0.0, %v376
    %v378 = vpop.f32.mrb[0].mxu0
    %379 = vmatprep.mubr.f32.mxu0 0.0
    %380 = vmatmul.mubr.f32.gmra.mrb[0].mxu0 %v160
    %v381 = vpop.f32.mrb[0].mxu0
    %v382 = vadd.f32 0.0, %v381
    %v383 = vpop.f32.mrb[0].mxu0
    %384 = vmatprep.mubr.f32.mxu0 0.0
    %385 = vmatmul.mubr.f32.gmra.mrb[0].mxu0 %v163
    %v386 = vpop.f32.mrb[0].mxu0
    %v387 = vadd.f32 0.0, %v386
    %v388 = vpop.f32.mrb[0].mxu0
    %389 = vdwg.mxu0
    %v390 = vmax.f32 %v232, 0.0
    %v391 = vmax.f32 %v237, 0.0
    %v392 = vmax.f32 %v242, 0.0
    %v393 = vmax.f32 %v247, 0.0
    %v394 = vmax.f32 %v252, 0.0
    %v395 = vmax.f32 %v257, 0.0
    %v396 = vmax.f32 %v262, 0.0
    %v397 = vmax.f32 %v267, 0.0
    %v398 = vmax.f32 %v272, 0.0
    %v399 = vmax.f32 %v277, 0.0
    %v400 = vmax.f32 %v282, 0.0
    %v401 = vmax.f32 %v287, 0.0
    %v402 = vmax.f32 %v292, 0.0
    %v403 = vmax.f32 %v297, 0.0
    %v404 = vmax.f32 %v302, 0.0
    %v405 = vmax.f32 %v307, 0.0
    %v406 = vmax.f32 %v312, 0.0
    %v407 = vmax.f32 %v317, 0.0
    %v408 = vmax.f32 %v322, 0.0
    %v409 = vmax.f32 %v327, 0.0
    %v410 = vmax.f32 %v332, 0.0
    %v411 = vmax.f32 %v337, 0.0
    %v412 = vmax.f32 %v342, 0.0
    %v413 = vmax.f32 %v347, 0.0
    %v414 = vmax.f32 %v352, 0.0
    %v415 = vmax.f32 %v357, 0.0
    %v416 = vmax.f32 %v362, 0.0
    %v417 = vmax.f32 %v367, 0.0
    %v418 = vmax.f32 %v372, 0.0
    %v419 = vmax.f32 %v377, 0.0
    %v420 = vmax.f32 %v382, 0.0
    %v421 = vmax.f32 %v387, 0.0
    %v422 = vld [vmem:[%s2] sm:$0xff]
    %v423 = vld [vmem:[%s2 + $0x8] sm:$0xff]
    %v424 = vld [vmem:[%s2 + $0x10] sm:$0xff]
    %v425 = vld [vmem:[%s2 + $0x18] sm:$0xff]
    %vm426 = vcmask 261120
    %v428 = vsel %vm426, %v390, 0
    %v431 = vsel %vm426, %v391, 0
    %v434 = vsel %vm426, %v392, 0
    %v437 = vsel %vm426, %v393, 0
    %v440 = vsel %vm426, %v394, 0
    %v443 = vsel %vm426, %v395, 0
    %v446 = vsel %vm426, %v396, 0
    %v449 = vsel %vm426, %v397, 0
    %v452 = vsel %vm426, %v398, 0
    %v455 = vsel %vm426, %v399, 0
    %v458 = vsel %vm426, %v400, 0
    %v461 = vsel %vm426, %v401, 0
    %v464 = vsel %vm426, %v402, 0
    %v467 = vsel %vm426, %v403, 0
    %v470 = vsel %vm426, %v404, 0
    %v473 = vsel %vm426, %v405, 0
    %v476 = vsel %vm426, %v406, 0
    %v479 = vsel %vm426, %v407, 0
    %v482 = vsel %vm426, %v408, 0
    %v485 = vsel %vm426, %v409, 0
    %v488 = vsel %vm426, %v410, 0
    %v491 = vsel %vm426, %v411, 0
    %v494 = vsel %vm426, %v412, 0
    %v497 = vsel %vm426, %v413, 0
    %v500 = vsel %vm426, %v414, 0
    %v503 = vsel %vm426, %v415, 0
    %v506 = vsel %vm426, %v416, 0
    %v509 = vsel %vm426, %v417, 0
    %v512 = vsel %vm426, %v418, 0
    %v515 = vsel %vm426, %v419, 0
    %v518 = vsel %vm426, %v420, 0
    %v521 = vsel %vm426, %v421, 0
    %523 = vmatprep.subr.mxu0 0.0
    %524 = vmatpush1.msra.mxu0 %v422
    %525 = vmatprep.subr.mxu0 0.0
    %526 = vmatpush1.msra.mxu0 %v423
    %527 = vmatprep.subr.mxu0 0.0
    %528 = vmatpush1.msra.mxu0 %v424
    %529 = vmatprep.subr.mxu0 0.0
    %530 = vmatpush1.msra.mxu0 %v425
    %531 = vmatprep.subr.mxu0 0.0
    %532 = vmatpush1.msra.mxu0 0.0
    %533 = vmatprep.subr.mxu0 0.0
    %534 = vmatpush1.msra.mxu0 0.0
    %535 = vmatprep.subr.mxu0 0.0
    %536 = vmatpush1.msra.mxu0 0.0
    %537 = vmatprep.subr.mxu0 0.0
    %538 = vmatpush1.msra.mxu0 0.0
    %539 = vmatprep.subr.mxu0 0.0
    %540 = vmatpush1.msra.mxu0 0.0
    %541 = vmatprep.subr.mxu0 0.0
    %542 = vmatpush1.msra.mxu0 0.0
    %543 = vmatprep.subr.mxu0 0.0
    %544 = vmatpush1.msra.mxu0 0.0
    %545 = vmatprep.subr.mxu0 0.0
    %546 = vmatpush1.msra.mxu0 0.0
    %547 = vmatprep.subr.mxu0 0.0
    %548 = vmatpush1.msra.mxu0 0.0
    %549 = vmatprep.subr.mxu0 0.0
    %550 = vmatpush1.msra.mxu0 0.0
    %551 = vmatprep.subr.mxu0 0.0
    %552 = vmatpush1.msra.mxu0 0.0
    %553 = vmatprep.subr.mxu0 0.0
    %554 = vmatpush1.msra.mxu0 0.0
    %555 = vmatprep.subr.mxu0 0.0
    %556 = vmatpush1.msra.mxu0 0.0
    %557 = vmatprep.subr.mxu0 0.0
    %558 = vmatpush1.msra.mxu0 0.0
    %559 = vmatprep.subr.mxu0 0.0
    %560 = vmatpush1.msra.mxu0 0.0
    %561 = vmatprep.subr.mxu0 0.0
    %562 = vmatpush1.msra.mxu0 0.0
    %563 = vmatprep.subr.mxu0 0.0
    %564 = vmatpush1.msra.mxu0 0.0
    %565 = vmatprep.subr.mxu0 0.0
    %566 = vmatpush1.msra.mxu0 0.0
    %567 = vmatprep.subr.mxu0 0.0
    %568 = vmatpush1.msra.mxu0 0.0
    %569 = vmatprep.subr.mxu0 0.0
    %570 = vmatpush1.msra.mxu0 0.0
    %571 = vmatprep.subr.mxu0 0.0
    %572 = vmatpush1.msra.mxu0 0.0
    %573 = vmatprep.subr.mxu0 0.0
    %574 = vmatpush1.msra.mxu0 0.0
    %575 = vmatprep.subr.mxu0 0.0
    %576 = vmatpush1.msra.mxu0 0.0
    %577 = vmatprep.subr.mxu0 0.0
    %578 = vmatpush1.msra.mxu0 0.0
    %579 = vmatprep.subr.mxu0 0.0
    %580 = vmatpush1.msra.mxu0 0.0
    %581 = vmatprep.subr.mxu0 0.0
    %582 = vmatpush1.msra.mxu0 0.0
    %583 = vmatprep.subr.mxu0 0.0
    %584 = vmatpush1.msra.mxu0 0.0
    %585 = vmatprep.subr.mxu0 0.0
    %586 = vmatpush1.msra.mxu0 0.0
    %587 = vmatprep.mubr.f32.mxu0 0.0
    %588 = vmatmul.mubr.f32.gmra.mrb[0].mxu0 %v428
    %v589 = vpop.f32.mrb[0].mxu0
    %v590 = vadd.f32 0.0, %v589
    %v591 = vpop.f32.mrb[0].mxu0
    %592 = vmatprep.mubr.f32.mxu0 0.0
    %593 = vmatmul.mubr.f32.gmra.mrb[0].mxu0 %v431
    %v594 = vpop.f32.mrb[0].mxu0
    %v595 = vadd.f32 0.0, %v594
    %v596 = vpop.f32.mrb[0].mxu0
    %597 = vmatprep.mubr.f32.mxu0 0.0
    %598 = vmatmul.mubr.f32.gmra.mrb[0].mxu0 %v434
    %v599 = vpop.f32.mrb[0].mxu0
    %v600 = vadd.f32 0.0, %v599
    %v601 = vpop.f32.mrb[0].mxu0
    %602 = vmatprep.mubr.f32.mxu0 0.0
    %603 = vmatmul.mubr.f32.gmra.mrb[0].mxu0 %v437
    %v604 = vpop.f32.mrb[0].mxu0
    %v605 = vadd.f32 0.0, %v604
    %v606 = vpop.f32.mrb[0].mxu0
    %607 = vmatprep.mubr.f32.mxu0 0.0
    %608 = vmatmul.mubr.f32.gmra.mrb[0].mxu0 %v440
    %v609 = vpop.f32.mrb[0].mxu0
    %v610 = vadd.f32 0.0, %v609
    %v611 = vpop.f32.mrb[0].mxu0
    %612 = vmatprep.mubr.f32.mxu0 0.0
    %613 = vmatmul.mubr.f32.gmra.mrb[0].mxu0 %v443
    %v614 = vpop.f32.mrb[0].mxu0
    %v615 = vadd.f32 0.0, %v614
    %v616 = vpop.f32.mrb[0].mxu0
    %617 = vmatprep.mubr.f32.mxu0 0.0
    %618 = vmatmul.mubr.f32.gmra.mrb[0].mxu0 %v446
    %v619 = vpop.f32.mrb[0].mxu0
    %v620 = vadd.f32 0.0, %v619
    %v621 = vpop.f32.mrb[0].mxu0
    %622 = vmatprep.mubr.f32.mxu0 0.0
    %623 = vmatmul.mubr.f32.gmra.mrb[0].mxu0 %v449
    %v624 = vpop.f32.mrb[0].mxu0
    %v625 = vadd.f32 0.0, %v624
    %v626 = vpop.f32.mrb[0].mxu0
    %627 = vmatprep.mubr.f32.mxu0 0.0
    %628 = vmatmul.mubr.f32.gmra.mrb[0].mxu0 %v452
    %v629 = vpop.f32.mrb[0].mxu0
    %v630 = vadd.f32 0.0, %v629
    %v631 = vpop.f32.mrb[0].mxu0
    %632 = vmatprep.mubr.f32.mxu0 0.0
    %633 = vmatmul.mubr.f32.gmra.mrb[0].mxu0 %v455
    %v634 = vpop.f32.mrb[0].mxu0
    %v635 = vadd.f32 0.0, %v634
    %v636 = vpop.f32.mrb[0].mxu0
    %637 = vmatprep.mubr.f32.mxu0 0.0
    %638 = vmatmul.mubr.f32.gmra.mrb[0].mxu0 %v458
    %v639 = vpop.f32.mrb[0].mxu0
    %v640 = vadd.f32 0.0, %v639
    %v641 = vpop.f32.mrb[0].mxu0
    %642 = vmatprep.mubr.f32.mxu0 0.0
    %643 = vmatmul.mubr.f32.gmra.mrb[0].mxu0 %v461
    %v644 = vpop.f32.mrb[0].mxu0
    %v645 = vadd.f32 0.0, %v644
    %v646 = vpop.f32.mrb[0].mxu0
    %647 = vmatprep.mubr.f32.mxu0 0.0
    %648 = vmatmul.mubr.f32.gmra.mrb[0].mxu0 %v464
    %v649 = vpop.f32.mrb[0].mxu0
    %v650 = vadd.f32 0.0, %v649
    %v651 = vpop.f32.mrb[0].mxu0
    %652 = vmatprep.mubr.f32.mxu0 0.0
    %653 = vmatmul.mubr.f32.gmra.mrb[0].mxu0 %v467
    %v654 = vpop.f32.mrb[0].mxu0
    %v655 = vadd.f32 0.0, %v654
    %v656 = vpop.f32.mrb[0].mxu0
    %657 = vmatprep.mubr.f32.mxu0 0.0
    %658 = vmatmul.mubr.f32.gmra.mrb[0].mxu0 %v470
    %v659 = vpop.f32.mrb[0].mxu0
    %v660 = vadd.f32 0.0, %v659
    %v661 = vpop.f32.mrb[0].mxu0
    %662 = vmatprep.mubr.f32.mxu0 0.0
    %663 = vmatmul.mubr.f32.gmra.mrb[0].mxu0 %v473
    %v664 = vpop.f32.mrb[0].mxu0
    %v665 = vadd.f32 0.0, %v664
    %v666 = vpop.f32.mrb[0].mxu0
    %667 = vmatprep.mubr.f32.mxu0 0.0
    %668 = vmatmul.mubr.f32.gmra.mrb[0].mxu0 %v476
    %v669 = vpop.f32.mrb[0].mxu0
    %v670 = vadd.f32 0.0, %v669
    %v671 = vpop.f32.mrb[0].mxu0
    %672 = vmatprep.mubr.f32.mxu0 0.0
    %673 = vmatmul.mubr.f32.gmra.mrb[0].mxu0 %v479
    %v674 = vpop.f32.mrb[0].mxu0
    %v675 = vadd.f32 0.0, %v674
    %v676 = vpop.f32.mrb[0].mxu0
    %677 = vmatprep.mubr.f32.mxu0 0.0
    %678 = vmatmul.mubr.f32.gmra.mrb[0].mxu0 %v482
    %v679 = vpop.f32.mrb[0].mxu0
    %v680 = vadd.f32 0.0, %v679
    %v681 = vpop.f32.mrb[0].mxu0
    %682 = vmatprep.mubr.f32.mxu0 0.0
    %683 = vmatmul.mubr.f32.gmra.mrb[0].mxu0 %v485
    %v684 = vpop.f32.mrb[0].mxu0
    %v685 = vadd.f32 0.0, %v684
    %v686 = vpop.f32.mrb[0].mxu0
    %687 = vmatprep.mubr.f32.mxu0 0.0
    %688 = vmatmul.mubr.f32.gmra.mrb[0].mxu0 %v488
    %v689 = vpop.f32.mrb[0].mxu0
    %v690 = vadd.f32 0.0, %v689
    %v691 = vpop.f32.mrb[0].mxu0
    %692 = vmatprep.mubr.f32.mxu0 0.0
    %693 = vmatmul.mubr.f32.gmra.mrb[0].mxu0 %v491
    %v694 = vpop.f32.mrb[0].mxu0
    %v695 = vadd.f32 0.0, %v694
    %v696 = vpop.f32.mrb[0].mxu0
    %697 = vmatprep.mubr.f32.mxu0 0.0
    %698 = vmatmul.mubr.f32.gmra.mrb[0].mxu0 %v494
    %v699 = vpop.f32.mrb[0].mxu0
    %v700 = vadd.f32 0.0, %v699
    %v701 = vpop.f32.mrb[0].mxu0
    %702 = vmatprep.mubr.f32.mxu0 0.0
    %703 = vmatmul.mubr.f32.gmra.mrb[0].mxu0 %v497
    %v704 = vpop.f32.mrb[0].mxu0
    %v705 = vadd.f32 0.0, %v704
    %v706 = vpop.f32.mrb[0].mxu0
    %707 = vmatprep.mubr.f32.mxu0 0.0
    %708 = vmatmul.mubr.f32.gmra.mrb[0].mxu0 %v500
    %v709 = vpop.f32.mrb[0].mxu0
    %v710 = vadd.f32 0.0, %v709
    %v711 = vpop.f32.mrb[0].mxu0
    %712 = vmatprep.mubr.f32.mxu0 0.0
    %713 = vmatmul.mubr.f32.gmra.mrb[0].mxu0 %v503
    %v714 = vpop.f32.mrb[0].mxu0
    %v715 = vadd.f32 0.0, %v714
    %v716 = vpop.f32.mrb[0].mxu0
    %717 = vmatprep.mubr.f32.mxu0 0.0
    %718 = vmatmul.mubr.f32.gmra.mrb[0].mxu0 %v506
    %v719 = vpop.f32.mrb[0].mxu0
    %v720 = vadd.f32 0.0, %v719
    %v721 = vpop.f32.mrb[0].mxu0
    %722 = vmatprep.mubr.f32.mxu0 0.0
    %723 = vmatmul.mubr.f32.gmra.mrb[0].mxu0 %v509
    %v724 = vpop.f32.mrb[0].mxu0
    %v725 = vadd.f32 0.0, %v724
    %v726 = vpop.f32.mrb[0].mxu0
    %727 = vmatprep.mubr.f32.mxu0 0.0
    %728 = vmatmul.mubr.f32.gmra.mrb[0].mxu0 %v512
    %v729 = vpop.f32.mrb[0].mxu0
    %v730 = vadd.f32 0.0, %v729
    %v731 = vpop.f32.mrb[0].mxu0
    %732 = vmatprep.mubr.f32.mxu0 0.0
    %733 = vmatmul.mubr.f32.gmra.mrb[0].mxu0 %v515
    %v734 = vpop.f32.mrb[0].mxu0
    %v735 = vadd.f32 0.0, %v734
    %v736 = vpop.f32.mrb[0].mxu0
    %737 = vmatprep.mubr.f32.mxu0 0.0
    %738 = vmatmul.mubr.f32.gmra.mrb[0].mxu0 %v518
    %v739 = vpop.f32.mrb[0].mxu0
    %v740 = vadd.f32 0.0, %v739
    %v741 = vpop.f32.mrb[0].mxu0
    %742 = vmatprep.mubr.f32.mxu0 0.0
    %743 = vmatmul.mubr.f32.gmra.mrb[0].mxu0 %v521
    %v744 = vpop.f32.mrb[0].mxu0
    %v745 = vadd.f32 0.0, %v744
    %v746 = vpop.f32.mrb[0].mxu0
    %747 = vdwg.mxu0
    %v748 = vmax.f32 %v590, 0.0
    %v749 = vmax.f32 %v595, 0.0
    %v750 = vmax.f32 %v600, 0.0
    %v751 = vmax.f32 %v605, 0.0
    %v752 = vmax.f32 %v610, 0.0
    %v753 = vmax.f32 %v615, 0.0
    %v754 = vmax.f32 %v620, 0.0
    %v755 = vmax.f32 %v625, 0.0
    %v756 = vmax.f32 %v630, 0.0
    %v757 = vmax.f32 %v635, 0.0
    %v758 = vmax.f32 %v640, 0.0
    %v759 = vmax.f32 %v645, 0.0
    %v760 = vmax.f32 %v650, 0.0
    %v761 = vmax.f32 %v655, 0.0
    %v762 = vmax.f32 %v660, 0.0
    %v763 = vmax.f32 %v665, 0.0
    %v764 = vmax.f32 %v670, 0.0
    %v765 = vmax.f32 %v675, 0.0
    %v766 = vmax.f32 %v680, 0.0
    %v767 = vmax.f32 %v685, 0.0
    %v768 = vmax.f32 %v690, 0.0
    %v769 = vmax.f32 %v695, 0.0
    %v770 = vmax.f32 %v700, 0.0
    %v771 = vmax.f32 %v705, 0.0
    %v772 = vmax.f32 %v710, 0.0
    %v773 = vmax.f32 %v715, 0.0
    %v774 = vmax.f32 %v720, 0.0
    %v775 = vmax.f32 %v725, 0.0
    %v776 = vmax.f32 %v730, 0.0
    %v777 = vmax.f32 %v735, 0.0
    %v778 = vmax.f32 %v740, 0.0
    %v779 = vmax.f32 %v745, 0.0
    %v780 = vld [vmem:[%s3] sm:$0xff]
    %v781 = vld [vmem:[%s3 + $0x8] sm:$0xff]
    %v782 = vld [vmem:[%s3 + $0x10] sm:$0xff]
    %v783 = vld [vmem:[%s3 + $0x18] sm:$0xff]
    %v785 = vsel %vm426, %v748, 0
    %v788 = vsel %vm426, %v749, 0
    %v791 = vsel %vm426, %v750, 0
    %v794 = vsel %vm426, %v751, 0
    %v797 = vsel %vm426, %v752, 0
    %v800 = vsel %vm426, %v753, 0
    %v803 = vsel %vm426, %v754, 0
    %v806 = vsel %vm426, %v755, 0
    %v809 = vsel %vm426, %v756, 0
    %v812 = vsel %vm426, %v757, 0
    %v815 = vsel %vm426, %v758, 0
    %v818 = vsel %vm426, %v759, 0
    %v821 = vsel %vm426, %v760, 0
    %v824 = vsel %vm426, %v761, 0
    %v827 = vsel %vm426, %v762, 0
    %v830 = vsel %vm426, %v763, 0
    %v833 = vsel %vm426, %v764, 0
    %v836 = vsel %vm426, %v765, 0
    %v839 = vsel %vm426, %v766, 0
    %v842 = vsel %vm426, %v767, 0
    %v845 = vsel %vm426, %v768, 0
    %v848 = vsel %vm426, %v769, 0
    %v851 = vsel %vm426, %v770, 0
    %v854 = vsel %vm426, %v771, 0
    %v857 = vsel %vm426, %v772, 0
    %v860 = vsel %vm426, %v773, 0
    %v863 = vsel %vm426, %v774, 0
    %v866 = vsel %vm426, %v775, 0
    %v869 = vsel %vm426, %v776, 0
    %v872 = vsel %vm426, %v777, 0
    %v875 = vsel %vm426, %v778, 0
    %v878 = vsel %vm426, %v779, 0
    %880 = vmatprep.subr.mxu0 0.0
    %881 = vmatpush1.msra.mxu0 %v780
    %882 = vmatprep.subr.mxu0 0.0
    %883 = vmatpush1.msra.mxu0 %v781
    %884 = vmatprep.subr.mxu0 0.0
    %885 = vmatpush1.msra.mxu0 %v782
    %886 = vmatprep.subr.mxu0 0.0
    %887 = vmatpush1.msra.mxu0 %v783
    %888 = vmatprep.subr.mxu0 0.0
    %889 = vmatpush1.msra.mxu0 0.0
    %890 = vmatprep.subr.mxu0 0.0
    %891 = vmatpush1.msra.mxu0 0.0
    %892 = vmatprep.subr.mxu0 0.0
    %893 = vmatpush1.msra.mxu0 0.0
    %894 = vmatprep.subr.mxu0 0.0
    %895 = vmatpush1.msra.mxu0 0.0
    %896 = vmatprep.subr.mxu0 0.0
    %897 = vmatpush1.msra.mxu0 0.0
    %898 = vmatprep.subr.mxu0 0.0
    %899 = vmatpush1.msra.mxu0 0.0
    %900 = vmatprep.subr.mxu0 0.0
    %901 = vmatpush1.msra.mxu0 0.0
    %902 = vmatprep.subr.mxu0 0.0
    %903 = vmatpush1.msra.mxu0 0.0
    %904 = vmatprep.subr.mxu0 0.0
    %905 = vmatpush1.msra.mxu0 0.0
    %906 = vmatprep.subr.mxu0 0.0
    %907 = vmatpush1.msra.mxu0 0.0
    %908 = vmatprep.subr.mxu0 0.0
    %909 = vmatpush1.msra.mxu0 0.0
    %910 = vmatprep.subr.mxu0 0.0
    %911 = vmatpush1.msra.mxu0 0.0
    %912 = vmatprep.subr.mxu0 0.0
    %913 = vmatpush1.msra.mxu0 0.0
    %914 = vmatprep.subr.mxu0 0.0
    %915 = vmatpush1.msra.mxu0 0.0
    %916 = vmatprep.subr.mxu0 0.0
    %917 = vmatpush1.msra.mxu0 0.0
    %918 = vmatprep.subr.mxu0 0.0
    %919 = vmatpush1.msra.mxu0 0.0
    %920 = vmatprep.subr.mxu0 0.0
    %921 = vmatpush1.msra.mxu0 0.0
    %922 = vmatprep.subr.mxu0 0.0
    %923 = vmatpush1.msra.mxu0 0.0
    %924 = vmatprep.subr.mxu0 0.0
    %925 = vmatpush1.msra.mxu0 0.0
    %926 = vmatprep.subr.mxu0 0.0
    %927 = vmatpush1.msra.mxu0 0.0
    %928 = vmatprep.subr.mxu0 0.0
    %929 = vmatpush1.msra.mxu0 0.0
    %930 = vmatprep.subr.mxu0 0.0
    %931 = vmatpush1.msra.mxu0 0.0
    %932 = vmatprep.subr.mxu0 0.0
    %933 = vmatpush1.msra.mxu0 0.0
    %934 = vmatprep.subr.mxu0 0.0
    %935 = vmatpush1.msra.mxu0 0.0
    %936 = vmatprep.subr.mxu0 0.0
    %937 = vmatpush1.msra.mxu0 0.0
    %938 = vmatprep.subr.mxu0 0.0
    %939 = vmatpush1.msra.mxu0 0.0
    %940 = vmatprep.subr.mxu0 0.0
    %941 = vmatpush1.msra.mxu0 0.0
    %942 = vmatprep.subr.mxu0 0.0
    %943 = vmatpush1.msra.mxu0 0.0
    %944 = vmatprep.mubr.f32.mxu0 0.0
    %945 = vmatmul.mubr.f32.gmra.mrb[0].mxu0 %v785
    %v946 = vpop.f32.mrb[0].mxu0
    %v947 = vadd.f32 0.0, %v946
    %v948 = vpop.f32.mrb[0].mxu0
    %949 = vmatprep.mubr.f32.mxu0 0.0
    %950 = vmatmul.mubr.f32.gmra.mrb[0].mxu0 %v788
    %v951 = vpop.f32.mrb[0].mxu0
    %v952 = vadd.f32 0.0, %v951
    %v953 = vpop.f32.mrb[0].mxu0
    %954 = vmatprep.mubr.f32.mxu0 0.0
    %955 = vmatmul.mubr.f32.gmra.mrb[0].mxu0 %v791
    %v956 = vpop.f32.mrb[0].mxu0
    %v957 = vadd.f32 0.0, %v956
    %v958 = vpop.f32.mrb[0].mxu0
    %959 = vmatprep.mubr.f32.mxu0 0.0
    %960 = vmatmul.mubr.f32.gmra.mrb[0].mxu0 %v794
    %v961 = vpop.f32.mrb[0].mxu0
    %v962 = vadd.f32 0.0, %v961
    %v963 = vpop.f32.mrb[0].mxu0
    %964 = vmatprep.mubr.f32.mxu0 0.0
    %965 = vmatmul.mubr.f32.gmra.mrb[0].mxu0 %v797
    %v966 = vpop.f32.mrb[0].mxu0
    %v967 = vadd.f32 0.0, %v966
    %v968 = vpop.f32.mrb[0].mxu0
    %969 = vmatprep.mubr.f32.mxu0 0.0
    %970 = vmatmul.mubr.f32.gmra.mrb[0].mxu0 %v800
    %v971 = vpop.f32.mrb[0].mxu0
    %v972 = vadd.f32 0.0, %v971
    %v973 = vpop.f32.mrb[0].mxu0
    %974 = vmatprep.mubr.f32.mxu0 0.0
    %975 = vmatmul.mubr.f32.gmra.mrb[0].mxu0 %v803
    %v976 = vpop.f32.mrb[0].mxu0
    %v977 = vadd.f32 0.0, %v976
    %v978 = vpop.f32.mrb[0].mxu0
    %979 = vmatprep.mubr.f32.mxu0 0.0
    %980 = vmatmul.mubr.f32.gmra.mrb[0].mxu0 %v806
    %v981 = vpop.f32.mrb[0].mxu0
    %v982 = vadd.f32 0.0, %v981
    %v983 = vpop.f32.mrb[0].mxu0
    %984 = vmatprep.mubr.f32.mxu0 0.0
    %985 = vmatmul.mubr.f32.gmra.mrb[0].mxu0 %v809
    %v986 = vpop.f32.mrb[0].mxu0
    %v987 = vadd.f32 0.0, %v986
    %v988 = vpop.f32.mrb[0].mxu0
    %989 = vmatprep.mubr.f32.mxu0 0.0
    %990 = vmatmul.mubr.f32.gmra.mrb[0].mxu0 %v812
    %v991 = vpop.f32.mrb[0].mxu0
    %v992 = vadd.f32 0.0, %v991
    %v993 = vpop.f32.mrb[0].mxu0
    %994 = vmatprep.mubr.f32.mxu0 0.0
    %995 = vmatmul.mubr.f32.gmra.mrb[0].mxu0 %v815
    %v996 = vpop.f32.mrb[0].mxu0
    %v997 = vadd.f32 0.0, %v996
    %v998 = vpop.f32.mrb[0].mxu0
    %999 = vmatprep.mubr.f32.mxu0 0.0
    %1000 = vmatmul.mubr.f32.gmra.mrb[0].mxu0 %v818
    %v1001 = vpop.f32.mrb[0].mxu0
    %v1002 = vadd.f32 0.0, %v1001
    %v1003 = vpop.f32.mrb[0].mxu0
    %1004 = vmatprep.mubr.f32.mxu0 0.0
    %1005 = vmatmul.mubr.f32.gmra.mrb[0].mxu0 %v821
    %v1006 = vpop.f32.mrb[0].mxu0
    %v1007 = vadd.f32 0.0, %v1006
    %v1008 = vpop.f32.mrb[0].mxu0
    %1009 = vmatprep.mubr.f32.mxu0 0.0
    %1010 = vmatmul.mubr.f32.gmra.mrb[0].mxu0 %v824
    %v1011 = vpop.f32.mrb[0].mxu0
    %v1012 = vadd.f32 0.0, %v1011
    %v1013 = vpop.f32.mrb[0].mxu0
    %1014 = vmatprep.mubr.f32.mxu0 0.0
    %1015 = vmatmul.mubr.f32.gmra.mrb[0].mxu0 %v827
    %v1016 = vpop.f32.mrb[0].mxu0
    %v1017 = vadd.f32 0.0, %v1016
    %v1018 = vpop.f32.mrb[0].mxu0
    %1019 = vmatprep.mubr.f32.mxu0 0.0
    %1020 = vmatmul.mubr.f32.gmra.mrb[0].mxu0 %v830
    %v1021 = vpop.f32.mrb[0].mxu0
    %v1022 = vadd.f32 0.0, %v1021
    %v1023 = vpop.f32.mrb[0].mxu0
    %1024 = vmatprep.mubr.f32.mxu0 0.0
    %1025 = vmatmul.mubr.f32.gmra.mrb[0].mxu0 %v833
    %v1026 = vpop.f32.mrb[0].mxu0
    %v1027 = vadd.f32 0.0, %v1026
    %v1028 = vpop.f32.mrb[0].mxu0
    %1029 = vmatprep.mubr.f32.mxu0 0.0
    %1030 = vmatmul.mubr.f32.gmra.mrb[0].mxu0 %v836
    %v1031 = vpop.f32.mrb[0].mxu0
    %v1032 = vadd.f32 0.0, %v1031
    %v1033 = vpop.f32.mrb[0].mxu0
    %1034 = vmatprep.mubr.f32.mxu0 0.0
    %1035 = vmatmul.mubr.f32.gmra.mrb[0].mxu0 %v839
    %v1036 = vpop.f32.mrb[0].mxu0
    %v1037 = vadd.f32 0.0, %v1036
    %v1038 = vpop.f32.mrb[0].mxu0
    %1039 = vmatprep.mubr.f32.mxu0 0.0
    %1040 = vmatmul.mubr.f32.gmra.mrb[0].mxu0 %v842
    %v1041 = vpop.f32.mrb[0].mxu0
    %v1042 = vadd.f32 0.0, %v1041
    %v1043 = vpop.f32.mrb[0].mxu0
    %1044 = vmatprep.mubr.f32.mxu0 0.0
    %1045 = vmatmul.mubr.f32.gmra.mrb[0].mxu0 %v845
    %v1046 = vpop.f32.mrb[0].mxu0
    %v1047 = vadd.f32 0.0, %v1046
    %v1048 = vpop.f32.mrb[0].mxu0
    %1049 = vmatprep.mubr.f32.mxu0 0.0
    %1050 = vmatmul.mubr.f32.gmra.mrb[0].mxu0 %v848
    %v1051 = vpop.f32.mrb[0].mxu0
    %v1052 = vadd.f32 0.0, %v1051
    %v1053 = vpop.f32.mrb[0].mxu0
    %1054 = vmatprep.mubr.f32.mxu0 0.0
    %1055 = vmatmul.mubr.f32.gmra.mrb[0].mxu0 %v851
    %v1056 = vpop.f32.mrb[0].mxu0
    %v1057 = vadd.f32 0.0, %v1056
    %v1058 = vpop.f32.mrb[0].mxu0
    %1059 = vmatprep.mubr.f32.mxu0 0.0
    %1060 = vmatmul.mubr.f32.gmra.mrb[0].mxu0 %v854
    %v1061 = vpop.f32.mrb[0].mxu0
    %v1062 = vadd.f32 0.0, %v1061
    %v1063 = vpop.f32.mrb[0].mxu0
    %1064 = vmatprep.mubr.f32.mxu0 0.0
    %1065 = vmatmul.mubr.f32.gmra.mrb[0].mxu0 %v857
    %v1066 = vpop.f32.mrb[0].mxu0
    %v1067 = vadd.f32 0.0, %v1066
    %v1068 = vpop.f32.mrb[0].mxu0
    %1069 = vmatprep.mubr.f32.mxu0 0.0
    %1070 = vmatmul.mubr.f32.gmra.mrb[0].mxu0 %v860
    %v1071 = vpop.f32.mrb[0].mxu0
    %v1072 = vadd.f32 0.0, %v1071
    %v1073 = vpop.f32.mrb[0].mxu0
    %1074 = vmatprep.mubr.f32.mxu0 0.0
    %1075 = vmatmul.mubr.f32.gmra.mrb[0].mxu0 %v863
    %v1076 = vpop.f32.mrb[0].mxu0
    %v1077 = vadd.f32 0.0, %v1076
    %v1078 = vpop.f32.mrb[0].mxu0
    %1079 = vmatprep.mubr.f32.mxu0 0.0
    %1080 = vmatmul.mubr.f32.gmra.mrb[0].mxu0 %v866
    %v1081 = vpop.f32.mrb[0].mxu0
    %v1082 = vadd.f32 0.0, %v1081
    %v1083 = vpop.f32.mrb[0].mxu0
    %1084 = vmatprep.mubr.f32.mxu0 0.0
    %1085 = vmatmul.mubr.f32.gmra.mrb[0].mxu0 %v869
    %v1086 = vpop.f32.mrb[0].mxu0
    %v1087 = vadd.f32 0.0, %v1086
    %v1088 = vpop.f32.mrb[0].mxu0
    %1089 = vmatprep.mubr.f32.mxu0 0.0
    %1090 = vmatmul.mubr.f32.gmra.mrb[0].mxu0 %v872
    %v1091 = vpop.f32.mrb[0].mxu0
    %v1092 = vadd.f32 0.0, %v1091
    %v1093 = vpop.f32.mrb[0].mxu0
    %1094 = vmatprep.mubr.f32.mxu0 0.0
    %1095 = vmatmul.mubr.f32.gmra.mrb[0].mxu0 %v875
    %v1096 = vpop.f32.mrb[0].mxu0
    %v1097 = vadd.f32 0.0, %v1096
    %v1098 = vpop.f32.mrb[0].mxu0
    %1099 = vmatprep.mubr.f32.mxu0 0.0
    %1100 = vmatmul.mubr.f32.gmra.mrb[0].mxu0 %v878
    %v1101 = vpop.f32.mrb[0].mxu0
    %v1102 = vadd.f32 0.0, %v1101
    %v1103 = vpop.f32.mrb[0].mxu0
    %1104 = vdwg.mxu0
    %v1105 = vmax.f32 %v947, 0.0
    %v1106 = vmax.f32 %v952, 0.0
    %v1107 = vmax.f32 %v957, 0.0
    %v1108 = vmax.f32 %v962, 0.0
    %v1109 = vmax.f32 %v967, 0.0
    %v1110 = vmax.f32 %v972, 0.0
    %v1111 = vmax.f32 %v977, 0.0
    %v1112 = vmax.f32 %v982, 0.0
    %v1113 = vmax.f32 %v987, 0.0
    %v1114 = vmax.f32 %v992, 0.0
    %v1115 = vmax.f32 %v997, 0.0
    %v1116 = vmax.f32 %v1002, 0.0
    %v1117 = vmax.f32 %v1007, 0.0
    %v1118 = vmax.f32 %v1012, 0.0
    %v1119 = vmax.f32 %v1017, 0.0
    %v1120 = vmax.f32 %v1022, 0.0
    %v1121 = vmax.f32 %v1027, 0.0
    %v1122 = vmax.f32 %v1032, 0.0
    %v1123 = vmax.f32 %v1037, 0.0
    %v1124 = vmax.f32 %v1042, 0.0
    %v1125 = vmax.f32 %v1047, 0.0
    %v1126 = vmax.f32 %v1052, 0.0
    %v1127 = vmax.f32 %v1057, 0.0
    %v1128 = vmax.f32 %v1062, 0.0
    %v1129 = vmax.f32 %v1067, 0.0
    %v1130 = vmax.f32 %v1072, 0.0
    %v1131 = vmax.f32 %v1077, 0.0
    %v1132 = vmax.f32 %v1082, 0.0
    %v1133 = vmax.f32 %v1087, 0.0
    %v1134 = vmax.f32 %v1092, 0.0
    %v1135 = vmax.f32 %v1097, 0.0
    %v1136 = vmax.f32 %v1102, 0.0
    %v1137 = vld [vmem:[%s4] sm:$0xff]
    %v1138 = vld [vmem:[%s4 + $0x8] sm:$0xff]
    %v1139 = vld [vmem:[%s4 + $0x10] sm:$0xff]
    %v1140 = vld [vmem:[%s4 + $0x18] sm:$0xff]
    %1141 = vmatprep.subr.mxu0 0.0
    %1142 = vmatpush1.msra.mxu0 %v1137
    %1143 = vmatprep.subr.mxu0 0.0
    %1144 = vmatpush1.msra.mxu0 %v1138
    %1145 = vmatprep.subr.mxu0 0.0
    %1146 = vmatpush1.msra.mxu0 %v1139
    %1147 = vmatprep.subr.mxu0 0.0
    %1148 = vmatpush1.msra.mxu0 %v1140
    %1149 = vmatprep.subr.mxu0 0.0
    %1150 = vmatpush1.msra.mxu0 0.0
    %1151 = vmatprep.subr.mxu0 0.0
    %1152 = vmatpush1.msra.mxu0 0.0
    %1153 = vmatprep.subr.mxu0 0.0
    %1154 = vmatpush1.msra.mxu0 0.0
    %1155 = vmatprep.subr.mxu0 0.0
    %1156 = vmatpush1.msra.mxu0 0.0
    %1157 = vmatprep.subr.mxu0 0.0
    %1158 = vmatpush1.msra.mxu0 0.0
    %1159 = vmatprep.subr.mxu0 0.0
    %1160 = vmatpush1.msra.mxu0 0.0
    %1161 = vmatprep.subr.mxu0 0.0
    %1162 = vmatpush1.msra.mxu0 0.0
    %1163 = vmatprep.subr.mxu0 0.0
    %1164 = vmatpush1.msra.mxu0 0.0
    %1165 = vmatprep.subr.mxu0 0.0
    %1166 = vmatpush1.msra.mxu0 0.0
    %1167 = vmatprep.subr.mxu0 0.0
    %1168 = vmatpush1.msra.mxu0 0.0
    %1169 = vmatprep.subr.mxu0 0.0
    %1170 = vmatpush1.msra.mxu0 0.0
    %1171 = vmatprep.subr.mxu0 0.0
    %1172 = vmatpush1.msra.mxu0 0.0
    %1173 = vmatprep.subr.mxu0 0.0
    %1174 = vmatpush1.msra.mxu0 0.0
    %1175 = vmatprep.subr.mxu0 0.0
    %1176 = vmatpush1.msra.mxu0 0.0
    %1177 = vmatprep.subr.mxu0 0.0
    %1178 = vmatpush1.msra.mxu0 0.0
    %1179 = vmatprep.subr.mxu0 0.0
    %1180 = vmatpush1.msra.mxu0 0.0
    %1181 = vmatprep.subr.mxu0 0.0
    %1182 = vmatpush1.msra.mxu0 0.0
    %1183 = vmatprep.subr.mxu0 0.0
    %1184 = vmatpush1.msra.mxu0 0.0
    %1185 = vmatprep.subr.mxu0 0.0
    %1186 = vmatpush1.msra.mxu0 0.0
    %1187 = vmatprep.subr.mxu0 0.0
    %1188 = vmatpush1.msra.mxu0 0.0
    %1189 = vmatprep.subr.mxu0 0.0
    %1190 = vmatpush1.msra.mxu0 0.0
    %1191 = vmatprep.subr.mxu0 0.0
    %1192 = vmatpush1.msra.mxu0 0.0
    %1193 = vmatprep.subr.mxu0 0.0
    %1194 = vmatpush1.msra.mxu0 0.0
    %1195 = vmatprep.subr.mxu0 0.0
    %1196 = vmatpush1.msra.mxu0 0.0
    %1197 = vmatprep.subr.mxu0 0.0
    %1198 = vmatpush1.msra.mxu0 0.0
    %1199 = vmatprep.subr.mxu0 0.0
    %1200 = vmatpush1.msra.mxu0 0.0
    %1201 = vmatprep.subr.mxu0 0.0
    %1202 = vmatpush1.msra.mxu0 0.0
    %1203 = vmatprep.subr.mxu0 0.0
    %1204 = vmatpush1.msra.mxu0 0.0
    %1205 = vmatprep.mubr.f32.mxu0 0.0
    %1206 = vmatmul.mubr.f32.gmra.mrb[0].mxu0 %v785
    %v1207 = vpop.f32.mrb[0].mxu0
    %v1208 = vadd.f32 0.0, %v1207
    %v1209 = vpop.f32.mrb[0].mxu0
    %1210 = vmatprep.mubr.f32.mxu0 0.0
    %1211 = vmatmul.mubr.f32.gmra.mrb[0].mxu0 %v788
    %v1212 = vpop.f32.mrb[0].mxu0
    %v1213 = vadd.f32 0.0, %v1212
    %v1214 = vpop.f32.mrb[0].mxu0
    %1215 = vmatprep.mubr.f32.mxu0 0.0
    %1216 = vmatmul.mubr.f32.gmra.mrb[0].mxu0 %v791
    %v1217 = vpop.f32.mrb[0].mxu0
    %v1218 = vadd.f32 0.0, %v1217
    %v1219 = vpop.f32.mrb[0].mxu0
    %1220 = vmatprep.mubr.f32.mxu0 0.0
    %1221 = vmatmul.mubr.f32.gmra.mrb[0].mxu0 %v794
    %v1222 = vpop.f32.mrb[0].mxu0
    %v1223 = vadd.f32 0.0, %v1222
    %v1224 = vpop.f32.mrb[0].mxu0
    %1225 = vmatprep.mubr.f32.mxu0 0.0
    %1226 = vmatmul.mubr.f32.gmra.mrb[0].mxu0 %v797
    %v1227 = vpop.f32.mrb[0].mxu0
    %v1228 = vadd.f32 0.0, %v1227
    %v1229 = vpop.f32.mrb[0].mxu0
    %1230 = vmatprep.mubr.f32.mxu0 0.0
    %1231 = vmatmul.mubr.f32.gmra.mrb[0].mxu0 %v800
    %v1232 = vpop.f32.mrb[0].mxu0
    %v1233 = vadd.f32 0.0, %v1232
    %v1234 = vpop.f32.mrb[0].mxu0
    %1235 = vmatprep.mubr.f32.mxu0 0.0
    %1236 = vmatmul.mubr.f32.gmra.mrb[0].mxu0 %v803
    %v1237 = vpop.f32.mrb[0].mxu0
    %v1238 = vadd.f32 0.0, %v1237
    %v1239 = vpop.f32.mrb[0].mxu0
    %1240 = vmatprep.mubr.f32.mxu0 0.0
    %1241 = vmatmul.mubr.f32.gmra.mrb[0].mxu0 %v806
    %v1242 = vpop.f32.mrb[0].mxu0
    %v1243 = vadd.f32 0.0, %v1242
    %v1244 = vpop.f32.mrb[0].mxu0
    %1245 = vmatprep.mubr.f32.mxu0 0.0
    %1246 = vmatmul.mubr.f32.gmra.mrb[0].mxu0 %v809
    %v1247 = vpop.f32.mrb[0].mxu0
    %v1248 = vadd.f32 0.0, %v1247
    %v1249 = vpop.f32.mrb[0].mxu0
    %1250 = vmatprep.mubr.f32.mxu0 0.0
    %1251 = vmatmul.mubr.f32.gmra.mrb[0].mxu0 %v812
    %v1252 = vpop.f32.mrb[0].mxu0
    %v1253 = vadd.f32 0.0, %v1252
    %v1254 = vpop.f32.mrb[0].mxu0
    %1255 = vmatprep.mubr.f32.mxu0 0.0
    %1256 = vmatmul.mubr.f32.gmra.mrb[0].mxu0 %v815
    %v1257 = vpop.f32.mrb[0].mxu0
    %v1258 = vadd.f32 0.0, %v1257
    %v1259 = vpop.f32.mrb[0].mxu0
    %1260 = vmatprep.mubr.f32.mxu0 0.0
    %1261 = vmatmul.mubr.f32.gmra.mrb[0].mxu0 %v818
    %v1262 = vpop.f32.mrb[0].mxu0
    %v1263 = vadd.f32 0.0, %v1262
    %v1264 = vpop.f32.mrb[0].mxu0
    %1265 = vmatprep.mubr.f32.mxu0 0.0
    %1266 = vmatmul.mubr.f32.gmra.mrb[0].mxu0 %v821
    %v1267 = vpop.f32.mrb[0].mxu0
    %v1268 = vadd.f32 0.0, %v1267
    %v1269 = vpop.f32.mrb[0].mxu0
    %1270 = vmatprep.mubr.f32.mxu0 0.0
    %1271 = vmatmul.mubr.f32.gmra.mrb[0].mxu0 %v824
    %v1272 = vpop.f32.mrb[0].mxu0
    %v1273 = vadd.f32 0.0, %v1272
    %v1274 = vpop.f32.mrb[0].mxu0
    %1275 = vmatprep.mubr.f32.mxu0 0.0
    %1276 = vmatmul.mubr.f32.gmra.mrb[0].mxu0 %v827
    %v1277 = vpop.f32.mrb[0].mxu0
    %v1278 = vadd.f32 0.0, %v1277
    %v1279 = vpop.f32.mrb[0].mxu0
    %1280 = vmatprep.mubr.f32.mxu0 0.0
    %1281 = vmatmul.mubr.f32.gmra.mrb[0].mxu0 %v830
    %v1282 = vpop.f32.mrb[0].mxu0
    %v1283 = vadd.f32 0.0, %v1282
    %v1284 = vpop.f32.mrb[0].mxu0
    %1285 = vmatprep.mubr.f32.mxu0 0.0
    %1286 = vmatmul.mubr.f32.gmra.mrb[0].mxu0 %v833
    %v1287 = vpop.f32.mrb[0].mxu0
    %v1288 = vadd.f32 0.0, %v1287
    %v1289 = vpop.f32.mrb[0].mxu0
    %1290 = vmatprep.mubr.f32.mxu0 0.0
    %1291 = vmatmul.mubr.f32.gmra.mrb[0].mxu0 %v836
    %v1292 = vpop.f32.mrb[0].mxu0
    %v1293 = vadd.f32 0.0, %v1292
    %v1294 = vpop.f32.mrb[0].mxu0
    %1295 = vmatprep.mubr.f32.mxu0 0.0
    %1296 = vmatmul.mubr.f32.gmra.mrb[0].mxu0 %v839
    %v1297 = vpop.f32.mrb[0].mxu0
    %v1298 = vadd.f32 0.0, %v1297
    %v1299 = vpop.f32.mrb[0].mxu0
    %1300 = vmatprep.mubr.f32.mxu0 0.0
    %1301 = vmatmul.mubr.f32.gmra.mrb[0].mxu0 %v842
    %v1302 = vpop.f32.mrb[0].mxu0
    %v1303 = vadd.f32 0.0, %v1302
    %v1304 = vpop.f32.mrb[0].mxu0
    %1305 = vmatprep.mubr.f32.mxu0 0.0
    %1306 = vmatmul.mubr.f32.gmra.mrb[0].mxu0 %v845
    %v1307 = vpop.f32.mrb[0].mxu0
    %v1308 = vadd.f32 0.0, %v1307
    %v1309 = vpop.f32.mrb[0].mxu0
    %1310 = vmatprep.mubr.f32.mxu0 0.0
    %1311 = vmatmul.mubr.f32.gmra.mrb[0].mxu0 %v848
    %v1312 = vpop.f32.mrb[0].mxu0
    %v1313 = vadd.f32 0.0, %v1312
    %v1314 = vpop.f32.mrb[0].mxu0
    %1315 = vmatprep.mubr.f32.mxu0 0.0
    %1316 = vmatmul.mubr.f32.gmra.mrb[0].mxu0 %v851
    %v1317 = vpop.f32.mrb[0].mxu0
    %v1318 = vadd.f32 0.0, %v1317
    %v1319 = vpop.f32.mrb[0].mxu0
    %1320 = vmatprep.mubr.f32.mxu0 0.0
    %1321 = vmatmul.mubr.f32.gmra.mrb[0].mxu0 %v854
    %v1322 = vpop.f32.mrb[0].mxu0
    %v1323 = vadd.f32 0.0, %v1322
    %v1324 = vpop.f32.mrb[0].mxu0
    %1325 = vmatprep.mubr.f32.mxu0 0.0
    %1326 = vmatmul.mubr.f32.gmra.mrb[0].mxu0 %v857
    %v1327 = vpop.f32.mrb[0].mxu0
    %v1328 = vadd.f32 0.0, %v1327
    %v1329 = vpop.f32.mrb[0].mxu0
    %1330 = vmatprep.mubr.f32.mxu0 0.0
    %1331 = vmatmul.mubr.f32.gmra.mrb[0].mxu0 %v860
    %v1332 = vpop.f32.mrb[0].mxu0
    %v1333 = vadd.f32 0.0, %v1332
    %v1334 = vpop.f32.mrb[0].mxu0
    %1335 = vmatprep.mubr.f32.mxu0 0.0
    %1336 = vmatmul.mubr.f32.gmra.mrb[0].mxu0 %v863
    %v1337 = vpop.f32.mrb[0].mxu0
    %v1338 = vadd.f32 0.0, %v1337
    %v1339 = vpop.f32.mrb[0].mxu0
    %1340 = vmatprep.mubr.f32.mxu0 0.0
    %1341 = vmatmul.mubr.f32.gmra.mrb[0].mxu0 %v866
    %v1342 = vpop.f32.mrb[0].mxu0
    %v1343 = vadd.f32 0.0, %v1342
    %v1344 = vpop.f32.mrb[0].mxu0
    %1345 = vmatprep.mubr.f32.mxu0 0.0
    %1346 = vmatmul.mubr.f32.gmra.mrb[0].mxu0 %v869
    %v1347 = vpop.f32.mrb[0].mxu0
    %v1348 = vadd.f32 0.0, %v1347
    %v1349 = vpop.f32.mrb[0].mxu0
    %1350 = vmatprep.mubr.f32.mxu0 0.0
    %1351 = vmatmul.mubr.f32.gmra.mrb[0].mxu0 %v872
    %v1352 = vpop.f32.mrb[0].mxu0
    %v1353 = vadd.f32 0.0, %v1352
    %v1354 = vpop.f32.mrb[0].mxu0
    %1355 = vmatprep.mubr.f32.mxu0 0.0
    %1356 = vmatmul.mubr.f32.gmra.mrb[0].mxu0 %v875
    %v1357 = vpop.f32.mrb[0].mxu0
    %v1358 = vadd.f32 0.0, %v1357
    %v1359 = vpop.f32.mrb[0].mxu0
    %1360 = vmatprep.mubr.f32.mxu0 0.0
    %1361 = vmatmul.mubr.f32.gmra.mrb[0].mxu0 %v878
    %v1362 = vpop.f32.mrb[0].mxu0
    %v1363 = vadd.f32 0.0, %v1362
    %v1364 = vpop.f32.mrb[0].mxu0
    %1365 = vdwg.mxu0
    %v1366 = vxor.u32 %v1208, 2147483648
    %v1367 = vxor.u32 %v1213, 2147483648
    %v1368 = vxor.u32 %v1218, 2147483648
    %v1369 = vxor.u32 %v1223, 2147483648
    %v1370 = vxor.u32 %v1228, 2147483648
    %v1371 = vxor.u32 %v1233, 2147483648
    %v1372 = vxor.u32 %v1238, 2147483648
    %v1373 = vxor.u32 %v1243, 2147483648
    %v1374 = vxor.u32 %v1248, 2147483648
    %v1375 = vxor.u32 %v1253, 2147483648
    %v1376 = vxor.u32 %v1258, 2147483648
    %v1377 = vxor.u32 %v1263, 2147483648
    %v1378 = vxor.u32 %v1268, 2147483648
    %v1379 = vxor.u32 %v1273, 2147483648
    %v1380 = vxor.u32 %v1278, 2147483648
    %v1381 = vxor.u32 %v1283, 2147483648
    %v1382 = vxor.u32 %v1288, 2147483648
    %v1383 = vxor.u32 %v1293, 2147483648
    %v1384 = vxor.u32 %v1298, 2147483648
    %v1385 = vxor.u32 %v1303, 2147483648
    %v1386 = vxor.u32 %v1308, 2147483648
    %v1387 = vxor.u32 %v1313, 2147483648
    %v1388 = vxor.u32 %v1318, 2147483648
    %v1389 = vxor.u32 %v1323, 2147483648
    %v1390 = vxor.u32 %v1328, 2147483648
    %v1391 = vxor.u32 %v1333, 2147483648
    %v1392 = vxor.u32 %v1338, 2147483648
    %v1393 = vxor.u32 %v1343, 2147483648
    %v1394 = vxor.u32 %v1348, 2147483648
    %v1395 = vxor.u32 %v1353, 2147483648
    %v1396 = vxor.u32 %v1358, 2147483648
    %v1397 = vxor.u32 %v1363, 2147483648
    %v1398 = vmul.f32 %v1366, 1.442695
    %v1399 = vpow.pop %v1398
    %v1400 = vmul.f32 %v1367, 1.442695
    %v1401 = vpow.pop %v1400
    %v1402 = vmul.f32 %v1368, 1.442695
    %v1403 = vpow.pop %v1402
    %v1404 = vmul.f32 %v1369, 1.442695
    %v1405 = vpow.pop %v1404
    %v1406 = vmul.f32 %v1370, 1.442695
    %v1407 = vpow.pop %v1406
    %v1408 = vmul.f32 %v1371, 1.442695
    %v1409 = vpow.pop %v1408
    %v1410 = vmul.f32 %v1372, 1.442695
    %v1411 = vpow.pop %v1410
    %v1412 = vmul.f32 %v1373, 1.442695
    %v1413 = vpow.pop %v1412
    %v1414 = vmul.f32 %v1374, 1.442695
    %v1415 = vpow.pop %v1414
    %v1416 = vmul.f32 %v1375, 1.442695
    %v1417 = vpow.pop %v1416
    %v1418 = vmul.f32 %v1376, 1.442695
    %v1419 = vpow.pop %v1418
    %v1420 = vmul.f32 %v1377, 1.442695
    %v1421 = vpow.pop %v1420
    %v1422 = vmul.f32 %v1378, 1.442695
    %v1423 = vpow.pop %v1422
    %v1424 = vmul.f32 %v1379, 1.442695
    %v1425 = vpow.pop %v1424
    %v1426 = vmul.f32 %v1380, 1.442695
    %v1427 = vpow.pop %v1426
    %v1428 = vmul.f32 %v1381, 1.442695
    %v1429 = vpow.pop %v1428
    %v1430 = vmul.f32 %v1382, 1.442695
    %v1431 = vpow.pop %v1430
    %v1432 = vmul.f32 %v1383, 1.442695
    %v1433 = vpow.pop %v1432
    %v1434 = vmul.f32 %v1384, 1.442695
    %v1435 = vpow.pop %v1434
    %v1436 = vmul.f32 %v1385, 1.442695
    %v1437 = vpow.pop %v1436
    %v1438 = vmul.f32 %v1386, 1.442695
    %v1439 = vpow.pop %v1438
    %v1440 = vmul.f32 %v1387, 1.442695
    %v1441 = vpow.pop %v1440
    %v1442 = vmul.f32 %v1388, 1.442695
    %v1443 = vpow.pop %v1442
    %v1444 = vmul.f32 %v1389, 1.442695
    %v1445 = vpow.pop %v1444
    %v1446 = vmul.f32 %v1390, 1.442695
    %v1447 = vpow.pop %v1446
    %v1448 = vmul.f32 %v1391, 1.442695
    %v1449 = vpow.pop %v1448
    %v1450 = vmul.f32 %v1392, 1.442695
    %v1451 = vpow.pop %v1450
    %v1452 = vmul.f32 %v1393, 1.442695
    %v1453 = vpow.pop %v1452
    %v1454 = vmul.f32 %v1394, 1.442695
    %v1455 = vpow.pop %v1454
    %v1456 = vmul.f32 %v1395, 1.442695
    %v1457 = vpow.pop %v1456
    %v1458 = vmul.f32 %v1396, 1.442695
    %v1459 = vpow.pop %v1458
    %v1460 = vmul.f32 %v1397, 1.442695
    %v1461 = vpow.pop %v1460
    %v1462 = vadd.f32 %v1399, 1.0
    %v1463 = vadd.f32 %v1401, 1.0
    %v1464 = vadd.f32 %v1403, 1.0
    %v1465 = vadd.f32 %v1405, 1.0
    %v1466 = vadd.f32 %v1407, 1.0
    %v1467 = vadd.f32 %v1409, 1.0
    %v1468 = vadd.f32 %v1411, 1.0
    %v1469 = vadd.f32 %v1413, 1.0
    %v1470 = vadd.f32 %v1415, 1.0
    %v1471 = vadd.f32 %v1417, 1.0
    %v1472 = vadd.f32 %v1419, 1.0
    %v1473 = vadd.f32 %v1421, 1.0
    %v1474 = vadd.f32 %v1423, 1.0
    %v1475 = vadd.f32 %v1425, 1.0
    %v1476 = vadd.f32 %v1427, 1.0
    %v1477 = vadd.f32 %v1429, 1.0
    %v1478 = vadd.f32 %v1431, 1.0
    %v1479 = vadd.f32 %v1433, 1.0
    %v1480 = vadd.f32 %v1435, 1.0
    %v1481 = vadd.f32 %v1437, 1.0
    %v1482 = vadd.f32 %v1439, 1.0
    %v1483 = vadd.f32 %v1441, 1.0
    %v1484 = vadd.f32 %v1443, 1.0
    %v1485 = vadd.f32 %v1445, 1.0
    %v1486 = vadd.f32 %v1447, 1.0
    %v1487 = vadd.f32 %v1449, 1.0
    %v1488 = vadd.f32 %v1451, 1.0
    %v1489 = vadd.f32 %v1453, 1.0
    %v1490 = vadd.f32 %v1455, 1.0
    %v1491 = vadd.f32 %v1457, 1.0
    %v1492 = vadd.f32 %v1459, 1.0
    %v1493 = vadd.f32 %v1461, 1.0
    %v1494 = vrcp.pop %v1462
    %v1495 = vmul.f32 1.0, %v1494
    %v1496 = vrcp.pop %v1463
    %v1497 = vmul.f32 1.0, %v1496
    %v1498 = vrcp.pop %v1464
    %v1499 = vmul.f32 1.0, %v1498
    %v1500 = vrcp.pop %v1465
    %v1501 = vmul.f32 1.0, %v1500
    %v1502 = vrcp.pop %v1466
    %v1503 = vmul.f32 1.0, %v1502
    %v1504 = vrcp.pop %v1467
    %v1505 = vmul.f32 1.0, %v1504
    %v1506 = vrcp.pop %v1468
    %v1507 = vmul.f32 1.0, %v1506
    %v1508 = vrcp.pop %v1469
    %v1509 = vmul.f32 1.0, %v1508
    %v1510 = vrcp.pop %v1470
    %v1511 = vmul.f32 1.0, %v1510
    %v1512 = vrcp.pop %v1471
    %v1513 = vmul.f32 1.0, %v1512
    %v1514 = vrcp.pop %v1472
    %v1515 = vmul.f32 1.0, %v1514
    %v1516 = vrcp.pop %v1473
    %v1517 = vmul.f32 1.0, %v1516
    %v1518 = vrcp.pop %v1474
    %v1519 = vmul.f32 1.0, %v1518
    %v1520 = vrcp.pop %v1475
    %v1521 = vmul.f32 1.0, %v1520
    %v1522 = vrcp.pop %v1476
    %v1523 = vmul.f32 1.0, %v1522
    %v1524 = vrcp.pop %v1477
    %v1525 = vmul.f32 1.0, %v1524
    %v1526 = vrcp.pop %v1478
    %v1527 = vmul.f32 1.0, %v1526
    %v1528 = vrcp.pop %v1479
    %v1529 = vmul.f32 1.0, %v1528
    %v1530 = vrcp.pop %v1480
    %v1531 = vmul.f32 1.0, %v1530
    %v1532 = vrcp.pop %v1481
    %v1533 = vmul.f32 1.0, %v1532
    %v1534 = vrcp.pop %v1482
    %v1535 = vmul.f32 1.0, %v1534
    %v1536 = vrcp.pop %v1483
    %v1537 = vmul.f32 1.0, %v1536
    %v1538 = vrcp.pop %v1484
    %v1539 = vmul.f32 1.0, %v1538
    %v1540 = vrcp.pop %v1485
    %v1541 = vmul.f32 1.0, %v1540
    %v1542 = vrcp.pop %v1486
    %v1543 = vmul.f32 1.0, %v1542
    %v1544 = vrcp.pop %v1487
    %v1545 = vmul.f32 1.0, %v1544
    %v1546 = vrcp.pop %v1488
    %v1547 = vmul.f32 1.0, %v1546
    %v1548 = vrcp.pop %v1489
    %v1549 = vmul.f32 1.0, %v1548
    %v1550 = vrcp.pop %v1490
    %v1551 = vmul.f32 1.0, %v1550
    %v1552 = vrcp.pop %v1491
    %v1553 = vmul.f32 1.0, %v1552
    %v1554 = vrcp.pop %v1492
    %v1555 = vmul.f32 1.0, %v1554
    %v1556 = vrcp.pop %v1493
    %v1557 = vmul.f32 1.0, %v1556
    %vm1558 = vcmask 64512
    %v1559 = vsel %vm1558, %v1495, 0.0
    %v1560 = vsel %vm1558, %v1497, 0.0
    %v1561 = vadd.f32 %v1559, %v1560
    %v1562 = vsel %vm1558, %v1499, 0.0
    %v1563 = vadd.f32 %v1561, %v1562
    %v1564 = vsel %vm1558, %v1501, 0.0
    %v1565 = vadd.f32 %v1563, %v1564
    %v1566 = vsel %vm1558, %v1503, 0.0
    %v1567 = vadd.f32 %v1565, %v1566
    %v1568 = vsel %vm1558, %v1505, 0.0
    %v1569 = vadd.f32 %v1567, %v1568
    %v1570 = vsel %vm1558, %v1507, 0.0
    %v1571 = vadd.f32 %v1569, %v1570
    %v1572 = vsel %vm1558, %v1509, 0.0
    %v1573 = vadd.f32 %v1571, %v1572
    %v1574 = vsel %vm1558, %v1511, 0.0
    %v1575 = vadd.f32 %v1573, %v1574
    %v1576 = vsel %vm1558, %v1513, 0.0
    %v1577 = vadd.f32 %v1575, %v1576
    %v1578 = vsel %vm1558, %v1515, 0.0
    %v1579 = vadd.f32 %v1577, %v1578
    %v1580 = vsel %vm1558, %v1517, 0.0
    %v1581 = vadd.f32 %v1579, %v1580
    %v1582 = vsel %vm1558, %v1519, 0.0
    %v1583 = vadd.f32 %v1581, %v1582
    %v1584 = vsel %vm1558, %v1521, 0.0
    %v1585 = vadd.f32 %v1583, %v1584
    %v1586 = vsel %vm1558, %v1523, 0.0
    %v1587 = vadd.f32 %v1585, %v1586
    %v1588 = vsel %vm1558, %v1525, 0.0
    %v1589 = vadd.f32 %v1587, %v1588
    %v1590 = vsel %vm1558, %v1527, 0.0
    %v1591 = vadd.f32 %v1589, %v1590
    %v1592 = vsel %vm1558, %v1529, 0.0
    %v1593 = vadd.f32 %v1591, %v1592
    %v1594 = vsel %vm1558, %v1531, 0.0
    %v1595 = vadd.f32 %v1593, %v1594
    %v1596 = vsel %vm1558, %v1533, 0.0
    %v1597 = vadd.f32 %v1595, %v1596
    %v1598 = vsel %vm1558, %v1535, 0.0
    %v1599 = vadd.f32 %v1597, %v1598
    %v1600 = vsel %vm1558, %v1537, 0.0
    %v1601 = vadd.f32 %v1599, %v1600
    %v1602 = vsel %vm1558, %v1539, 0.0
    %v1603 = vadd.f32 %v1601, %v1602
    %v1604 = vsel %vm1558, %v1541, 0.0
    %v1605 = vadd.f32 %v1603, %v1604
    %v1606 = vsel %vm1558, %v1543, 0.0
    %v1607 = vadd.f32 %v1605, %v1606
    %v1608 = vsel %vm1558, %v1545, 0.0
    %v1609 = vadd.f32 %v1607, %v1608
    %v1610 = vsel %vm1558, %v1547, 0.0
    %v1611 = vadd.f32 %v1609, %v1610
    %v1612 = vsel %vm1558, %v1549, 0.0
    %v1613 = vadd.f32 %v1611, %v1612
    %v1614 = vsel %vm1558, %v1551, 0.0
    %v1615 = vadd.f32 %v1613, %v1614
    %v1616 = vsel %vm1558, %v1553, 0.0
    %v1617 = vadd.f32 %v1615, %v1616
    %v1618 = vsel %vm1558, %v1555, 0.0
    %v1619 = vadd.f32 %v1617, %v1618
    %v1620 = vsel %vm1558, %v1557, 0.0
    %v1621 = vadd.f32 %v1619, %v1620
    %v1622 = vrot.slane %v1621, 4
    %v1623 = vadd.f32 %v1621, %v1622
    %v1624 = vrot.slane %v1623, 2
    %v1625 = vadd.f32 %v1623, %v1624
    %v1626 = vrot.slane %v1625, 1
    %v1627 = vadd.f32 %v1625, %v1626
    %v1628 = vadd.f32 %v1627, 1e-06
    %v1629 = vrcp.pop %v1628
    %v1630 = vmul.f32 %v1495, %v1629
    %v1631 = vmul.f32 %v1497, %v1629
    %v1632 = vmul.f32 %v1499, %v1629
    %v1633 = vmul.f32 %v1501, %v1629
    %v1634 = vmul.f32 %v1503, %v1629
    %v1635 = vmul.f32 %v1505, %v1629
    %v1636 = vmul.f32 %v1507, %v1629
    %v1637 = vmul.f32 %v1509, %v1629
    %v1638 = vmul.f32 %v1511, %v1629
    %v1639 = vmul.f32 %v1513, %v1629
    %v1640 = vmul.f32 %v1515, %v1629
    %v1641 = vmul.f32 %v1517, %v1629
    %v1642 = vmul.f32 %v1519, %v1629
    %v1643 = vmul.f32 %v1521, %v1629
    %v1644 = vmul.f32 %v1523, %v1629
    %v1645 = vmul.f32 %v1525, %v1629
    %v1646 = vmul.f32 %v1527, %v1629
    %v1647 = vmul.f32 %v1529, %v1629
    %v1648 = vmul.f32 %v1531, %v1629
    %v1649 = vmul.f32 %v1533, %v1629
    %v1650 = vmul.f32 %v1535, %v1629
    %v1651 = vmul.f32 %v1537, %v1629
    %v1652 = vmul.f32 %v1539, %v1629
    %v1653 = vmul.f32 %v1541, %v1629
    %v1654 = vmul.f32 %v1543, %v1629
    %v1655 = vmul.f32 %v1545, %v1629
    %v1656 = vmul.f32 %v1547, %v1629
    %v1657 = vmul.f32 %v1549, %v1629
    %v1658 = vmul.f32 %v1551, %v1629
    %v1659 = vmul.f32 %v1553, %v1629
    %v1660 = vmul.f32 %v1555, %v1629
    %v1661 = vmul.f32 %v1557, %v1629
    %1662 = vxpose.xlu0.b32.start [1/16] %v1630, 128
    %1663 = vxpose.xlu0.b32.cont [2/16] %v1631, 128
    %1664 = vxpose.xlu0.b32.cont [3/16] %v1632, 128
    %1665 = vxpose.xlu0.b32.cont [4/16] %v1633, 128
    %1666 = vxpose.xlu0.b32.cont [5/16] %v1634, 128
    %1667 = vxpose.xlu0.b32.cont [6/16] %v1635, 128
    %1668 = vxpose.xlu0.b32.cont [7/16] %v1636, 128
    %1669 = vxpose.xlu0.b32.cont [8/16] %v1637, 128
    %1670 = vxpose.xlu0.b32.cont [9/16] %v1638, 128
    %1671 = vxpose.xlu0.b32.cont [10/16] %v1639, 128
    %1672 = vxpose.xlu0.b32.cont [11/16] %v1640, 128
    %1673 = vxpose.xlu0.b32.cont [12/16] %v1641, 128
    %1674 = vxpose.xlu0.b32.cont [13/16] %v1642, 128
    %1675 = vxpose.xlu0.b32.cont [14/16] %v1643, 128
    %1676 = vxpose.xlu0.b32.cont [15/16] %v1644, 128
    %1677 = vxpose.xlu0.b32.end [16/16] %v1645, 128
    %v1678 = vpop.trf.xlu0
    %v1679 = vpop.trf.xlu0
    %v1680 = vpop.trf.xlu0
    %v1681 = vpop.trf.xlu0
    %v1682 = vpop.trf.xlu0
    %v1683 = vpop.trf.xlu0
    %v1684 = vpop.trf.xlu0
    %v1685 = vpop.trf.xlu0
    %v1686 = vpop.trf.xlu0
    %v1687 = vpop.trf.xlu0
    %v1688 = vpop.trf.xlu0
    %v1689 = vpop.trf.xlu0
    %v1690 = vpop.trf.xlu0
    %v1691 = vpop.trf.xlu0
    %v1692 = vpop.trf.xlu0
    %v1693 = vpop.trf.xlu0
    %1694 = vxpose.xlu0.b32.start [1/16] %v1646, 128
    %1695 = vxpose.xlu0.b32.cont [2/16] %v1647, 128
    %1696 = vxpose.xlu0.b32.cont [3/16] %v1648, 128
    %1697 = vxpose.xlu0.b32.cont [4/16] %v1649, 128
    %1698 = vxpose.xlu0.b32.cont [5/16] %v1650, 128
    %1699 = vxpose.xlu0.b32.cont [6/16] %v1651, 128
    %1700 = vxpose.xlu0.b32.cont [7/16] %v1652, 128
    %1701 = vxpose.xlu0.b32.cont [8/16] %v1653, 128
    %1702 = vxpose.xlu0.b32.cont [9/16] %v1654, 128
    %1703 = vxpose.xlu0.b32.cont [10/16] %v1655, 128
    %1704 = vxpose.xlu0.b32.cont [11/16] %v1656, 128
    %1705 = vxpose.xlu0.b32.cont [12/16] %v1657, 128
    %1706 = vxpose.xlu0.b32.cont [13/16] %v1658, 128
    %1707 = vxpose.xlu0.b32.cont [14/16] %v1659, 128
    %1708 = vxpose.xlu0.b32.cont [15/16] %v1660, 128
    %1709 = vxpose.xlu0.b32.end [16/16] %v1661, 128
    %v1710 = vpop.trf.xlu0
    %v1711 = vpop.trf.xlu0
    %v1712 = vpop.trf.xlu0
    %v1713 = vpop.trf.xlu0
    %v1714 = vpop.trf.xlu0
    %v1715 = vpop.trf.xlu0
    %v1716 = vpop.trf.xlu0
    %v1717 = vpop.trf.xlu0
    %v1718 = vpop.trf.xlu0
    %v1719 = vpop.trf.xlu0
    %v1720 = vpop.trf.xlu0
    %v1721 = vpop.trf.xlu0
    %v1722 = vpop.trf.xlu0
    %v1723 = vpop.trf.xlu0
    %v1724 = vpop.trf.xlu0
    %v1725 = vpop.trf.xlu0
    %1726 = vmatprep.subr.mxu0 0.0
    %1727 = vmatpush1.msra.mxu0 %v748
    %1728 = vmatprep.subr.mxu0 0.0
    %1729 = vmatpush1.msra.mxu0 %v749
    %1730 = vmatprep.subr.mxu0 0.0
    %1731 = vmatpush1.msra.mxu0 %v750
    %1732 = vmatprep.subr.mxu0 0.0
    %1733 = vmatpush1.msra.mxu0 %v751
    %1734 = vmatprep.subr.mxu0 0.0
    %1735 = vmatpush1.msra.mxu0 %v752
    %1736 = vmatprep.subr.mxu0 0.0
    %1737 = vmatpush1.msra.mxu0 %v753
    %1738 = vmatprep.subr.mxu0 0.0
    %1739 = vmatpush1.msra.mxu0 %v754
    %1740 = vmatprep.subr.mxu0 0.0
    %1741 = vmatpush1.msra.mxu0 %v755
    %1742 = vmatprep.subr.mxu0 0.0
    %1743 = vmatpush1.msra.mxu0 %v756
    %1744 = vmatprep.subr.mxu0 0.0
    %1745 = vmatpush1.msra.mxu0 %v757
    %1746 = vmatprep.subr.mxu0 0.0
    %1747 = vmatpush1.msra.mxu0 %v758
    %1748 = vmatprep.subr.mxu0 0.0
    %1749 = vmatpush1.msra.mxu0 %v759
    %1750 = vmatprep.subr.mxu0 0.0
    %1751 = vmatpush1.msra.mxu0 %v760
    %1752 = vmatprep.subr.mxu0 0.0
    %1753 = vmatpush1.msra.mxu0 %v761
    %1754 = vmatprep.subr.mxu0 0.0
    %1755 = vmatpush1.msra.mxu0 %v762
    %1756 = vmatprep.subr.mxu0 0.0
    %1757 = vmatpush1.msra.mxu0 %v763
    %1758 = vmatprep.subr.mxu0 0.0
    %1759 = vmatpush1.msra.mxu0 %v764
    %1760 = vmatprep.subr.mxu0 0.0
    %1761 = vmatpush1.msra.mxu0 %v765
    %1762 = vmatprep.subr.mxu0 0.0
    %1763 = vmatpush1.msra.mxu0 %v766
    %1764 = vmatprep.subr.mxu0 0.0
    %1765 = vmatpush1.msra.mxu0 %v767
    %1766 = vmatprep.subr.mxu0 0.0
    %1767 = vmatpush1.msra.mxu0 %v768
    %1768 = vmatprep.subr.mxu0 0.0
    %1769 = vmatpush1.msra.mxu0 %v769
    %1770 = vmatprep.subr.mxu0 0.0
    %1771 = vmatpush1.msra.mxu0 %v770
    %1772 = vmatprep.subr.mxu0 0.0
    %1773 = vmatpush1.msra.mxu0 %v771
    %1774 = vmatprep.subr.mxu0 0.0
    %1775 = vmatpush1.msra.mxu0 %v772
    %1776 = vmatprep.subr.mxu0 0.0
    %1777 = vmatpush1.msra.mxu0 %v773
    %1778 = vmatprep.subr.mxu0 0.0
    %1779 = vmatpush1.msra.mxu0 %v774
    %1780 = vmatprep.subr.mxu0 0.0
    %1781 = vmatpush1.msra.mxu0 %v775
    %1782 = vmatprep.subr.mxu0 0.0
    %1783 = vmatpush1.msra.mxu0 %v776
    %1784 = vmatprep.subr.mxu0 0.0
    %1785 = vmatpush1.msra.mxu0 %v777
    %1786 = vmatprep.subr.mxu0 0.0
    %1787 = vmatpush1.msra.mxu0 %v778
    %1788 = vmatprep.subr.mxu0 0.0
    %1789 = vmatpush1.msra.mxu0 %v779
    %1790 = vmatprep.mubr.f32.mxu0 %v1710
    %1791 = vmatmul.mubr.f32.gmra.mrb[0].mxu0 %v1678
    %v1792 = vpop.f32.mrb[0].mxu0
    %v1793 = vadd.f32 0.0, %v1792
    %v1794 = vpop.f32.mrb[0].mxu0
    %1795 = vdwg.mxu0
    %v1796 = vld [vmem:[%s5] sm:$0xff]
    %v1797 = vld [vmem:[%s5 + $0x8] sm:$0xff]
    %v1798 = vld [vmem:[%s5 + $0x10] sm:$0xff]
    %v1799 = vld [vmem:[%s5 + $0x18] sm:$0xff]
    %v1801 = vsel %vm426, %v1793, 0
    %1803 = vmatprep.subr.mxu0 0.0
    %1804 = vmatpush1.msra.mxu0 %v1796
    %1805 = vmatprep.subr.mxu0 0.0
    %1806 = vmatpush1.msra.mxu0 %v1797
    %1807 = vmatprep.subr.mxu0 0.0
    %1808 = vmatpush1.msra.mxu0 %v1798
    %1809 = vmatprep.subr.mxu0 0.0
    %1810 = vmatpush1.msra.mxu0 %v1799
    %1811 = vmatprep.subr.mxu0 0.0
    %1812 = vmatpush1.msra.mxu0 0.0
    %1813 = vmatprep.subr.mxu0 0.0
    %1814 = vmatpush1.msra.mxu0 0.0
    %1815 = vmatprep.subr.mxu0 0.0
    %1816 = vmatpush1.msra.mxu0 0.0
    %1817 = vmatprep.subr.mxu0 0.0
    %1818 = vmatpush1.msra.mxu0 0.0
    %1819 = vmatprep.subr.mxu0 0.0
    %1820 = vmatpush1.msra.mxu0 0.0
    %1821 = vmatprep.subr.mxu0 0.0
    %1822 = vmatpush1.msra.mxu0 0.0
    %1823 = vmatprep.subr.mxu0 0.0
    %1824 = vmatpush1.msra.mxu0 0.0
    %1825 = vmatprep.subr.mxu0 0.0
    %1826 = vmatpush1.msra.mxu0 0.0
    %1827 = vmatprep.subr.mxu0 0.0
    %1828 = vmatpush1.msra.mxu0 0.0
    %1829 = vmatprep.subr.mxu0 0.0
    %1830 = vmatpush1.msra.mxu0 0.0
    %1831 = vmatprep.subr.mxu0 0.0
    %1832 = vmatpush1.msra.mxu0 0.0
    %1833 = vmatprep.subr.mxu0 0.0
    %1834 = vmatpush1.msra.mxu0 0.0
    %1835 = vmatprep.subr.mxu0 0.0
    %1836 = vmatpush1.msra.mxu0 0.0
    %1837 = vmatprep.subr.mxu0 0.0
    %1838 = vmatpush1.msra.mxu0 0.0
    %1839 = vmatprep.subr.mxu0 0.0
    %1840 = vmatpush1.msra.mxu0 0.0
    %1841 = vmatprep.subr.mxu0 0.0
    %1842 = vmatpush1.msra.mxu0 0.0
    %1843 = vmatprep.subr.mxu0 0.0
    %1844 = vmatpush1.msra.mxu0 0.0
    %1845 = vmatprep.subr.mxu0 0.0
    %1846 = vmatpush1.msra.mxu0 0.0
    %1847 = vmatprep.subr.mxu0 0.0
    %1848 = vmatpush1.msra.mxu0 0.0
    %1849 = vmatprep.subr.mxu0 0.0
    %1850 = vmatpush1.msra.mxu0 0.0
    %1851 = vmatprep.subr.mxu0 0.0
    %1852 = vmatpush1.msra.mxu0 0.0
    %1853 = vmatprep.subr.mxu0 0.0
    %1854 = vmatpush1.msra.mxu0 0.0
    %1855 = vmatprep.subr.mxu0 0.0
    %1856 = vmatpush1.msra.mxu0 0.0
    %1857 = vmatprep.subr.mxu0 0.0
    %1858 = vmatpush1.msra.mxu0 0.0
    %1859 = vmatprep.subr.mxu0 0.0
    %1860 = vmatpush1.msra.mxu0 0.0
    %1861 = vmatprep.subr.mxu0 0.0
    %1862 = vmatpush1.msra.mxu0 0.0
    %1863 = vmatprep.subr.mxu0 0.0
    %1864 = vmatpush1.msra.mxu0 0.0
    %1865 = vmatprep.subr.mxu0 0.0
    %1866 = vmatpush1.msra.mxu0 0.0
    %1867 = vmatprep.mubr.f32.mxu0 0.0
    %1868 = vmatmul.mubr.f32.gmra.mrb[0].mxu0 %v1801
    %v1869 = vpop.f32.mrb[0].mxu0
    %v1870 = vadd.f32 0.0, %v1869
    %v1871 = vpop.f32.mrb[0].mxu0
    %1872 = vdwg.mxu0
    %1874 = vrot.lane.b32.xlu0 %v1870, 119
    %v1875 = vpop.permute.xlu0 %1874
    %v1876 = vsel %vm426, %v1875, 0
    %v1879 = vsel %vm426, %v1105, 0
    %v1882 = vsel %vm426, %v1106, 0
    %v1885 = vsel %vm426, %v1107, 0
    %v1888 = vsel %vm426, %v1108, 0
    %v1891 = vsel %vm426, %v1109, 0
    %v1894 = vsel %vm426, %v1110, 0
    %v1897 = vsel %vm426, %v1111, 0
    %v1900 = vsel %vm426, %v1112, 0
    %v1903 = vsel %vm426, %v1113, 0
    %v1906 = vsel %vm426, %v1114, 0
    %v1909 = vsel %vm426, %v1115, 0
    %v1912 = vsel %vm426, %v1116, 0
    %v1915 = vsel %vm426, %v1117, 0
    %v1918 = vsel %vm426, %v1118, 0
    %v1921 = vsel %vm426, %v1119, 0
    %v1924 = vsel %vm426, %v1120, 0
    %v1927 = vsel %vm426, %v1121, 0
    %v1930 = vsel %vm426, %v1122, 0
    %v1933 = vsel %vm426, %v1123, 0
    %v1936 = vsel %vm426, %v1124, 0
    %v1939 = vsel %vm426, %v1125, 0
    %v1942 = vsel %vm426, %v1126, 0
    %v1945 = vsel %vm426, %v1127, 0
    %v1948 = vsel %vm426, %v1128, 0
    %v1951 = vsel %vm426, %v1129, 0
    %v1954 = vsel %vm426, %v1130, 0
    %v1957 = vsel %vm426, %v1131, 0
    %v1960 = vsel %vm426, %v1132, 0
    %v1963 = vsel %vm426, %v1133, 0
    %v1966 = vsel %vm426, %v1134, 0
    %v1969 = vsel %vm426, %v1135, 0
    %v1972 = vsel %vm426, %v1136, 0
    %1974 = vmatprep.subr.mxu0 0.0
    %1975 = vmatpush1.xpose.msra.mxu0 %v1879
    %1976 = vmatprep.subr.mxu0 0.0
    %1977 = vmatpush1.xpose.msra.mxu0 %v1882
    %1978 = vmatprep.subr.mxu0 0.0
    %1979 = vmatpush1.xpose.msra.mxu0 %v1885
    %1980 = vmatprep.subr.mxu0 0.0
    %1981 = vmatpush1.xpose.msra.mxu0 %v1888
    %1982 = vmatprep.subr.mxu0 0.0
    %1983 = vmatpush1.xpose.msra.mxu0 %v1891
    %1984 = vmatprep.subr.mxu0 0.0
    %1985 = vmatpush1.xpose.msra.mxu0 %v1894
    %1986 = vmatprep.subr.mxu0 0.0
    %1987 = vmatpush1.xpose.msra.mxu0 %v1897
    %1988 = vmatprep.subr.mxu0 0.0
    %1989 = vmatpush1.xpose.msra.mxu0 %v1900
    %1990 = vmatprep.subr.mxu0 0.0
    %1991 = vmatpush1.xpose.msra.mxu0 %v1903
    %1992 = vmatprep.subr.mxu0 0.0
    %1993 = vmatpush1.xpose.msra.mxu0 %v1906
    %1994 = vmatprep.subr.mxu0 0.0
    %1995 = vmatpush1.xpose.msra.mxu0 %v1909
    %1996 = vmatprep.subr.mxu0 0.0
    %1997 = vmatpush1.xpose.msra.mxu0 %v1912
    %1998 = vmatprep.subr.mxu0 0.0
    %1999 = vmatpush1.xpose.msra.mxu0 %v1915
    %2000 = vmatprep.subr.mxu0 0.0
    %2001 = vmatpush1.xpose.msra.mxu0 %v1918
    %2002 = vmatprep.subr.mxu0 0.0
    %2003 = vmatpush1.xpose.msra.mxu0 %v1921
    %2004 = vmatprep.subr.mxu0 0.0
    %2005 = vmatpush1.xpose.msra.mxu0 %v1924
    %2006 = vmatprep.subr.mxu0 0.0
    %2007 = vmatpush1.xpose.msra.mxu0 %v1927
    %2008 = vmatprep.subr.mxu0 0.0
    %2009 = vmatpush1.xpose.msra.mxu0 %v1930
    %2010 = vmatprep.subr.mxu0 0.0
    %2011 = vmatpush1.xpose.msra.mxu0 %v1933
    %2012 = vmatprep.subr.mxu0 0.0
    %2013 = vmatpush1.xpose.msra.mxu0 %v1936
    %2014 = vmatprep.subr.mxu0 0.0
    %2015 = vmatpush1.xpose.msra.mxu0 %v1939
    %2016 = vmatprep.subr.mxu0 0.0
    %2017 = vmatpush1.xpose.msra.mxu0 %v1942
    %2018 = vmatprep.subr.mxu0 0.0
    %2019 = vmatpush1.xpose.msra.mxu0 %v1945
    %2020 = vmatprep.subr.mxu0 0.0
    %2021 = vmatpush1.xpose.msra.mxu0 %v1948
    %2022 = vmatprep.subr.mxu0 0.0
    %2023 = vmatpush1.xpose.msra.mxu0 %v1951
    %2024 = vmatprep.subr.mxu0 0.0
    %2025 = vmatpush1.xpose.msra.mxu0 %v1954
    %2026 = vmatprep.subr.mxu0 0.0
    %2027 = vmatpush1.xpose.msra.mxu0 %v1957
    %2028 = vmatprep.subr.mxu0 0.0
    %2029 = vmatpush1.xpose.msra.mxu0 %v1960
    %2030 = vmatprep.subr.mxu0 0.0
    %2031 = vmatpush1.xpose.msra.mxu0 %v1963
    %2032 = vmatprep.subr.mxu0 0.0
    %2033 = vmatpush1.xpose.msra.mxu0 %v1966
    %2034 = vmatprep.subr.mxu0 0.0
    %2035 = vmatpush1.xpose.msra.mxu0 %v1969
    %2036 = vmatprep.subr.mxu0 0.0
    %2037 = vmatpush1.xpose.msra.mxu0 %v1972
    %2038 = vmatprep.mubr.f32.mxu0 0.0
    %2039 = vmatmul.mubr.f32.gmra.mrb[0].mxu0 %v1876
    %v2040 = vpop.f32.mrb[0].mxu0
    %v2041 = vadd.f32 0.0, %v2040
    %v2042 = vpop.f32.mrb[0].mxu0
    %v2043 = vadd.f32 0.0, %v2042
    %2044 = vdwg.mxu0
    %v2045 = vxor.u32 %v1870, 2147483648
    %v2046 = vmul.f32 %v2045, 1.442695
    %v2047 = vpow.pop %v2046
    %v2048 = vadd.f32 %v2047, 1.0
    %v2049 = vrcp.pop %v2048
    %v2050 = vmul.f32 1.0, %v2049
    %v2051 = vsel %vm1558, %v2050, -inf
    %2052 = vmax.xlane.f32.xlu0 %v2051
    %v2053 = vpop.xlane.xlu0 %2052
    %v2054 = vlaneseq
    %v2055 = vand.u32 %v2054, 127
    %vm2056 = vcmp.ge.f32.partialorder %v2050, %v2053
    %v2057 = vsel %vm2056, %v2055, 8
    %v2058 = vsel %vm1558, %v2057, 2147483647
    %v2059 = vand.u32 %v2058, 65535
    %v2060 = vshra.s32 %v2058, 16
    %v2061 = vcvt.s32.f32 %v2059
    %v2062 = vcvt.s32.f32 %v2060
    %2063 = vmin.xlane.f32.xlu0 %v2062
    %v2064 = vpop.xlane.xlu0 %2063
    %vm2065 = vcmp.eq.f32.partialorder %v2062, %v2064
    %v2066 = vsel %vm2065, %v2061, inf
    %2067 = vmin.xlane.f32.xlu0 %v2066
    %v2068 = vpop.xlane.xlu0 %2067
    %v2069 = vcvt.f32.s32 %v2068
    %v2070 = vcvt.f32.s32 %v2064
    %v2071 = vshll.u32 %v2070, 16
    %v2072 = vadd.s32 %v2071, %v2069
    %vm2073 = vcmp.gt.f32.partialorder %v2053, 0.005
    %v2074 = vmul.f32 %v2053, %v2050
    %v2075 = vrsqrt.pop %v2074
    %v2076 = vmul.f32 %v2074, %v2075
    %vm2077 = vcmp.eq.f32.partialorder %v2074, inf
    %v2078 = vsel %vm2077, %v2074, %v2076
    %vm2079 = vcmp.eq.f32.partialorder %v2074, 0.0
    %v2080 = vand.u32 %v2074, 2147483648
    %v2081 = vsel %vm2079, %v2080, %v2078
    %v2082 = vxor.u32 %v2041, 2147483648
    %v2083 = vxor.u32 %v2043, 2147483648
    %v2084 = vmul.f32 %v2082, 1.442695
    %v2085 = vpow.pop %v2084
    %v2086 = vmul.f32 %v2083, 1.442695
    %v2087 = vpow.pop %v2086
    %v2088 = vadd.f32 %v2085, 1.0
    %v2089 = vadd.f32 %v2087, 1.0
    %v2090 = vrcp.pop %v2088
    %v2091 = vmul.f32 1.0, %v2090
    %v2092 = vrcp.pop %v2089
    %v2093 = vmul.f32 1.0, %v2092
    %vm2094 = vcmp.gt.f32.partialorder %v2091, 0.45
    %vm2095 = vcmp.gt.f32.partialorder %v2093, 0.45
    %v2096 = vsel %vm2094, 1, 0
    %v2097 = vsel %vm2095, 1, 0
    %v2098 = vcvt.s32.f32 %v2096
    %v2099 = vcvt.s32.f32 %v2097
    %v2100 = vmul.f32 %v2091, %v2098
    %v2101 = vmul.f32 %v2093, %v2099
    %v2102 = vadd.f32 %v2100, %v2101
    %2103 = vadd.xlane.f32.xlu0 %v2102
    %v2104 = vpop.xlane.xlu0 %2103
    %v2105 = vadd.f32 %v2098, %v2099
    %2106 = vadd.xlane.f32.xlu0 %v2105
    %v2107 = vpop.xlane.xlu0 %2106
    %v2108 = vadd.f32 %v2107, 1e-06
    %v2109 = vmul.f32 %v2081, %v2104
    %v2110 = vrcp.pop %v2108
    %v2111 = vmul.f32 %v2109, %v2110
    %v2112 = vsel %vm2073, %v2111, 0.0
    %vm2113 = vcmp.eq.s32.totalorder %v2055, 0
    %vm2114 = vcmp.eq.s32.totalorder %v2055, 1
    %v2115 = vcvt.s32.f32 %v2072
    %vm2116 = vcmp.eq.s32.totalorder %v2055, 2
    %v2117 = vsel %vm2073, 1, 0
    %v2118 = vcvt.s32.f32 %v2117
    %v2119 = vsel %vm2116, %v2118, 0.0
    %v2120 = vsel %vm2114, %v2115, %v2119
    %2122 = vset.pattern.permute.xlu0 8
    %2123 = vperm.xlu0 %2122, %v2112
    %v2124 = vpop.permute.xlu0 %2123
    %v2126 = vsel %vm2113, %v2124, %v2120
    %2127 = vst [vmem:[#allocation2] sm:$0xff] %v2126
    %v2128 = vld [vmem:[%s6] sm:$0xff]
    %v2129 = vld [vmem:[%s6 + $0x8] sm:$0xff]
    %v2130 = vld [vmem:[%s6 + $0x10] sm:$0xff]
    %v2131 = vld [vmem:[%s6 + $0x18] sm:$0xff]
    %v2132 = vld [vmem:[%s6 + $0x20] sm:$0xff]
    %v2133 = vld [vmem:[%s6 + $0x28] sm:$0xff]
    %v2134 = vld [vmem:[%s6 + $0x30] sm:$0xff]
    %v2135 = vld [vmem:[%s6 + $0x38] sm:$0xff]
    %v2136 = vld [vmem:[%s6 + $0x40] sm:$0xff]
    %v2137 = vld [vmem:[%s6 + $0x48] sm:$0xff]
    %v2138 = vld [vmem:[%s6 + $0x50] sm:$0xff]
    %v2139 = vld [vmem:[%s6 + $0x58] sm:$0xff]
    %v2140 = vld [vmem:[%s6 + $0x60] sm:$0xff]
    %v2141 = vld [vmem:[%s6 + $0x68] sm:$0xff]
    %v2142 = vld [vmem:[%s6 + $0x70] sm:$0xff]
    %v2143 = vld [vmem:[%s6 + $0x78] sm:$0xff]
    %v2144 = vld [vmem:[%s6 + $0x80] sm:$0xff]
    %v2145 = vld [vmem:[%s6 + $0x88] sm:$0xff]
    %v2146 = vld [vmem:[%s6 + $0x90] sm:$0xff]
    %v2147 = vld [vmem:[%s6 + $0x98] sm:$0xff]
    %v2148 = vld [vmem:[%s6 + $0xa0] sm:$0xff]
    %v2149 = vld [vmem:[%s6 + $0xa8] sm:$0xff]
    %v2150 = vld [vmem:[%s6 + $0xb0] sm:$0xff]
    %v2151 = vld [vmem:[%s6 + $0xb8] sm:$0xff]
    %v2152 = vld [vmem:[%s6 + $0xc0] sm:$0xff]
    %v2153 = vld [vmem:[%s6 + $0xc8] sm:$0xff]
    %v2154 = vld [vmem:[%s6 + $0xd0] sm:$0xff]
    %v2155 = vld [vmem:[%s6 + $0xd8] sm:$0xff]
    %v2156 = vld [vmem:[%s6 + $0xe0] sm:$0xff]
    %v2157 = vld [vmem:[%s6 + $0xe8] sm:$0xff]
    %v2158 = vld [vmem:[%s6 + $0xf0] sm:$0xff]
    %v2159 = vld [vmem:[%s6 + $0xf8] sm:$0xff]
    %v2160 = vld [vmem:[%s6 + $0x100] sm:$0xff]
    %v2161 = vld [vmem:[%s6 + $0x108] sm:$0xff]
    %v2162 = vld [vmem:[%s6 + $0x110] sm:$0xff]
    %v2163 = vld [vmem:[%s6 + $0x118] sm:$0xff]
    %v2164 = vld [vmem:[%s6 + $0x120] sm:$0xff]
    %v2165 = vld [vmem:[%s6 + $0x128] sm:$0xff]
    %v2166 = vld [vmem:[%s6 + $0x130] sm:$0xff]
    %v2167 = vld [vmem:[%s6 + $0x138] sm:$0xff]
    %v2168 = vld [vmem:[%s6 + $0x140] sm:$0xff]
    %v2169 = vld [vmem:[%s6 + $0x148] sm:$0xff]
    %v2170 = vld [vmem:[%s6 + $0x150] sm:$0xff]
    %v2171 = vld [vmem:[%s6 + $0x158] sm:$0xff]
    %v2172 = vld [vmem:[%s6 + $0x160] sm:$0xff]
    %v2173 = vld [vmem:[%s6 + $0x168] sm:$0xff]
    %v2174 = vld [vmem:[%s6 + $0x170] sm:$0xff]
    %v2175 = vld [vmem:[%s6 + $0x178] sm:$0xff]
    %v2176 = vld [vmem:[%s6 + $0x180] sm:$0xff]
    %v2177 = vld [vmem:[%s6 + $0x188] sm:$0xff]
    %v2178 = vld [vmem:[%s6 + $0x190] sm:$0xff]
    %v2179 = vld [vmem:[%s6 + $0x198] sm:$0xff]
    %v2180 = vld [vmem:[%s6 + $0x1a0] sm:$0xff]
    %v2181 = vld [vmem:[%s6 + $0x1a8] sm:$0xff]
    %v2182 = vld [vmem:[%s6 + $0x1b0] sm:$0xff]
    %v2183 = vld [vmem:[%s6 + $0x1b8] sm:$0xff]
    %v2184 = vld [vmem:[%s6 + $0x1c0] sm:$0xff]
    %v2185 = vld [vmem:[%s6 + $0x1c8] sm:$0xff]
    %v2186 = vld [vmem:[%s6 + $0x1d0] sm:$0xff]
    %v2187 = vld [vmem:[%s6 + $0x1d8] sm:$0xff]
    %v2188 = vld [vmem:[%s6 + $0x1e0] sm:$0xff]
    %v2189 = vld [vmem:[%s6 + $0x1e8] sm:$0xff]
    %v2190 = vld [vmem:[%s6 + $0x1f0] sm:$0xff]
    %v2191 = vld [vmem:[%s6 + $0x1f8] sm:$0xff]
    %v2192 = vld [vmem:[%s6 + $0x200] sm:$0xff]
    %v2193 = vld [vmem:[%s6 + $0x208] sm:$0xff]
    %v2194 = vld [vmem:[%s6 + $0x210] sm:$0xff]
    %v2195 = vld [vmem:[%s6 + $0x218] sm:$0xff]
    %v2196 = vld [vmem:[%s6 + $0x220] sm:$0xff]
    %v2197 = vld [vmem:[%s6 + $0x228] sm:$0xff]
    %v2198 = vld [vmem:[%s6 + $0x230] sm:$0xff]
    %v2199 = vld [vmem:[%s6 + $0x238] sm:$0xff]
    %v2200 = vld [vmem:[%s6 + $0x240] sm:$0xff]
    %v2201 = vld [vmem:[%s6 + $0x248] sm:$0xff]
    %v2202 = vld [vmem:[%s6 + $0x250] sm:$0xff]
    %v2203 = vld [vmem:[%s6 + $0x258] sm:$0xff]
    %v2204 = vld [vmem:[%s6 + $0x260] sm:$0xff]
    %v2205 = vld [vmem:[%s6 + $0x268] sm:$0xff]
    %v2206 = vld [vmem:[%s6 + $0x270] sm:$0xff]
    %v2207 = vld [vmem:[%s6 + $0x278] sm:$0xff]
    %v2208 = vld [vmem:[%s6 + $0x280] sm:$0xff]
    %v2209 = vld [vmem:[%s6 + $0x288] sm:$0xff]
    %v2210 = vld [vmem:[%s6 + $0x290] sm:$0xff]
    %v2211 = vld [vmem:[%s6 + $0x298] sm:$0xff]
    %v2212 = vld [vmem:[%s6 + $0x2a0] sm:$0xff]
    %v2213 = vld [vmem:[%s6 + $0x2a8] sm:$0xff]
    %v2214 = vld [vmem:[%s6 + $0x2b0] sm:$0xff]
    %v2215 = vld [vmem:[%s6 + $0x2b8] sm:$0xff]
    %v2216 = vld [vmem:[%s6 + $0x2c0] sm:$0xff]
    %v2217 = vld [vmem:[%s6 + $0x2c8] sm:$0xff]
    %v2218 = vld [vmem:[%s6 + $0x2d0] sm:$0xff]
    %v2219 = vld [vmem:[%s6 + $0x2d8] sm:$0xff]
    %v2220 = vld [vmem:[%s6 + $0x2e0] sm:$0xff]
    %v2221 = vld [vmem:[%s6 + $0x2e8] sm:$0xff]
    %v2222 = vld [vmem:[%s6 + $0x2f0] sm:$0xff]
    %v2223 = vld [vmem:[%s6 + $0x2f8] sm:$0xff]
    %v2224 = vld [vmem:[%s6 + $0x300] sm:$0xff]
    %v2225 = vld [vmem:[%s6 + $0x308] sm:$0xff]
    %v2226 = vld [vmem:[%s6 + $0x310] sm:$0xff]
    %v2227 = vld [vmem:[%s6 + $0x318] sm:$0xff]
    %v2228 = vld [vmem:[%s6 + $0x320] sm:$0xff]
    %v2229 = vld [vmem:[%s6 + $0x328] sm:$0xff]
    %v2230 = vld [vmem:[%s6 + $0x330] sm:$0xff]
    %v2231 = vld [vmem:[%s6 + $0x338] sm:$0xff]
    %v2232 = vld [vmem:[%s6 + $0x340] sm:$0xff]
    %v2233 = vld [vmem:[%s6 + $0x348] sm:$0xff]
    %v2234 = vld [vmem:[%s6 + $0x350] sm:$0xff]
    %v2235 = vld [vmem:[%s6 + $0x358] sm:$0xff]
    %v2236 = vld [vmem:[%s6 + $0x360] sm:$0xff]
    %v2237 = vld [vmem:[%s6 + $0x368] sm:$0xff]
    %v2238 = vld [vmem:[%s6 + $0x370] sm:$0xff]
    %v2239 = vld [vmem:[%s6 + $0x378] sm:$0xff]
    %v2240 = vld [vmem:[%s6 + $0x380] sm:$0xff]
    %v2241 = vld [vmem:[%s6 + $0x388] sm:$0xff]
    %v2242 = vld [vmem:[%s6 + $0x390] sm:$0xff]
    %v2243 = vld [vmem:[%s6 + $0x398] sm:$0xff]
    %v2244 = vld [vmem:[%s6 + $0x3a0] sm:$0xff]
    %v2245 = vld [vmem:[%s6 + $0x3a8] sm:$0xff]
    %v2246 = vld [vmem:[%s6 + $0x3b0] sm:$0xff]
    %v2247 = vld [vmem:[%s6 + $0x3b8] sm:$0xff]
    %v2248 = vld [vmem:[%s6 + $0x3c0] sm:$0xff]
    %v2249 = vld [vmem:[%s6 + $0x3c8] sm:$0xff]
    %v2250 = vld [vmem:[%s6 + $0x3d0] sm:$0xff]
    %v2251 = vld [vmem:[%s6 + $0x3d8] sm:$0xff]
    %v2252 = vld [vmem:[%s6 + $0x3e0] sm:$0xff]
    %v2253 = vld [vmem:[%s6 + $0x3e8] sm:$0xff]
    %v2254 = vld [vmem:[%s6 + $0x3f0] sm:$0xff]
    %v2255 = vld [vmem:[%s6 + $0x3f8] sm:$0xff]
    %v2256 = vld [vmem:[%s6 + $0x400] sm:$0xff]
    %v2257 = vld [vmem:[%s6 + $0x408] sm:$0xff]
    %v2258 = vld [vmem:[%s6 + $0x410] sm:$0xff]
    %v2259 = vld [vmem:[%s6 + $0x418] sm:$0xff]
    %v2260 = vld [vmem:[%s6 + $0x420] sm:$0xff]
    %v2261 = vld [vmem:[%s6 + $0x428] sm:$0xff]
    %v2262 = vld [vmem:[%s6 + $0x430] sm:$0xff]
    %v2263 = vld [vmem:[%s6 + $0x438] sm:$0xff]
    %v2264 = vld [vmem:[%s6 + $0x440] sm:$0xff]
    %v2265 = vld [vmem:[%s6 + $0x448] sm:$0xff]
    %v2266 = vld [vmem:[%s6 + $0x450] sm:$0xff]
    %v2267 = vld [vmem:[%s6 + $0x458] sm:$0xff]
    %v2268 = vld [vmem:[%s6 + $0x460] sm:$0xff]
    %v2269 = vld [vmem:[%s6 + $0x468] sm:$0xff]
    %v2270 = vld [vmem:[%s6 + $0x470] sm:$0xff]
    %v2271 = vld [vmem:[%s6 + $0x478] sm:$0xff]
    %v2272 = vld [vmem:[%s6 + $0x480] sm:$0xff]
    %v2273 = vld [vmem:[%s6 + $0x488] sm:$0xff]
    %v2274 = vld [vmem:[%s6 + $0x490] sm:$0xff]
    %v2275 = vld [vmem:[%s6 + $0x498] sm:$0xff]
    %v2276 = vld [vmem:[%s6 + $0x4a0] sm:$0xff]
    %v2277 = vld [vmem:[%s6 + $0x4a8] sm:$0xff]
    %v2278 = vld [vmem:[%s6 + $0x4b0] sm:$0xff]
    %v2279 = vld [vmem:[%s6 + $0x4b8] sm:$0xff]
    %v2280 = vld [vmem:[%s6 + $0x4c0] sm:$0xff]
    %v2281 = vld [vmem:[%s6 + $0x4c8] sm:$0xff]
    %v2282 = vld [vmem:[%s6 + $0x4d0] sm:$0xff]
    %v2283 = vld [vmem:[%s6 + $0x4d8] sm:$0xff]
    %v2284 = vld [vmem:[%s6 + $0x4e0] sm:$0xff]
    %v2285 = vld [vmem:[%s6 + $0x4e8] sm:$0xff]
    %v2286 = vld [vmem:[%s6 + $0x4f0] sm:$0xff]
    %v2287 = vld [vmem:[%s6 + $0x4f8] sm:$0xff]
    %v2288 = vld [vmem:[%s6 + $0x500] sm:$0xff]
    %v2289 = vld [vmem:[%s6 + $0x508] sm:$0xff]
    %v2290 = vld [vmem:[%s6 + $0x510] sm:$0xff]
    %v2291 = vld [vmem:[%s6 + $0x518] sm:$0xff]
    %v2292 = vld [vmem:[%s6 + $0x520] sm:$0xff]
    %v2293 = vld [vmem:[%s6 + $0x528] sm:$0xff]
    %v2294 = vld [vmem:[%s6 + $0x530] sm:$0xff]
    %v2295 = vld [vmem:[%s6 + $0x538] sm:$0xff]
    %v2296 = vld [vmem:[%s6 + $0x540] sm:$0xff]
    %v2297 = vld [vmem:[%s6 + $0x548] sm:$0xff]
    %v2298 = vld [vmem:[%s6 + $0x550] sm:$0xff]
    %v2299 = vld [vmem:[%s6 + $0x558] sm:$0xff]
    %v2300 = vld [vmem:[%s6 + $0x560] sm:$0xff]
    %v2301 = vld [vmem:[%s6 + $0x568] sm:$0xff]
    %v2302 = vld [vmem:[%s6 + $0x570] sm:$0xff]
    %v2303 = vld [vmem:[%s6 + $0x578] sm:$0xff]
    %v2304 = vld [vmem:[%s6 + $0x580] sm:$0xff]
    %v2305 = vld [vmem:[%s6 + $0x588] sm:$0xff]
    %v2306 = vld [vmem:[%s6 + $0x590] sm:$0xff]
    %v2307 = vld [vmem:[%s6 + $0x598] sm:$0xff]
    %v2308 = vld [vmem:[%s6 + $0x5a0] sm:$0xff]
    %v2309 = vld [vmem:[%s6 + $0x5a8] sm:$0xff]
    %v2310 = vld [vmem:[%s6 + $0x5b0] sm:$0xff]
    %v2311 = vld [vmem:[%s6 + $0x5b8] sm:$0xff]
    %v2312 = vld [vmem:[%s6 + $0x5c0] sm:$0xff]
    %v2313 = vld [vmem:[%s6 + $0x5c8] sm:$0xff]
    %v2314 = vld [vmem:[%s6 + $0x5d0] sm:$0xff]
    %v2315 = vld [vmem:[%s6 + $0x5d8] sm:$0xff]
    %v2316 = vld [vmem:[%s6 + $0x5e0] sm:$0xff]
    %v2317 = vld [vmem:[%s6 + $0x5e8] sm:$0xff]
    %v2318 = vld [vmem:[%s6 + $0x5f0] sm:$0xff]
    %v2319 = vld [vmem:[%s6 + $0x5f8] sm:$0xff]
    %v2320 = vld [vmem:[%s6 + $0x600] sm:$0xff]
    %v2321 = vld [vmem:[%s6 + $0x608] sm:$0xff]
    %v2322 = vld [vmem:[%s6 + $0x610] sm:$0xff]
    %v2323 = vld [vmem:[%s6 + $0x618] sm:$0xff]
    %v2324 = vld [vmem:[%s6 + $0x620] sm:$0xff]
    %v2325 = vld [vmem:[%s6 + $0x628] sm:$0xff]
    %v2326 = vld [vmem:[%s6 + $0x630] sm:$0xff]
    %v2327 = vld [vmem:[%s6 + $0x638] sm:$0xff]
    %v2328 = vld [vmem:[%s6 + $0x640] sm:$0xff]
    %v2329 = vld [vmem:[%s6 + $0x648] sm:$0xff]
    %v2330 = vld [vmem:[%s6 + $0x650] sm:$0xff]
    %v2331 = vld [vmem:[%s6 + $0x658] sm:$0xff]
    %v2332 = vld [vmem:[%s6 + $0x660] sm:$0xff]
    %v2333 = vld [vmem:[%s6 + $0x668] sm:$0xff]
    %v2334 = vld [vmem:[%s6 + $0x670] sm:$0xff]
    %v2335 = vld [vmem:[%s6 + $0x678] sm:$0xff]
    %v2336 = vld [vmem:[%s6 + $0x680] sm:$0xff]
    %v2337 = vld [vmem:[%s6 + $0x688] sm:$0xff]
    %v2338 = vld [vmem:[%s6 + $0x690] sm:$0xff]
    %v2339 = vld [vmem:[%s6 + $0x698] sm:$0xff]
    %v2340 = vld [vmem:[%s6 + $0x6a0] sm:$0xff]
    %v2341 = vld [vmem:[%s6 + $0x6a8] sm:$0xff]
    %v2342 = vld [vmem:[%s6 + $0x6b0] sm:$0xff]
    %v2343 = vld [vmem:[%s6 + $0x6b8] sm:$0xff]
    %v2344 = vld [vmem:[%s6 + $0x6c0] sm:$0xff]
    %v2345 = vld [vmem:[%s6 + $0x6c8] sm:$0xff]
    %v2346 = vld [vmem:[%s6 + $0x6d0] sm:$0xff]
    %v2347 = vld [vmem:[%s6 + $0x6d8] sm:$0xff]
    %v2348 = vld [vmem:[%s6 + $0x6e0] sm:$0xff]
    %v2349 = vld [vmem:[%s6 + $0x6e8] sm:$0xff]
    %v2350 = vld [vmem:[%s6 + $0x6f0] sm:$0xff]
    %v2351 = vld [vmem:[%s6 + $0x6f8] sm:$0xff]
    %v2352 = vld [vmem:[%s6 + $0x700] sm:$0xff]
    %v2353 = vld [vmem:[%s6 + $0x708] sm:$0xff]
    %v2354 = vld [vmem:[%s6 + $0x710] sm:$0xff]
    %v2355 = vld [vmem:[%s6 + $0x718] sm:$0xff]
    %v2356 = vld [vmem:[%s6 + $0x720] sm:$0xff]
    %v2357 = vld [vmem:[%s6 + $0x728] sm:$0xff]
    %v2358 = vld [vmem:[%s6 + $0x730] sm:$0xff]
    %v2359 = vld [vmem:[%s6 + $0x738] sm:$0xff]
    %v2360 = vld [vmem:[%s6 + $0x740] sm:$0xff]
    %v2361 = vld [vmem:[%s6 + $0x748] sm:$0xff]
    %v2362 = vld [vmem:[%s6 + $0x750] sm:$0xff]
    %v2363 = vld [vmem:[%s6 + $0x758] sm:$0xff]
    %v2364 = vld [vmem:[%s6 + $0x760] sm:$0xff]
    %v2365 = vld [vmem:[%s6 + $0x768] sm:$0xff]
    %v2366 = vld [vmem:[%s6 + $0x770] sm:$0xff]
    %v2367 = vld [vmem:[%s6 + $0x778] sm:$0xff]
    %v2368 = vld [vmem:[%s6 + $0x780] sm:$0xff]
    %v2369 = vld [vmem:[%s6 + $0x788] sm:$0xff]
    %v2370 = vld [vmem:[%s6 + $0x790] sm:$0xff]
    %v2371 = vld [vmem:[%s6 + $0x798] sm:$0xff]
    %v2372 = vld [vmem:[%s6 + $0x7a0] sm:$0xff]
    %v2373 = vld [vmem:[%s6 + $0x7a8] sm:$0xff]
    %v2374 = vld [vmem:[%s6 + $0x7b0] sm:$0xff]
    %v2375 = vld [vmem:[%s6 + $0x7b8] sm:$0xff]
    %v2376 = vld [vmem:[%s6 + $0x7c0] sm:$0xff]
    %v2377 = vld [vmem:[%s6 + $0x7c8] sm:$0xff]
    %v2378 = vld [vmem:[%s6 + $0x7d0] sm:$0xff]
    %v2379 = vld [vmem:[%s6 + $0x7d8] sm:$0xff]
    %v2380 = vld [vmem:[%s6 + $0x7e0] sm:$0xff]
    %v2381 = vld [vmem:[%s6 + $0x7e8] sm:$0xff]
    %v2382 = vld [vmem:[%s6 + $0x7f0] sm:$0xff]
    %v2383 = vld [vmem:[%s6 + $0x7f8] sm:$0xff]
    %v2384 = vld [vmem:[%s6 + $0x800] sm:$0xff]
    %v2385 = vld [vmem:[%s6 + $0x808] sm:$0xff]
    %v2386 = vld [vmem:[%s6 + $0x810] sm:$0xff]
    %v2387 = vld [vmem:[%s6 + $0x818] sm:$0xff]
    %v2388 = vld [vmem:[%s6 + $0x820] sm:$0xff]
    %v2389 = vld [vmem:[%s6 + $0x828] sm:$0xff]
    %v2390 = vld [vmem:[%s6 + $0x830] sm:$0xff]
    %v2391 = vld [vmem:[%s6 + $0x838] sm:$0xff]
    %v2392 = vld [vmem:[%s6 + $0x840] sm:$0xff]
    %v2393 = vld [vmem:[%s6 + $0x848] sm:$0xff]
    %v2394 = vld [vmem:[%s6 + $0x850] sm:$0xff]
    %v2395 = vld [vmem:[%s6 + $0x858] sm:$0xff]
    %v2396 = vld [vmem:[%s6 + $0x860] sm:$0xff]
    %v2397 = vld [vmem:[%s6 + $0x868] sm:$0xff]
    %v2398 = vld [vmem:[%s6 + $0x870] sm:$0xff]
    %v2399 = vld [vmem:[%s6 + $0x878] sm:$0xff]
    %v2400 = vld [vmem:[%s6 + $0x880] sm:$0xff]
    %v2401 = vld [vmem:[%s6 + $0x888] sm:$0xff]
    %v2402 = vld [vmem:[%s6 + $0x890] sm:$0xff]
    %v2403 = vld [vmem:[%s6 + $0x898] sm:$0xff]
    %v2404 = vld [vmem:[%s6 + $0x8a0] sm:$0xff]
    %v2405 = vld [vmem:[%s6 + $0x8a8] sm:$0xff]
    %v2406 = vld [vmem:[%s6 + $0x8b0] sm:$0xff]
    %v2407 = vld [vmem:[%s6 + $0x8b8] sm:$0xff]
    %v2408 = vld [vmem:[%s6 + $0x8c0] sm:$0xff]
    %v2409 = vld [vmem:[%s6 + $0x8c8] sm:$0xff]
    %v2410 = vld [vmem:[%s6 + $0x8d0] sm:$0xff]
    %v2411 = vld [vmem:[%s6 + $0x8d8] sm:$0xff]
    %v2412 = vld [vmem:[%s6 + $0x8e0] sm:$0xff]
    %v2413 = vld [vmem:[%s6 + $0x8e8] sm:$0xff]
    %v2414 = vld [vmem:[%s6 + $0x8f0] sm:$0xff]
    %v2415 = vld [vmem:[%s6 + $0x8f8] sm:$0xff]
    %v2416 = vld [vmem:[%s6 + $0x900] sm:$0xff]
    %v2417 = vld [vmem:[%s6 + $0x908] sm:$0xff]
    %v2418 = vld [vmem:[%s6 + $0x910] sm:$0xff]
    %v2419 = vld [vmem:[%s6 + $0x918] sm:$0xff]
    %v2420 = vld [vmem:[%s6 + $0x920] sm:$0xff]
    %v2421 = vld [vmem:[%s6 + $0x928] sm:$0xff]
    %v2422 = vld [vmem:[%s6 + $0x930] sm:$0xff]
    %v2423 = vld [vmem:[%s6 + $0x938] sm:$0xff]
    %v2424 = vld [vmem:[%s6 + $0x940] sm:$0xff]
    %v2425 = vld [vmem:[%s6 + $0x948] sm:$0xff]
    %v2426 = vld [vmem:[%s6 + $0x950] sm:$0xff]
    %v2427 = vld [vmem:[%s6 + $0x958] sm:$0xff]
    %v2428 = vld [vmem:[%s6 + $0x960] sm:$0xff]
    %v2429 = vld [vmem:[%s6 + $0x968] sm:$0xff]
    %v2430 = vld [vmem:[%s6 + $0x970] sm:$0xff]
    %v2431 = vld [vmem:[%s6 + $0x978] sm:$0xff]
    %v2432 = vld [vmem:[%s6 + $0x980] sm:$0xff]
    %v2433 = vld [vmem:[%s6 + $0x988] sm:$0xff]
    %v2434 = vld [vmem:[%s6 + $0x990] sm:$0xff]
    %v2435 = vld [vmem:[%s6 + $0x998] sm:$0xff]
    %v2436 = vld [vmem:[%s6 + $0x9a0] sm:$0xff]
    %v2437 = vld [vmem:[%s6 + $0x9a8] sm:$0xff]
    %v2438 = vld [vmem:[%s6 + $0x9b0] sm:$0xff]
    %v2439 = vld [vmem:[%s6 + $0x9b8] sm:$0xff]
    %v2440 = vld [vmem:[%s6 + $0x9c0] sm:$0xff]
    %v2441 = vld [vmem:[%s6 + $0x9c8] sm:$0xff]
    %v2442 = vld [vmem:[%s6 + $0x9d0] sm:$0xff]
    %v2443 = vld [vmem:[%s6 + $0x9d8] sm:$0xff]
    %v2444 = vld [vmem:[%s6 + $0x9e0] sm:$0xff]
    %v2445 = vld [vmem:[%s6 + $0x9e8] sm:$0xff]
    %v2446 = vld [vmem:[%s6 + $0x9f0] sm:$0xff]
    %v2447 = vld [vmem:[%s6 + $0x9f8] sm:$0xff]
    %v2448 = vld [vmem:[%s6 + $0xa00] sm:$0xff]
    %v2449 = vld [vmem:[%s6 + $0xa08] sm:$0xff]
    %v2450 = vld [vmem:[%s6 + $0xa10] sm:$0xff]
    %v2451 = vld [vmem:[%s6 + $0xa18] sm:$0xff]
    %v2452 = vld [vmem:[%s6 + $0xa20] sm:$0xff]
    %v2453 = vld [vmem:[%s6 + $0xa28] sm:$0xff]
    %v2454 = vld [vmem:[%s6 + $0xa30] sm:$0xff]
    %v2455 = vld [vmem:[%s6 + $0xa38] sm:$0xff]
    %v2456 = vld [vmem:[%s6 + $0xa40] sm:$0xff]
    %v2457 = vld [vmem:[%s6 + $0xa48] sm:$0xff]
    %v2458 = vld [vmem:[%s6 + $0xa50] sm:$0xff]
    %v2459 = vld [vmem:[%s6 + $0xa58] sm:$0xff]
    %v2460 = vld [vmem:[%s6 + $0xa60] sm:$0xff]
    %v2461 = vld [vmem:[%s6 + $0xa68] sm:$0xff]
    %v2462 = vld [vmem:[%s6 + $0xa70] sm:$0xff]
    %v2463 = vld [vmem:[%s6 + $0xa78] sm:$0xff]
    %v2464 = vld [vmem:[%s6 + $0xa80] sm:$0xff]
    %v2465 = vld [vmem:[%s6 + $0xa88] sm:$0xff]
    %v2466 = vld [vmem:[%s6 + $0xa90] sm:$0xff]
    %v2467 = vld [vmem:[%s6 + $0xa98] sm:$0xff]
    %v2468 = vld [vmem:[%s6 + $0xaa0] sm:$0xff]
    %v2469 = vld [vmem:[%s6 + $0xaa8] sm:$0xff]
    %v2470 = vld [vmem:[%s6 + $0xab0] sm:$0xff]
    %v2471 = vld [vmem:[%s6 + $0xab8] sm:$0xff]
    %v2472 = vld [vmem:[%s6 + $0xac0] sm:$0xff]
    %v2473 = vld [vmem:[%s6 + $0xac8] sm:$0xff]
    %v2474 = vld [vmem:[%s6 + $0xad0] sm:$0xff]
    %v2475 = vld [vmem:[%s6 + $0xad8] sm:$0xff]
    %v2476 = vld [vmem:[%s6 + $0xae0] sm:$0xff]
    %v2477 = vld [vmem:[%s6 + $0xae8] sm:$0xff]
    %v2478 = vld [vmem:[%s6 + $0xaf0] sm:$0xff]
    %v2479 = vld [vmem:[%s6 + $0xaf8] sm:$0xff]
    %v2480 = vld [vmem:[%s6 + $0xb00] sm:$0xff]
    %v2481 = vld [vmem:[%s6 + $0xb08] sm:$0xff]
    %v2482 = vld [vmem:[%s6 + $0xb10] sm:$0xff]
    %v2483 = vld [vmem:[%s6 + $0xb18] sm:$0xff]
    %v2484 = vld [vmem:[%s6 + $0xb20] sm:$0xff]
    %v2485 = vld [vmem:[%s6 + $0xb28] sm:$0xff]
    %v2486 = vld [vmem:[%s6 + $0xb30] sm:$0xff]
    %v2487 = vld [vmem:[%s6 + $0xb38] sm:$0xff]
    %v2488 = vld [vmem:[%s6 + $0xb40] sm:$0xff]
    %v2489 = vld [vmem:[%s6 + $0xb48] sm:$0xff]
    %v2490 = vld [vmem:[%s6 + $0xb50] sm:$0xff]
    %v2491 = vld [vmem:[%s6 + $0xb58] sm:$0xff]
    %v2492 = vld [vmem:[%s6 + $0xb60] sm:$0xff]
    %v2493 = vld [vmem:[%s6 + $0xb68] sm:$0xff]
    %v2494 = vld [vmem:[%s6 + $0xb70] sm:$0xff]
    %v2495 = vld [vmem:[%s6 + $0xb78] sm:$0xff]
    %v2496 = vld [vmem:[%s6 + $0xb80] sm:$0xff]
    %v2497 = vld [vmem:[%s6 + $0xb88] sm:$0xff]
    %v2498 = vld [vmem:[%s6 + $0xb90] sm:$0xff]
    %v2499 = vld [vmem:[%s6 + $0xb98] sm:$0xff]
    %v2500 = vld [vmem:[%s6 + $0xba0] sm:$0xff]
    %v2501 = vld [vmem:[%s6 + $0xba8] sm:$0xff]
    %v2502 = vld [vmem:[%s6 + $0xbb0] sm:$0xff]
    %v2503 = vld [vmem:[%s6 + $0xbb8] sm:$0xff]
    %v2504 = vld [vmem:[%s6 + $0xbc0] sm:$0xff]
    %v2505 = vld [vmem:[%s6 + $0xbc8] sm:$0xff]
    %v2506 = vld [vmem:[%s6 + $0xbd0] sm:$0xff]
    %v2507 = vld [vmem:[%s6 + $0xbd8] sm:$0xff]
    %v2508 = vld [vmem:[%s6 + $0xbe0] sm:$0xff]
    %v2509 = vld [vmem:[%s6 + $0xbe8] sm:$0xff]
    %v2510 = vld [vmem:[%s6 + $0xbf0] sm:$0xff]
    %v2511 = vld [vmem:[%s6 + $0xbf8] sm:$0xff]
    %v2512 = vld [vmem:[%s6 + $0xc00] sm:$0xff]
    %v2513 = vld [vmem:[%s6 + $0xc08] sm:$0xff]
    %v2514 = vld [vmem:[%s6 + $0xc10] sm:$0xff]
    %v2515 = vld [vmem:[%s6 + $0xc18] sm:$0xff]
    %v2516 = vld [vmem:[%s6 + $0xc20] sm:$0xff]
    %v2517 = vld [vmem:[%s6 + $0xc28] sm:$0xff]
    %v2518 = vld [vmem:[%s6 + $0xc30] sm:$0xff]
    %v2519 = vld [vmem:[%s6 + $0xc38] sm:$0xff]
    %v2520 = vld [vmem:[%s6 + $0xc40] sm:$0xff]
    %v2521 = vld [vmem:[%s6 + $0xc48] sm:$0xff]
    %v2522 = vld [vmem:[%s6 + $0xc50] sm:$0xff]
    %v2523 = vld [vmem:[%s6 + $0xc58] sm:$0xff]
    %v2524 = vld [vmem:[%s6 + $0xc60] sm:$0xff]
    %v2525 = vld [vmem:[%s6 + $0xc68] sm:$0xff]
    %v2526 = vld [vmem:[%s6 + $0xc70] sm:$0xff]
    %v2527 = vld [vmem:[%s6 + $0xc78] sm:$0xff]
    %v2528 = vld [vmem:[%s6 + $0xc80] sm:$0xff]
    %v2529 = vld [vmem:[%s6 + $0xc88] sm:$0xff]
    %v2530 = vld [vmem:[%s6 + $0xc90] sm:$0xff]
    %v2531 = vld [vmem:[%s6 + $0xc98] sm:$0xff]
    %v2532 = vld [vmem:[%s6 + $0xca0] sm:$0xff]
    %v2533 = vld [vmem:[%s6 + $0xca8] sm:$0xff]
    %v2534 = vld [vmem:[%s6 + $0xcb0] sm:$0xff]
    %v2535 = vld [vmem:[%s6 + $0xcb8] sm:$0xff]
    %v2536 = vld [vmem:[%s6 + $0xcc0] sm:$0xff]
    %v2537 = vld [vmem:[%s6 + $0xcc8] sm:$0xff]
    %v2538 = vld [vmem:[%s6 + $0xcd0] sm:$0xff]
    %v2539 = vld [vmem:[%s6 + $0xcd8] sm:$0xff]
    %v2540 = vld [vmem:[%s6 + $0xce0] sm:$0xff]
    %v2541 = vld [vmem:[%s6 + $0xce8] sm:$0xff]
    %v2542 = vld [vmem:[%s6 + $0xcf0] sm:$0xff]
    %v2543 = vld [vmem:[%s6 + $0xcf8] sm:$0xff]
    %v2544 = vld [vmem:[%s6 + $0xd00] sm:$0xff]
    %v2545 = vld [vmem:[%s6 + $0xd08] sm:$0xff]
    %v2546 = vld [vmem:[%s6 + $0xd10] sm:$0xff]
    %v2547 = vld [vmem:[%s6 + $0xd18] sm:$0xff]
    %v2548 = vld [vmem:[%s6 + $0xd20] sm:$0xff]
    %v2549 = vld [vmem:[%s6 + $0xd28] sm:$0xff]
    %v2550 = vld [vmem:[%s6 + $0xd30] sm:$0xff]
    %v2551 = vld [vmem:[%s6 + $0xd38] sm:$0xff]
    %v2552 = vld [vmem:[%s6 + $0xd40] sm:$0xff]
    %v2553 = vld [vmem:[%s6 + $0xd48] sm:$0xff]
    %v2554 = vld [vmem:[%s6 + $0xd50] sm:$0xff]
    %v2555 = vld [vmem:[%s6 + $0xd58] sm:$0xff]
    %v2556 = vld [vmem:[%s6 + $0xd60] sm:$0xff]
    %v2557 = vld [vmem:[%s6 + $0xd68] sm:$0xff]
    %v2558 = vld [vmem:[%s6 + $0xd70] sm:$0xff]
    %v2559 = vld [vmem:[%s6 + $0xd78] sm:$0xff]
    %v2560 = vld [vmem:[%s6 + $0xd80] sm:$0xff]
    %v2561 = vld [vmem:[%s6 + $0xd88] sm:$0xff]
    %v2562 = vld [vmem:[%s6 + $0xd90] sm:$0xff]
    %v2563 = vld [vmem:[%s6 + $0xd98] sm:$0xff]
    %v2564 = vld [vmem:[%s6 + $0xda0] sm:$0xff]
    %v2565 = vld [vmem:[%s6 + $0xda8] sm:$0xff]
    %v2566 = vld [vmem:[%s6 + $0xdb0] sm:$0xff]
    %v2567 = vld [vmem:[%s6 + $0xdb8] sm:$0xff]
    %v2568 = vld [vmem:[%s6 + $0xdc0] sm:$0xff]
    %v2569 = vld [vmem:[%s6 + $0xdc8] sm:$0xff]
    %v2570 = vld [vmem:[%s6 + $0xdd0] sm:$0xff]
    %v2571 = vld [vmem:[%s6 + $0xdd8] sm:$0xff]
    %v2572 = vld [vmem:[%s6 + $0xde0] sm:$0xff]
    %v2573 = vld [vmem:[%s6 + $0xde8] sm:$0xff]
    %v2574 = vld [vmem:[%s6 + $0xdf0] sm:$0xff]
    %v2575 = vld [vmem:[%s6 + $0xdf8] sm:$0xff]
    %v2576 = vld [vmem:[%s6 + $0xe00] sm:$0xff]
    %v2577 = vld [vmem:[%s6 + $0xe08] sm:$0xff]
    %v2578 = vld [vmem:[%s6 + $0xe10] sm:$0xff]
    %v2579 = vld [vmem:[%s6 + $0xe18] sm:$0xff]
    %v2580 = vld [vmem:[%s6 + $0xe20] sm:$0xff]
    %v2581 = vld [vmem:[%s6 + $0xe28] sm:$0xff]
    %v2582 = vld [vmem:[%s6 + $0xe30] sm:$0xff]
    %v2583 = vld [vmem:[%s6 + $0xe38] sm:$0xff]
    %v2584 = vld [vmem:[%s6 + $0xe40] sm:$0xff]
    %v2585 = vld [vmem:[%s6 + $0xe48] sm:$0xff]
    %v2586 = vld [vmem:[%s6 + $0xe50] sm:$0xff]
    %v2587 = vld [vmem:[%s6 + $0xe58] sm:$0xff]
    %v2588 = vld [vmem:[%s6 + $0xe60] sm:$0xff]
    %v2589 = vld [vmem:[%s6 + $0xe68] sm:$0xff]
    %v2590 = vld [vmem:[%s6 + $0xe70] sm:$0xff]
    %v2591 = vld [vmem:[%s6 + $0xe78] sm:$0xff]
    %v2592 = vld [vmem:[%s6 + $0xe80] sm:$0xff]
    %v2593 = vld [vmem:[%s6 + $0xe88] sm:$0xff]
    %v2594 = vld [vmem:[%s6 + $0xe90] sm:$0xff]
    %v2595 = vld [vmem:[%s6 + $0xe98] sm:$0xff]
    %v2596 = vld [vmem:[%s6 + $0xea0] sm:$0xff]
    %v2597 = vld [vmem:[%s6 + $0xea8] sm:$0xff]
    %v2598 = vld [vmem:[%s6 + $0xeb0] sm:$0xff]
    %v2599 = vld [vmem:[%s6 + $0xeb8] sm:$0xff]
    %v2600 = vld [vmem:[%s6 + $0xec0] sm:$0xff]
    %v2601 = vld [vmem:[%s6 + $0xec8] sm:$0xff]
    %v2602 = vld [vmem:[%s6 + $0xed0] sm:$0xff]
    %v2603 = vld [vmem:[%s6 + $0xed8] sm:$0xff]
    %v2604 = vld [vmem:[%s6 + $0xee0] sm:$0xff]
    %v2605 = vld [vmem:[%s6 + $0xee8] sm:$0xff]
    %v2606 = vld [vmem:[%s6 + $0xef0] sm:$0xff]
    %v2607 = vld [vmem:[%s6 + $0xef8] sm:$0xff]
    %v2608 = vld [vmem:[%s6 + $0xf00] sm:$0xff]
    %v2609 = vld [vmem:[%s6 + $0xf08] sm:$0xff]
    %v2610 = vld [vmem:[%s6 + $0xf10] sm:$0xff]
    %v2611 = vld [vmem:[%s6 + $0xf18] sm:$0xff]
    %v2612 = vld [vmem:[%s6 + $0xf20] sm:$0xff]
    %v2613 = vld [vmem:[%s6 + $0xf28] sm:$0xff]
    %v2614 = vld [vmem:[%s6 + $0xf30] sm:$0xff]
    %v2615 = vld [vmem:[%s6 + $0xf38] sm:$0xff]
    %v2616 = vld [vmem:[%s6 + $0xf40] sm:$0xff]
    %v2617 = vld [vmem:[%s6 + $0xf48] sm:$0xff]
    %v2618 = vld [vmem:[%s6 + $0xf50] sm:$0xff]
    %v2619 = vld [vmem:[%s6 + $0xf58] sm:$0xff]
    %v2620 = vld [vmem:[%s6 + $0xf60] sm:$0xff]
    %v2621 = vld [vmem:[%s6 + $0xf68] sm:$0xff]
    %v2622 = vld [vmem:[%s6 + $0xf70] sm:$0xff]
    %v2623 = vld [vmem:[%s6 + $0xf78] sm:$0xff]
    %v2624 = vld [vmem:[%s6 + $0xf80] sm:$0xff]
    %v2625 = vld [vmem:[%s6 + $0xf88] sm:$0xff]
    %v2626 = vld [vmem:[%s6 + $0xf90] sm:$0xff]
    %v2627 = vld [vmem:[%s6 + $0xf98] sm:$0xff]
    %v2628 = vld [vmem:[%s6 + $0xfa0] sm:$0xff]
    %v2629 = vld [vmem:[%s6 + $0xfa8] sm:$0xff]
    %v2630 = vld [vmem:[%s6 + $0xfb0] sm:$0xff]
    %v2631 = vld [vmem:[%s6 + $0xfb8] sm:$0xff]
    %v2632 = vld [vmem:[%s6 + $0xfc0] sm:$0xff]
    %v2633 = vld [vmem:[%s6 + $0xfc8] sm:$0xff]
    %v2634 = vld [vmem:[%s6 + $0xfd0] sm:$0xff]
    %v2635 = vld [vmem:[%s6 + $0xfd8] sm:$0xff]
    %v2636 = vld [vmem:[%s6 + $0xfe0] sm:$0xff]
    %v2637 = vld [vmem:[%s6 + $0xfe8] sm:$0xff]
    %v2638 = vld [vmem:[%s6 + $0xff0] sm:$0xff]
    %v2639 = vld [vmem:[%s6 + $0xff8] sm:$0xff]
    %v2640 = vld [vmem:[%s6 + $0x1000] sm:$0xff]
    %v2641 = vld [vmem:[%s6 + $0x1008] sm:$0xff]
    %v2642 = vld [vmem:[%s6 + $0x1010] sm:$0xff]
    %v2643 = vld [vmem:[%s6 + $0x1018] sm:$0xff]
    %v2644 = vld [vmem:[%s6 + $0x1020] sm:$0xff]
    %v2645 = vld [vmem:[%s6 + $0x1028] sm:$0xff]
    %v2646 = vld [vmem:[%s6 + $0x1030] sm:$0xff]
    %v2647 = vld [vmem:[%s6 + $0x1038] sm:$0xff]
    %v2648 = vld [vmem:[%s6 + $0x1040] sm:$0xff]
    %v2649 = vld [vmem:[%s6 + $0x1048] sm:$0xff]
    %v2650 = vld [vmem:[%s6 + $0x1050] sm:$0xff]
    %v2651 = vld [vmem:[%s6 + $0x1058] sm:$0xff]
    %v2652 = vld [vmem:[%s6 + $0x1060] sm:$0xff]
    %v2653 = vld [vmem:[%s6 + $0x1068] sm:$0xff]
    %v2654 = vld [vmem:[%s6 + $0x1070] sm:$0xff]
    %v2655 = vld [vmem:[%s6 + $0x1078] sm:$0xff]
    %v2656 = vld [vmem:[%s6 + $0x1080] sm:$0xff]
    %v2657 = vld [vmem:[%s6 + $0x1088] sm:$0xff]
    %v2658 = vld [vmem:[%s6 + $0x1090] sm:$0xff]
    %v2659 = vld [vmem:[%s6 + $0x1098] sm:$0xff]
    %v2660 = vld [vmem:[%s6 + $0x10a0] sm:$0xff]
    %v2661 = vld [vmem:[%s6 + $0x10a8] sm:$0xff]
    %v2662 = vld [vmem:[%s6 + $0x10b0] sm:$0xff]
    %v2663 = vld [vmem:[%s6 + $0x10b8] sm:$0xff]
    %v2664 = vld [vmem:[%s6 + $0x10c0] sm:$0xff]
    %v2665 = vld [vmem:[%s6 + $0x10c8] sm:$0xff]
    %v2666 = vld [vmem:[%s6 + $0x10d0] sm:$0xff]
    %v2667 = vld [vmem:[%s6 + $0x10d8] sm:$0xff]
    %v2668 = vld [vmem:[%s6 + $0x10e0] sm:$0xff]
    %v2669 = vld [vmem:[%s6 + $0x10e8] sm:$0xff]
    %v2670 = vld [vmem:[%s6 + $0x10f0] sm:$0xff]
    %v2671 = vld [vmem:[%s6 + $0x10f8] sm:$0xff]
    %v2672 = vld [vmem:[%s6 + $0x1100] sm:$0xff]
    %v2673 = vld [vmem:[%s6 + $0x1108] sm:$0xff]
    %v2674 = vld [vmem:[%s6 + $0x1110] sm:$0xff]
    %v2675 = vld [vmem:[%s6 + $0x1118] sm:$0xff]
    %v2676 = vld [vmem:[%s6 + $0x1120] sm:$0xff]
    %v2677 = vld [vmem:[%s6 + $0x1128] sm:$0xff]
    %v2678 = vld [vmem:[%s6 + $0x1130] sm:$0xff]
    %v2679 = vld [vmem:[%s6 + $0x1138] sm:$0xff]
    %v2680 = vld [vmem:[%s6 + $0x1140] sm:$0xff]
    %v2681 = vld [vmem:[%s6 + $0x1148] sm:$0xff]
    %v2682 = vld [vmem:[%s6 + $0x1150] sm:$0xff]
    %v2683 = vld [vmem:[%s6 + $0x1158] sm:$0xff]
    %v2684 = vld [vmem:[%s6 + $0x1160] sm:$0xff]
    %v2685 = vld [vmem:[%s6 + $0x1168] sm:$0xff]
    %v2686 = vld [vmem:[%s6 + $0x1170] sm:$0xff]
    %v2687 = vld [vmem:[%s6 + $0x1178] sm:$0xff]
    %v2688 = vld [vmem:[%s6 + $0x1180] sm:$0xff]
    %v2689 = vld [vmem:[%s6 + $0x1188] sm:$0xff]
    %v2690 = vld [vmem:[%s6 + $0x1190] sm:$0xff]
    %v2691 = vld [vmem:[%s6 + $0x1198] sm:$0xff]
    %v2692 = vld [vmem:[%s6 + $0x11a0] sm:$0xff]
    %v2693 = vld [vmem:[%s6 + $0x11a8] sm:$0xff]
    %v2694 = vld [vmem:[%s6 + $0x11b0] sm:$0xff]
    %v2695 = vld [vmem:[%s6 + $0x11b8] sm:$0xff]
    %v2696 = vld [vmem:[%s6 + $0x11c0] sm:$0xff]
    %v2697 = vld [vmem:[%s6 + $0x11c8] sm:$0xff]
    %v2698 = vld [vmem:[%s6 + $0x11d0] sm:$0xff]
    %v2699 = vld [vmem:[%s6 + $0x11d8] sm:$0xff]
    %v2700 = vld [vmem:[%s6 + $0x11e0] sm:$0xff]
    %v2701 = vld [vmem:[%s6 + $0x11e8] sm:$0xff]
    %v2702 = vld [vmem:[%s6 + $0x11f0] sm:$0xff]
    %v2703 = vld [vmem:[%s6 + $0x11f8] sm:$0xff]
    %v2704 = vld [vmem:[%s6 + $0x1200] sm:$0xff]
    %v2705 = vld [vmem:[%s6 + $0x1208] sm:$0xff]
    %v2706 = vld [vmem:[%s6 + $0x1210] sm:$0xff]
    %v2707 = vld [vmem:[%s6 + $0x1218] sm:$0xff]
    %v2708 = vld [vmem:[%s6 + $0x1220] sm:$0xff]
    %v2709 = vld [vmem:[%s6 + $0x1228] sm:$0xff]
    %v2710 = vld [vmem:[%s6 + $0x1230] sm:$0xff]
    %v2711 = vld [vmem:[%s6 + $0x1238] sm:$0xff]
    %v2712 = vld [vmem:[%s6 + $0x1240] sm:$0xff]
    %v2713 = vld [vmem:[%s6 + $0x1248] sm:$0xff]
    %v2714 = vld [vmem:[%s6 + $0x1250] sm:$0xff]
    %v2715 = vld [vmem:[%s6 + $0x1258] sm:$0xff]
    %v2716 = vld [vmem:[%s6 + $0x1260] sm:$0xff]
    %v2717 = vld [vmem:[%s6 + $0x1268] sm:$0xff]
    %v2718 = vld [vmem:[%s6 + $0x1270] sm:$0xff]
    %v2719 = vld [vmem:[%s6 + $0x1278] sm:$0xff]
    %v2720 = vld [vmem:[%s6 + $0x1280] sm:$0xff]
    %v2721 = vld [vmem:[%s6 + $0x1288] sm:$0xff]
    %v2722 = vld [vmem:[%s6 + $0x1290] sm:$0xff]
    %v2723 = vld [vmem:[%s6 + $0x1298] sm:$0xff]
    %v2724 = vld [vmem:[%s6 + $0x12a0] sm:$0xff]
    %v2725 = vld [vmem:[%s6 + $0x12a8] sm:$0xff]
    %v2726 = vld [vmem:[%s6 + $0x12b0] sm:$0xff]
    %v2727 = vld [vmem:[%s6 + $0x12b8] sm:$0xff]
    %v2728 = vld [vmem:[%s6 + $0x12c0] sm:$0xff]
    %v2729 = vld [vmem:[%s6 + $0x12c8] sm:$0xff]
    %v2730 = vld [vmem:[%s6 + $0x12d0] sm:$0xff]
    %v2731 = vld [vmem:[%s6 + $0x12d8] sm:$0xff]
    %v2732 = vld [vmem:[%s6 + $0x12e0] sm:$0xff]
    %v2733 = vld [vmem:[%s6 + $0x12e8] sm:$0xff]
    %v2734 = vld [vmem:[%s6 + $0x12f0] sm:$0xff]
    %v2735 = vld [vmem:[%s6 + $0x12f8] sm:$0xff]
    %v2736 = vld [vmem:[%s6 + $0x1300] sm:$0xff]
    %v2737 = vld [vmem:[%s6 + $0x1308] sm:$0xff]
    %v2738 = vld [vmem:[%s6 + $0x1310] sm:$0xff]
    %v2739 = vld [vmem:[%s6 + $0x1318] sm:$0xff]
    %v2740 = vld [vmem:[%s6 + $0x1320] sm:$0xff]
    %v2741 = vld [vmem:[%s6 + $0x1328] sm:$0xff]
    %v2742 = vld [vmem:[%s6 + $0x1330] sm:$0xff]
    %v2743 = vld [vmem:[%s6 + $0x1338] sm:$0xff]
    %v2744 = vld [vmem:[%s6 + $0x1340] sm:$0xff]
    %v2745 = vld [vmem:[%s6 + $0x1348] sm:$0xff]
    %v2746 = vld [vmem:[%s6 + $0x1350] sm:$0xff]
    %v2747 = vld [vmem:[%s6 + $0x1358] sm:$0xff]
    %v2748 = vld [vmem:[%s6 + $0x1360] sm:$0xff]
    %v2749 = vld [vmem:[%s6 + $0x1368] sm:$0xff]
    %v2750 = vld [vmem:[%s6 + $0x1370] sm:$0xff]
    %v2751 = vld [vmem:[%s6 + $0x1378] sm:$0xff]
    %v2752 = vld [vmem:[%s6 + $0x1380] sm:$0xff]
    %v2753 = vld [vmem:[%s6 + $0x1388] sm:$0xff]
    %v2754 = vld [vmem:[%s6 + $0x1390] sm:$0xff]
    %v2755 = vld [vmem:[%s6 + $0x1398] sm:$0xff]
    %v2756 = vld [vmem:[%s6 + $0x13a0] sm:$0xff]
    %v2757 = vld [vmem:[%s6 + $0x13a8] sm:$0xff]
    %v2758 = vld [vmem:[%s6 + $0x13b0] sm:$0xff]
    %v2759 = vld [vmem:[%s6 + $0x13b8] sm:$0xff]
    %v2760 = vld [vmem:[%s6 + $0x13c0] sm:$0xff]
    %v2761 = vld [vmem:[%s6 + $0x13c8] sm:$0xff]
    %v2762 = vld [vmem:[%s6 + $0x13d0] sm:$0xff]
    %v2763 = vld [vmem:[%s6 + $0x13d8] sm:$0xff]
    %v2764 = vld [vmem:[%s6 + $0x13e0] sm:$0xff]
    %v2765 = vld [vmem:[%s6 + $0x13e8] sm:$0xff]
    %v2766 = vld [vmem:[%s6 + $0x13f0] sm:$0xff]
    %v2767 = vld [vmem:[%s6 + $0x13f8] sm:$0xff]
    %2768 = vmatprep.subr.mxu0 %v2129
    %2769 = vmatpush1.msra.mxu0 %v2128
    %2770 = vmatprep.subr.mxu0 %v2149
    %2771 = vmatpush1.msra.mxu0 %v2148
    %2772 = vmatprep.subr.mxu0 %v2169
    %2773 = vmatpush1.msra.mxu0 %v2168
    %2774 = vmatprep.subr.mxu0 %v2189
    %2775 = vmatpush1.msra.mxu0 %v2188
    %2776 = vmatprep.subr.mxu0 %v2209
    %2777 = vmatpush1.msra.mxu0 %v2208
    %2778 = vmatprep.subr.mxu0 %v2229
    %2779 = vmatpush1.msra.mxu0 %v2228
    %2780 = vmatprep.subr.mxu0 %v2249
    %2781 = vmatpush1.msra.mxu0 %v2248
    %2782 = vmatprep.subr.mxu0 %v2269
    %2783 = vmatpush1.msra.mxu0 %v2268
    %2784 = vmatprep.subr.mxu0 %v2289
    %2785 = vmatpush1.msra.mxu0 %v2288
    %2786 = vmatprep.subr.mxu0 %v2309
    %2787 = vmatpush1.msra.mxu0 %v2308
    %2788 = vmatprep.subr.mxu0 %v2329
    %2789 = vmatpush1.msra.mxu0 %v2328
    %2790 = vmatprep.subr.mxu0 %v2349
    %2791 = vmatpush1.msra.mxu0 %v2348
    %2792 = vmatprep.subr.mxu0 %v2369
    %2793 = vmatpush1.msra.mxu0 %v2368
    %2794 = vmatprep.subr.mxu0 %v2389
    %2795 = vmatpush1.msra.mxu0 %v2388
    %2796 = vmatprep.subr.mxu0 %v2409
    %2797 = vmatpush1.msra.mxu0 %v2408
    %2798 = vmatprep.subr.mxu0 %v2429
    %2799 = vmatpush1.msra.mxu0 %v2428
    %2800 = vmatprep.subr.mxu0 %v2449
    %2801 = vmatpush1.msra.mxu0 %v2448
    %2802 = vmatprep.subr.mxu0 %v2469
    %2803 = vmatpush1.msra.mxu0 %v2468
    %2804 = vmatprep.subr.mxu0 %v2489
    %2805 = vmatpush1.msra.mxu0 %v2488
    %2806 = vmatprep.subr.mxu0 %v2509
    %2807 = vmatpush1.msra.mxu0 %v2508
    %2808 = vmatprep.subr.mxu0 %v2529
    %2809 = vmatpush1.msra.mxu0 %v2528
    %2810 = vmatprep.subr.mxu0 %v2549
    %2811 = vmatpush1.msra.mxu0 %v2548
    %2812 = vmatprep.subr.mxu0 %v2569
    %2813 = vmatpush1.msra.mxu0 %v2568
    %2814 = vmatprep.subr.mxu0 %v2589
    %2815 = vmatpush1.msra.mxu0 %v2588
    %2816 = vmatprep.subr.mxu0 %v2609
    %2817 = vmatpush1.msra.mxu0 %v2608
    %2818 = vmatprep.subr.mxu0 %v2629
    %2819 = vmatpush1.msra.mxu0 %v2628
    %2820 = vmatprep.subr.mxu0 %v2649
    %2821 = vmatpush1.msra.mxu0 %v2648
    %2822 = vmatprep.subr.mxu0 %v2669
    %2823 = vmatpush1.msra.mxu0 %v2668
    %2824 = vmatprep.subr.mxu0 %v2689
    %2825 = vmatpush1.msra.mxu0 %v2688
    %2826 = vmatprep.subr.mxu0 %v2709
    %2827 = vmatpush1.msra.mxu0 %v2708
    %2828 = vmatprep.subr.mxu0 %v2729
    %2829 = vmatpush1.msra.mxu0 %v2728
    %2830 = vmatprep.subr.mxu0 %v2749
    %2831 = vmatpush1.msra.mxu0 %v2748
    %2832 = vmatprep.mubr.f32.mxu0 %v2093
    %2833 = vmatmul.mubr.f32.gmra.mrb[0].mxu0 %v2091
    %v2834 = vpop.f32.mrb[0].mxu0
    %v2835 = vadd.f32 0.0, %v2834
    %v2836 = vpop.f32.mrb[0].mxu0
    %v2837 = vadd.f32 0.0, %v2836
    %2838 = vdwg.mxu0
    %2839 = vmatprep.subr.mxu0 %v2131
    %2840 = vmatpush1.msra.mxu0 %v2130
    %2841 = vmatprep.subr.mxu0 %v2151
    %2842 = vmatpush1.msra.mxu0 %v2150
    %2843 = vmatprep.subr.mxu0 %v2171
    %2844 = vmatpush1.msra.mxu0 %v2170
    %2845 = vmatprep.subr.mxu0 %v2191
    %2846 = vmatpush1.msra.mxu0 %v2190
    %2847 = vmatprep.subr.mxu0 %v2211
    %2848 = vmatpush1.msra.mxu0 %v2210
    %2849 = vmatprep.subr.mxu0 %v2231
    %2850 = vmatpush1.msra.mxu0 %v2230
    %2851 = vmatprep.subr.mxu0 %v2251
    %2852 = vmatpush1.msra.mxu0 %v2250
    %2853 = vmatprep.subr.mxu0 %v2271
    %2854 = vmatpush1.msra.mxu0 %v2270
    %2855 = vmatprep.subr.mxu0 %v2291
    %2856 = vmatpush1.msra.mxu0 %v2290
    %2857 = vmatprep.subr.mxu0 %v2311
    %2858 = vmatpush1.msra.mxu0 %v2310
    %2859 = vmatprep.subr.mxu0 %v2331
    %2860 = vmatpush1.msra.mxu0 %v2330
    %2861 = vmatprep.subr.mxu0 %v2351
    %2862 = vmatpush1.msra.mxu0 %v2350
    %2863 = vmatprep.subr.mxu0 %v2371
    %2864 = vmatpush1.msra.mxu0 %v2370
    %2865 = vmatprep.subr.mxu0 %v2391
    %2866 = vmatpush1.msra.mxu0 %v2390
    %2867 = vmatprep.subr.mxu0 %v2411
    %2868 = vmatpush1.msra.mxu0 %v2410
    %2869 = vmatprep.subr.mxu0 %v2431
    %2870 = vmatpush1.msra.mxu0 %v2430
    %2871 = vmatprep.subr.mxu0 %v2451
    %2872 = vmatpush1.msra.mxu0 %v2450
    %2873 = vmatprep.subr.mxu0 %v2471
    %2874 = vmatpush1.msra.mxu0 %v2470
    %2875 = vmatprep.subr.mxu0 %v2491
    %2876 = vmatpush1.msra.mxu0 %v2490
    %2877 = vmatprep.subr.mxu0 %v2511
    %2878 = vmatpush1.msra.mxu0 %v2510
    %2879 = vmatprep.subr.mxu0 %v2531
    %2880 = vmatpush1.msra.mxu0 %v2530
    %2881 = vmatprep.subr.mxu0 %v2551
    %2882 = vmatpush1.msra.mxu0 %v2550
    %2883 = vmatprep.subr.mxu0 %v2571
    %2884 = vmatpush1.msra.mxu0 %v2570
    %2885 = vmatprep.subr.mxu0 %v2591
    %2886 = vmatpush1.msra.mxu0 %v2590
    %2887 = vmatprep.subr.mxu0 %v2611
    %2888 = vmatpush1.msra.mxu0 %v2610
    %2889 = vmatprep.subr.mxu0 %v2631
    %2890 = vmatpush1.msra.mxu0 %v2630
    %2891 = vmatprep.subr.mxu0 %v2651
    %2892 = vmatpush1.msra.mxu0 %v2650
    %2893 = vmatprep.subr.mxu0 %v2671
    %2894 = vmatpush1.msra.mxu0 %v2670
    %2895 = vmatprep.subr.mxu0 %v2691
    %2896 = vmatpush1.msra.mxu0 %v2690
    %2897 = vmatprep.subr.mxu0 %v2711
    %2898 = vmatpush1.msra.mxu0 %v2710
    %2899 = vmatprep.subr.mxu0 %v2731
    %2900 = vmatpush1.msra.mxu0 %v2730
    %2901 = vmatprep.subr.mxu0 %v2751
    %2902 = vmatpush1.msra.mxu0 %v2750
    %2903 = vmatprep.mubr.f32.mxu0 %v2093
    %2904 = vmatmul.mubr.f32.gmra.mrb[0].mxu0 %v2091
    %v2905 = vpop.f32.mrb[0].mxu0
    %v2906 = vadd.f32 0.0, %v2905
    %v2907 = vpop.f32.mrb[0].mxu0
    %v2908 = vadd.f32 0.0, %v2907
    %2909 = vdwg.mxu0
    %2910 = vmatprep.subr.mxu0 %v2133
    %2911 = vmatpush1.msra.mxu0 %v2132
    %2912 = vmatprep.subr.mxu0 %v2153
    %2913 = vmatpush1.msra.mxu0 %v2152
    %2914 = vmatprep.subr.mxu0 %v2173
    %2915 = vmatpush1.msra.mxu0 %v2172
    %2916 = vmatprep.subr.mxu0 %v2193
    %2917 = vmatpush1.msra.mxu0 %v2192
    %2918 = vmatprep.subr.mxu0 %v2213
    %2919 = vmatpush1.msra.mxu0 %v2212
    %2920 = vmatprep.subr.mxu0 %v2233
    %2921 = vmatpush1.msra.mxu0 %v2232
    %2922 = vmatprep.subr.mxu0 %v2253
    %2923 = vmatpush1.msra.mxu0 %v2252
    %2924 = vmatprep.subr.mxu0 %v2273
    %2925 = vmatpush1.msra.mxu0 %v2272
    %2926 = vmatprep.subr.mxu0 %v2293
    %2927 = vmatpush1.msra.mxu0 %v2292
    %2928 = vmatprep.subr.mxu0 %v2313
    %2929 = vmatpush1.msra.mxu0 %v2312
    %2930 = vmatprep.subr.mxu0 %v2333
    %2931 = vmatpush1.msra.mxu0 %v2332
    %2932 = vmatprep.subr.mxu0 %v2353
    %2933 = vmatpush1.msra.mxu0 %v2352
    %2934 = vmatprep.subr.mxu0 %v2373
    %2935 = vmatpush1.msra.mxu0 %v2372
    %2936 = vmatprep.subr.mxu0 %v2393
    %2937 = vmatpush1.msra.mxu0 %v2392
    %2938 = vmatprep.subr.mxu0 %v2413
    %2939 = vmatpush1.msra.mxu0 %v2412
    %2940 = vmatprep.subr.mxu0 %v2433
    %2941 = vmatpush1.msra.mxu0 %v2432
    %2942 = vmatprep.subr.mxu0 %v2453
    %2943 = vmatpush1.msra.mxu0 %v2452
    %2944 = vmatprep.subr.mxu0 %v2473
    %2945 = vmatpush1.msra.mxu0 %v2472
    %2946 = vmatprep.subr.mxu0 %v2493
    %2947 = vmatpush1.msra.mxu0 %v2492
    %2948 = vmatprep.subr.mxu0 %v2513
    %2949 = vmatpush1.msra.mxu0 %v2512
    %2950 = vmatprep.subr.mxu0 %v2533
    %2951 = vmatpush1.msra.mxu0 %v2532
    %2952 = vmatprep.subr.mxu0 %v2553
    %2953 = vmatpush1.msra.mxu0 %v2552
    %2954 = vmatprep.subr.mxu0 %v2573
    %2955 = vmatpush1.msra.mxu0 %v2572
    %2956 = vmatprep.subr.mxu0 %v2593
    %2957 = vmatpush1.msra.mxu0 %v2592
    %2958 = vmatprep.subr.mxu0 %v2613
    %2959 = vmatpush1.msra.mxu0 %v2612
    %2960 = vmatprep.subr.mxu0 %v2633
    %2961 = vmatpush1.msra.mxu0 %v2632
    %2962 = vmatprep.subr.mxu0 %v2653
    %2963 = vmatpush1.msra.mxu0 %v2652
    %2964 = vmatprep.subr.mxu0 %v2673
    %2965 = vmatpush1.msra.mxu0 %v2672
    %2966 = vmatprep.subr.mxu0 %v2693
    %2967 = vmatpush1.msra.mxu0 %v2692
    %2968 = vmatprep.subr.mxu0 %v2713
    %2969 = vmatpush1.msra.mxu0 %v2712
    %2970 = vmatprep.subr.mxu0 %v2733
    %2971 = vmatpush1.msra.mxu0 %v2732
    %2972 = vmatprep.subr.mxu0 %v2753
    %2973 = vmatpush1.msra.mxu0 %v2752
    %2974 = vmatprep.mubr.f32.mxu0 %v2093
    %2975 = vmatmul.mubr.f32.gmra.mrb[0].mxu0 %v2091
    %v2976 = vpop.f32.mrb[0].mxu0
    %v2977 = vadd.f32 0.0, %v2976
    %v2978 = vpop.f32.mrb[0].mxu0
    %v2979 = vadd.f32 0.0, %v2978
    %2980 = vdwg.mxu0
    %2981 = vmatprep.subr.mxu0 %v2135
    %2982 = vmatpush1.msra.mxu0 %v2134
    %2983 = vmatprep.subr.mxu0 %v2155
    %2984 = vmatpush1.msra.mxu0 %v2154
    %2985 = vmatprep.subr.mxu0 %v2175
    %2986 = vmatpush1.msra.mxu0 %v2174
    %2987 = vmatprep.subr.mxu0 %v2195
    %2988 = vmatpush1.msra.mxu0 %v2194
    %2989 = vmatprep.subr.mxu0 %v2215
    %2990 = vmatpush1.msra.mxu0 %v2214
    %2991 = vmatprep.subr.mxu0 %v2235
    %2992 = vmatpush1.msra.mxu0 %v2234
    %2993 = vmatprep.subr.mxu0 %v2255
    %2994 = vmatpush1.msra.mxu0 %v2254
    %2995 = vmatprep.subr.mxu0 %v2275
    %2996 = vmatpush1.msra.mxu0 %v2274
    %2997 = vmatprep.subr.mxu0 %v2295
    %2998 = vmatpush1.msra.mxu0 %v2294
    %2999 = vmatprep.subr.mxu0 %v2315
    %3000 = vmatpush1.msra.mxu0 %v2314
    %3001 = vmatprep.subr.mxu0 %v2335
    %3002 = vmatpush1.msra.mxu0 %v2334
    %3003 = vmatprep.subr.mxu0 %v2355
    %3004 = vmatpush1.msra.mxu0 %v2354
    %3005 = vmatprep.subr.mxu0 %v2375
    %3006 = vmatpush1.msra.mxu0 %v2374
    %3007 = vmatprep.subr.mxu0 %v2395
    %3008 = vmatpush1.msra.mxu0 %v2394
    %3009 = vmatprep.subr.mxu0 %v2415
    %3010 = vmatpush1.msra.mxu0 %v2414
    %3011 = vmatprep.subr.mxu0 %v2435
    %3012 = vmatpush1.msra.mxu0 %v2434
    %3013 = vmatprep.subr.mxu0 %v2455
    %3014 = vmatpush1.msra.mxu0 %v2454
    %3015 = vmatprep.subr.mxu0 %v2475
    %3016 = vmatpush1.msra.mxu0 %v2474
    %3017 = vmatprep.subr.mxu0 %v2495
    %3018 = vmatpush1.msra.mxu0 %v2494
    %3019 = vmatprep.subr.mxu0 %v2515
    %3020 = vmatpush1.msra.mxu0 %v2514
    %3021 = vmatprep.subr.mxu0 %v2535
    %3022 = vmatpush1.msra.mxu0 %v2534
    %3023 = vmatprep.subr.mxu0 %v2555
    %3024 = vmatpush1.msra.mxu0 %v2554
    %3025 = vmatprep.subr.mxu0 %v2575
    %3026 = vmatpush1.msra.mxu0 %v2574
    %3027 = vmatprep.subr.mxu0 %v2595
    %3028 = vmatpush1.msra.mxu0 %v2594
    %3029 = vmatprep.subr.mxu0 %v2615
    %3030 = vmatpush1.msra.mxu0 %v2614
    %3031 = vmatprep.subr.mxu0 %v2635
    %3032 = vmatpush1.msra.mxu0 %v2634
    %3033 = vmatprep.subr.mxu0 %v2655
    %3034 = vmatpush1.msra.mxu0 %v2654
    %3035 = vmatprep.subr.mxu0 %v2675
    %3036 = vmatpush1.msra.mxu0 %v2674
    %3037 = vmatprep.subr.mxu0 %v2695
    %3038 = vmatpush1.msra.mxu0 %v2694
    %3039 = vmatprep.subr.mxu0 %v2715
    %3040 = vmatpush1.msra.mxu0 %v2714
    %3041 = vmatprep.subr.mxu0 %v2735
    %3042 = vmatpush1.msra.mxu0 %v2734
    %3043 = vmatprep.subr.mxu0 %v2755
    %3044 = vmatpush1.msra.mxu0 %v2754
    %3045 = vmatprep.mubr.f32.mxu0 %v2093
    %3046 = vmatmul.mubr.f32.gmra.mrb[0].mxu0 %v2091
    %v3047 = vpop.f32.mrb[0].mxu0
    %v3048 = vadd.f32 0.0, %v3047
    %v3049 = vpop.f32.mrb[0].mxu0
    %v3050 = vadd.f32 0.0, %v3049
    %3051 = vdwg.mxu0
    %3052 = vmatprep.subr.mxu0 %v2137
    %3053 = vmatpush1.msra.mxu0 %v2136
    %3054 = vmatprep.subr.mxu0 %v2157
    %3055 = vmatpush1.msra.mxu0 %v2156
    %3056 = vmatprep.subr.mxu0 %v2177
    %3057 = vmatpush1.msra.mxu0 %v2176
    %3058 = vmatprep.subr.mxu0 %v2197
    %3059 = vmatpush1.msra.mxu0 %v2196
    %3060 = vmatprep.subr.mxu0 %v2217
    %3061 = vmatpush1.msra.mxu0 %v2216
    %3062 = vmatprep.subr.mxu0 %v2237
    %3063 = vmatpush1.msra.mxu0 %v2236
    %3064 = vmatprep.subr.mxu0 %v2257
    %3065 = vmatpush1.msra.mxu0 %v2256
    %3066 = vmatprep.subr.mxu0 %v2277
    %3067 = vmatpush1.msra.mxu0 %v2276
    %3068 = vmatprep.subr.mxu0 %v2297
    %3069 = vmatpush1.msra.mxu0 %v2296
    %3070 = vmatprep.subr.mxu0 %v2317
    %3071 = vmatpush1.msra.mxu0 %v2316
    %3072 = vmatprep.subr.mxu0 %v2337
    %3073 = vmatpush1.msra.mxu0 %v2336
    %3074 = vmatprep.subr.mxu0 %v2357
    %3075 = vmatpush1.msra.mxu0 %v2356
    %3076 = vmatprep.subr.mxu0 %v2377
    %3077 = vmatpush1.msra.mxu0 %v2376
    %3078 = vmatprep.subr.mxu0 %v2397
    %3079 = vmatpush1.msra.mxu0 %v2396
    %3080 = vmatprep.subr.mxu0 %v2417
    %3081 = vmatpush1.msra.mxu0 %v2416
    %3082 = vmatprep.subr.mxu0 %v2437
    %3083 = vmatpush1.msra.mxu0 %v2436
    %3084 = vmatprep.subr.mxu0 %v2457
    %3085 = vmatpush1.msra.mxu0 %v2456
    %3086 = vmatprep.subr.mxu0 %v2477
    %3087 = vmatpush1.msra.mxu0 %v2476
    %3088 = vmatprep.subr.mxu0 %v2497
    %3089 = vmatpush1.msra.mxu0 %v2496
    %3090 = vmatprep.subr.mxu0 %v2517
    %3091 = vmatpush1.msra.mxu0 %v2516
    %3092 = vmatprep.subr.mxu0 %v2537
    %3093 = vmatpush1.msra.mxu0 %v2536
    %3094 = vmatprep.subr.mxu0 %v2557
    %3095 = vmatpush1.msra.mxu0 %v2556
    %3096 = vmatprep.subr.mxu0 %v2577
    %3097 = vmatpush1.msra.mxu0 %v2576
    %3098 = vmatprep.subr.mxu0 %v2597
    %3099 = vmatpush1.msra.mxu0 %v2596
    %3100 = vmatprep.subr.mxu0 %v2617
    %3101 = vmatpush1.msra.mxu0 %v2616
    %3102 = vmatprep.subr.mxu0 %v2637
    %3103 = vmatpush1.msra.mxu0 %v2636
    %3104 = vmatprep.subr.mxu0 %v2657
    %3105 = vmatpush1.msra.mxu0 %v2656
    %3106 = vmatprep.subr.mxu0 %v2677
    %3107 = vmatpush1.msra.mxu0 %v2676
    %3108 = vmatprep.subr.mxu0 %v2697
    %3109 = vmatpush1.msra.mxu0 %v2696
    %3110 = vmatprep.subr.mxu0 %v2717
    %3111 = vmatpush1.msra.mxu0 %v2716
    %3112 = vmatprep.subr.mxu0 %v2737
    %3113 = vmatpush1.msra.mxu0 %v2736
    %3114 = vmatprep.subr.mxu0 %v2757
    %3115 = vmatpush1.msra.mxu0 %v2756
    %3116 = vmatprep.mubr.f32.mxu0 %v2093
    %3117 = vmatmul.mubr.f32.gmra.mrb[0].mxu0 %v2091
    %v3118 = vpop.f32.mrb[0].mxu0
    %v3119 = vadd.f32 0.0, %v3118
    %v3120 = vpop.f32.mrb[0].mxu0
    %v3121 = vadd.f32 0.0, %v3120
    %3122 = vdwg.mxu0
    %3123 = vmatprep.subr.mxu0 %v2139
    %3124 = vmatpush1.msra.mxu0 %v2138
    %3125 = vmatprep.subr.mxu0 %v2159
    %3126 = vmatpush1.msra.mxu0 %v2158
    %3127 = vmatprep.subr.mxu0 %v2179
    %3128 = vmatpush1.msra.mxu0 %v2178
    %3129 = vmatprep.subr.mxu0 %v2199
    %3130 = vmatpush1.msra.mxu0 %v2198
    %3131 = vmatprep.subr.mxu0 %v2219
    %3132 = vmatpush1.msra.mxu0 %v2218
    %3133 = vmatprep.subr.mxu0 %v2239
    %3134 = vmatpush1.msra.mxu0 %v2238
    %3135 = vmatprep.subr.mxu0 %v2259
    %3136 = vmatpush1.msra.mxu0 %v2258
    %3137 = vmatprep.subr.mxu0 %v2279
    %3138 = vmatpush1.msra.mxu0 %v2278
    %3139 = vmatprep.subr.mxu0 %v2299
    %3140 = vmatpush1.msra.mxu0 %v2298
    %3141 = vmatprep.subr.mxu0 %v2319
    %3142 = vmatpush1.msra.mxu0 %v2318
    %3143 = vmatprep.subr.mxu0 %v2339
    %3144 = vmatpush1.msra.mxu0 %v2338
    %3145 = vmatprep.subr.mxu0 %v2359
    %3146 = vmatpush1.msra.mxu0 %v2358
    %3147 = vmatprep.subr.mxu0 %v2379
    %3148 = vmatpush1.msra.mxu0 %v2378
    %3149 = vmatprep.subr.mxu0 %v2399
    %3150 = vmatpush1.msra.mxu0 %v2398
    %3151 = vmatprep.subr.mxu0 %v2419
    %3152 = vmatpush1.msra.mxu0 %v2418
    %3153 = vmatprep.subr.mxu0 %v2439
    %3154 = vmatpush1.msra.mxu0 %v2438
    %3155 = vmatprep.subr.mxu0 %v2459
    %3156 = vmatpush1.msra.mxu0 %v2458
    %3157 = vmatprep.subr.mxu0 %v2479
    %3158 = vmatpush1.msra.mxu0 %v2478
    %3159 = vmatprep.subr.mxu0 %v2499
    %3160 = vmatpush1.msra.mxu0 %v2498
    %3161 = vmatprep.subr.mxu0 %v2519
    %3162 = vmatpush1.msra.mxu0 %v2518
    %3163 = vmatprep.subr.mxu0 %v2539
    %3164 = vmatpush1.msra.mxu0 %v2538
    %3165 = vmatprep.subr.mxu0 %v2559
    %3166 = vmatpush1.msra.mxu0 %v2558
    %3167 = vmatprep.subr.mxu0 %v2579
    %3168 = vmatpush1.msra.mxu0 %v2578
    %3169 = vmatprep.subr.mxu0 %v2599
    %3170 = vmatpush1.msra.mxu0 %v2598
    %3171 = vmatprep.subr.mxu0 %v2619
    %3172 = vmatpush1.msra.mxu0 %v2618
    %3173 = vmatprep.subr.mxu0 %v2639
    %3174 = vmatpush1.msra.mxu0 %v2638
    %3175 = vmatprep.subr.mxu0 %v2659
    %3176 = vmatpush1.msra.mxu0 %v2658
    %3177 = vmatprep.subr.mxu0 %v2679
    %3178 = vmatpush1.msra.mxu0 %v2678
    %3179 = vmatprep.subr.mxu0 %v2699
    %3180 = vmatpush1.msra.mxu0 %v2698
    %3181 = vmatprep.subr.mxu0 %v2719
    %3182 = vmatpush1.msra.mxu0 %v2718
    %3183 = vmatprep.subr.mxu0 %v2739
    %3184 = vmatpush1.msra.mxu0 %v2738
    %3185 = vmatprep.subr.mxu0 %v2759
    %3186 = vmatpush1.msra.mxu0 %v2758
    %3187 = vmatprep.mubr.f32.mxu0 %v2093
    %3188 = vmatmul.mubr.f32.gmra.mrb[0].mxu0 %v2091
    %v3189 = vpop.f32.mrb[0].mxu0
    %v3190 = vadd.f32 0.0, %v3189
    %v3191 = vpop.f32.mrb[0].mxu0
    %v3192 = vadd.f32 0.0, %v3191
    %3193 = vdwg.mxu0
    %3194 = vmatprep.subr.mxu0 %v2141
    %3195 = vmatpush1.msra.mxu0 %v2140
    %3196 = vmatprep.subr.mxu0 %v2161
    %3197 = vmatpush1.msra.mxu0 %v2160
    %3198 = vmatprep.subr.mxu0 %v2181
    %3199 = vmatpush1.msra.mxu0 %v2180
    %3200 = vmatprep.subr.mxu0 %v2201
    %3201 = vmatpush1.msra.mxu0 %v2200
    %3202 = vmatprep.subr.mxu0 %v2221
    %3203 = vmatpush1.msra.mxu0 %v2220
    %3204 = vmatprep.subr.mxu0 %v2241
    %3205 = vmatpush1.msra.mxu0 %v2240
    %3206 = vmatprep.subr.mxu0 %v2261
    %3207 = vmatpush1.msra.mxu0 %v2260
    %3208 = vmatprep.subr.mxu0 %v2281
    %3209 = vmatpush1.msra.mxu0 %v2280
    %3210 = vmatprep.subr.mxu0 %v2301
    %3211 = vmatpush1.msra.mxu0 %v2300
    %3212 = vmatprep.subr.mxu0 %v2321
    %3213 = vmatpush1.msra.mxu0 %v2320
    %3214 = vmatprep.subr.mxu0 %v2341
    %3215 = vmatpush1.msra.mxu0 %v2340
    %3216 = vmatprep.subr.mxu0 %v2361
    %3217 = vmatpush1.msra.mxu0 %v2360
    %3218 = vmatprep.subr.mxu0 %v2381
    %3219 = vmatpush1.msra.mxu0 %v2380
    %3220 = vmatprep.subr.mxu0 %v2401
    %3221 = vmatpush1.msra.mxu0 %v2400
    %3222 = vmatprep.subr.mxu0 %v2421
    %3223 = vmatpush1.msra.mxu0 %v2420
    %3224 = vmatprep.subr.mxu0 %v2441
    %3225 = vmatpush1.msra.mxu0 %v2440
    %3226 = vmatprep.subr.mxu0 %v2461
    %3227 = vmatpush1.msra.mxu0 %v2460
    %3228 = vmatprep.subr.mxu0 %v2481
    %3229 = vmatpush1.msra.mxu0 %v2480
    %3230 = vmatprep.subr.mxu0 %v2501
    %3231 = vmatpush1.msra.mxu0 %v2500
    %3232 = vmatprep.subr.mxu0 %v2521
    %3233 = vmatpush1.msra.mxu0 %v2520
    %3234 = vmatprep.subr.mxu0 %v2541
    %3235 = vmatpush1.msra.mxu0 %v2540
    %3236 = vmatprep.subr.mxu0 %v2561
    %3237 = vmatpush1.msra.mxu0 %v2560
    %3238 = vmatprep.subr.mxu0 %v2581
    %3239 = vmatpush1.msra.mxu0 %v2580
    %3240 = vmatprep.subr.mxu0 %v2601
    %3241 = vmatpush1.msra.mxu0 %v2600
    %3242 = vmatprep.subr.mxu0 %v2621
    %3243 = vmatpush1.msra.mxu0 %v2620
    %3244 = vmatprep.subr.mxu0 %v2641
    %3245 = vmatpush1.msra.mxu0 %v2640
    %3246 = vmatprep.subr.mxu0 %v2661
    %3247 = vmatpush1.msra.mxu0 %v2660
    %3248 = vmatprep.subr.mxu0 %v2681
    %3249 = vmatpush1.msra.mxu0 %v2680
    %3250 = vmatprep.subr.mxu0 %v2701
    %3251 = vmatpush1.msra.mxu0 %v2700
    %3252 = vmatprep.subr.mxu0 %v2721
    %3253 = vmatpush1.msra.mxu0 %v2720
    %3254 = vmatprep.subr.mxu0 %v2741
    %3255 = vmatpush1.msra.mxu0 %v2740
    %3256 = vmatprep.subr.mxu0 %v2761
    %3257 = vmatpush1.msra.mxu0 %v2760
    %3258 = vmatprep.mubr.f32.mxu0 %v2093
    %3259 = vmatmul.mubr.f32.gmra.mrb[0].mxu0 %v2091
    %v3260 = vpop.f32.mrb[0].mxu0
    %v3261 = vadd.f32 0.0, %v3260
    %v3262 = vpop.f32.mrb[0].mxu0
    %v3263 = vadd.f32 0.0, %v3262
    %3264 = vdwg.mxu0
    %3265 = vmatprep.subr.mxu0 %v2143
    %3266 = vmatpush1.msra.mxu0 %v2142
    %3267 = vmatprep.subr.mxu0 %v2163
    %3268 = vmatpush1.msra.mxu0 %v2162
    %3269 = vmatprep.subr.mxu0 %v2183
    %3270 = vmatpush1.msra.mxu0 %v2182
    %3271 = vmatprep.subr.mxu0 %v2203
    %3272 = vmatpush1.msra.mxu0 %v2202
    %3273 = vmatprep.subr.mxu0 %v2223
    %3274 = vmatpush1.msra.mxu0 %v2222
    %3275 = vmatprep.subr.mxu0 %v2243
    %3276 = vmatpush1.msra.mxu0 %v2242
    %3277 = vmatprep.subr.mxu0 %v2263
    %3278 = vmatpush1.msra.mxu0 %v2262
    %3279 = vmatprep.subr.mxu0 %v2283
    %3280 = vmatpush1.msra.mxu0 %v2282
    %3281 = vmatprep.subr.mxu0 %v2303
    %3282 = vmatpush1.msra.mxu0 %v2302
    %3283 = vmatprep.subr.mxu0 %v2323
    %3284 = vmatpush1.msra.mxu0 %v2322
    %3285 = vmatprep.subr.mxu0 %v2343
    %3286 = vmatpush1.msra.mxu0 %v2342
    %3287 = vmatprep.subr.mxu0 %v2363
    %3288 = vmatpush1.msra.mxu0 %v2362
    %3289 = vmatprep.subr.mxu0 %v2383
    %3290 = vmatpush1.msra.mxu0 %v2382
    %3291 = vmatprep.subr.mxu0 %v2403
    %3292 = vmatpush1.msra.mxu0 %v2402
    %3293 = vmatprep.subr.mxu0 %v2423
    %3294 = vmatpush1.msra.mxu0 %v2422
    %3295 = vmatprep.subr.mxu0 %v2443
    %3296 = vmatpush1.msra.mxu0 %v2442
    %3297 = vmatprep.subr.mxu0 %v2463
    %3298 = vmatpush1.msra.mxu0 %v2462
    %3299 = vmatprep.subr.mxu0 %v2483
    %3300 = vmatpush1.msra.mxu0 %v2482
    %3301 = vmatprep.subr.mxu0 %v2503
    %3302 = vmatpush1.msra.mxu0 %v2502
    %3303 = vmatprep.subr.mxu0 %v2523
    %3304 = vmatpush1.msra.mxu0 %v2522
    %3305 = vmatprep.subr.mxu0 %v2543
    %3306 = vmatpush1.msra.mxu0 %v2542
    %3307 = vmatprep.subr.mxu0 %v2563
    %3308 = vmatpush1.msra.mxu0 %v2562
    %3309 = vmatprep.subr.mxu0 %v2583
    %3310 = vmatpush1.msra.mxu0 %v2582
    %3311 = vmatprep.subr.mxu0 %v2603
    %3312 = vmatpush1.msra.mxu0 %v2602
    %3313 = vmatprep.subr.mxu0 %v2623
    %3314 = vmatpush1.msra.mxu0 %v2622
    %3315 = vmatprep.subr.mxu0 %v2643
    %3316 = vmatpush1.msra.mxu0 %v2642
    %3317 = vmatprep.subr.mxu0 %v2663
    %3318 = vmatpush1.msra.mxu0 %v2662
    %3319 = vmatprep.subr.mxu0 %v2683
    %3320 = vmatpush1.msra.mxu0 %v2682
    %3321 = vmatprep.subr.mxu0 %v2703
    %3322 = vmatpush1.msra.mxu0 %v2702
    %3323 = vmatprep.subr.mxu0 %v2723
    %3324 = vmatpush1.msra.mxu0 %v2722
    %3325 = vmatprep.subr.mxu0 %v2743
    %3326 = vmatpush1.msra.mxu0 %v2742
    %3327 = vmatprep.subr.mxu0 %v2763
    %3328 = vmatpush1.msra.mxu0 %v2762
    %3329 = vmatprep.mubr.f32.mxu0 %v2093
    %3330 = vmatmul.mubr.f32.gmra.mrb[0].mxu0 %v2091
    %v3331 = vpop.f32.mrb[0].mxu0
    %v3332 = vadd.f32 0.0, %v3331
    %v3333 = vpop.f32.mrb[0].mxu0
    %v3334 = vadd.f32 0.0, %v3333
    %3335 = vdwg.mxu0
    %3336 = vmatprep.subr.mxu0 %v2145
    %3337 = vmatpush1.msra.mxu0 %v2144
    %3338 = vmatprep.subr.mxu0 %v2165
    %3339 = vmatpush1.msra.mxu0 %v2164
    %3340 = vmatprep.subr.mxu0 %v2185
    %3341 = vmatpush1.msra.mxu0 %v2184
    %3342 = vmatprep.subr.mxu0 %v2205
    %3343 = vmatpush1.msra.mxu0 %v2204
    %3344 = vmatprep.subr.mxu0 %v2225
    %3345 = vmatpush1.msra.mxu0 %v2224
    %3346 = vmatprep.subr.mxu0 %v2245
    %3347 = vmatpush1.msra.mxu0 %v2244
    %3348 = vmatprep.subr.mxu0 %v2265
    %3349 = vmatpush1.msra.mxu0 %v2264
    %3350 = vmatprep.subr.mxu0 %v2285
    %3351 = vmatpush1.msra.mxu0 %v2284
    %3352 = vmatprep.subr.mxu0 %v2305
    %3353 = vmatpush1.msra.mxu0 %v2304
    %3354 = vmatprep.subr.mxu0 %v2325
    %3355 = vmatpush1.msra.mxu0 %v2324
    %3356 = vmatprep.subr.mxu0 %v2345
    %3357 = vmatpush1.msra.mxu0 %v2344
    %3358 = vmatprep.subr.mxu0 %v2365
    %3359 = vmatpush1.msra.mxu0 %v2364
    %3360 = vmatprep.subr.mxu0 %v2385
    %3361 = vmatpush1.msra.mxu0 %v2384
    %3362 = vmatprep.subr.mxu0 %v2405
    %3363 = vmatpush1.msra.mxu0 %v2404
    %3364 = vmatprep.subr.mxu0 %v2425
    %3365 = vmatpush1.msra.mxu0 %v2424
    %3366 = vmatprep.subr.mxu0 %v2445
    %3367 = vmatpush1.msra.mxu0 %v2444
    %3368 = vmatprep.subr.mxu0 %v2465
    %3369 = vmatpush1.msra.mxu0 %v2464
    %3370 = vmatprep.subr.mxu0 %v2485
    %3371 = vmatpush1.msra.mxu0 %v2484
    %3372 = vmatprep.subr.mxu0 %v2505
    %3373 = vmatpush1.msra.mxu0 %v2504
    %3374 = vmatprep.subr.mxu0 %v2525
    %3375 = vmatpush1.msra.mxu0 %v2524
    %3376 = vmatprep.subr.mxu0 %v2545
    %3377 = vmatpush1.msra.mxu0 %v2544
    %3378 = vmatprep.subr.mxu0 %v2565
    %3379 = vmatpush1.msra.mxu0 %v2564
    %3380 = vmatprep.subr.mxu0 %v2585
    %3381 = vmatpush1.msra.mxu0 %v2584
    %3382 = vmatprep.subr.mxu0 %v2605
    %3383 = vmatpush1.msra.mxu0 %v2604
    %3384 = vmatprep.subr.mxu0 %v2625
    %3385 = vmatpush1.msra.mxu0 %v2624
    %3386 = vmatprep.subr.mxu0 %v2645
    %3387 = vmatpush1.msra.mxu0 %v2644
    %3388 = vmatprep.subr.mxu0 %v2665
    %3389 = vmatpush1.msra.mxu0 %v2664
    %3390 = vmatprep.subr.mxu0 %v2685
    %3391 = vmatpush1.msra.mxu0 %v2684
    %3392 = vmatprep.subr.mxu0 %v2705
    %3393 = vmatpush1.msra.mxu0 %v2704
    %3394 = vmatprep.subr.mxu0 %v2725
    %3395 = vmatpush1.msra.mxu0 %v2724
    %3396 = vmatprep.subr.mxu0 %v2745
    %3397 = vmatpush1.msra.mxu0 %v2744
    %3398 = vmatprep.subr.mxu0 %v2765
    %3399 = vmatpush1.msra.mxu0 %v2764
    %3400 = vmatprep.mubr.f32.mxu0 %v2093
    %3401 = vmatmul.mubr.f32.gmra.mrb[0].mxu0 %v2091
    %v3402 = vpop.f32.mrb[0].mxu0
    %v3403 = vadd.f32 0.0, %v3402
    %v3404 = vpop.f32.mrb[0].mxu0
    %v3405 = vadd.f32 0.0, %v3404
    %3406 = vdwg.mxu0
    %3407 = vmatprep.subr.mxu0 %v2147
    %3408 = vmatpush1.msra.mxu0 %v2146
    %3409 = vmatprep.subr.mxu0 %v2167
    %3410 = vmatpush1.msra.mxu0 %v2166
    %3411 = vmatprep.subr.mxu0 %v2187
    %3412 = vmatpush1.msra.mxu0 %v2186
    %3413 = vmatprep.subr.mxu0 %v2207
    %3414 = vmatpush1.msra.mxu0 %v2206
    %3415 = vmatprep.subr.mxu0 %v2227
    %3416 = vmatpush1.msra.mxu0 %v2226
    %3417 = vmatprep.subr.mxu0 %v2247
    %3418 = vmatpush1.msra.mxu0 %v2246
    %3419 = vmatprep.subr.mxu0 %v2267
    %3420 = vmatpush1.msra.mxu0 %v2266
    %3421 = vmatprep.subr.mxu0 %v2287
    %3422 = vmatpush1.msra.mxu0 %v2286
    %3423 = vmatprep.subr.mxu0 %v2307
    %3424 = vmatpush1.msra.mxu0 %v2306
    %3425 = vmatprep.subr.mxu0 %v2327
    %3426 = vmatpush1.msra.mxu0 %v2326
    %3427 = vmatprep.subr.mxu0 %v2347
    %3428 = vmatpush1.msra.mxu0 %v2346
    %3429 = vmatprep.subr.mxu0 %v2367
    %3430 = vmatpush1.msra.mxu0 %v2366
    %3431 = vmatprep.subr.mxu0 %v2387
    %3432 = vmatpush1.msra.mxu0 %v2386
    %3433 = vmatprep.subr.mxu0 %v2407
    %3434 = vmatpush1.msra.mxu0 %v2406
    %3435 = vmatprep.subr.mxu0 %v2427
    %3436 = vmatpush1.msra.mxu0 %v2426
    %3437 = vmatprep.subr.mxu0 %v2447
    %3438 = vmatpush1.msra.mxu0 %v2446
    %3439 = vmatprep.subr.mxu0 %v2467
    %3440 = vmatpush1.msra.mxu0 %v2466
    %3441 = vmatprep.subr.mxu0 %v2487
    %3442 = vmatpush1.msra.mxu0 %v2486
    %3443 = vmatprep.subr.mxu0 %v2507
    %3444 = vmatpush1.msra.mxu0 %v2506
    %3445 = vmatprep.subr.mxu0 %v2527
    %3446 = vmatpush1.msra.mxu0 %v2526
    %3447 = vmatprep.subr.mxu0 %v2547
    %3448 = vmatpush1.msra.mxu0 %v2546
    %3449 = vmatprep.subr.mxu0 %v2567
    %3450 = vmatpush1.msra.mxu0 %v2566
    %3451 = vmatprep.subr.mxu0 %v2587
    %3452 = vmatpush1.msra.mxu0 %v2586
    %3453 = vmatprep.subr.mxu0 %v2607
    %3454 = vmatpush1.msra.mxu0 %v2606
    %3455 = vmatprep.subr.mxu0 %v2627
    %3456 = vmatpush1.msra.mxu0 %v2626
    %3457 = vmatprep.subr.mxu0 %v2647
    %3458 = vmatpush1.msra.mxu0 %v2646
    %3459 = vmatprep.subr.mxu0 %v2667
    %3460 = vmatpush1.msra.mxu0 %v2666
    %3461 = vmatprep.subr.mxu0 %v2687
    %3462 = vmatpush1.msra.mxu0 %v2686
    %3463 = vmatprep.subr.mxu0 %v2707
    %3464 = vmatpush1.msra.mxu0 %v2706
    %3465 = vmatprep.subr.mxu0 %v2727
    %3466 = vmatpush1.msra.mxu0 %v2726
    %3467 = vmatprep.subr.mxu0 %v2747
    %3468 = vmatpush1.msra.mxu0 %v2746
    %3469 = vmatprep.subr.mxu0 %v2767
    %3470 = vmatpush1.msra.mxu0 %v2766
    %3471 = vmatprep.mubr.f32.mxu0 %v2093
    %3472 = vmatmul.mubr.f32.gmra.mrb[0].mxu0 %v2091
    %v3473 = vpop.f32.mrb[0].mxu0
    %v3474 = vadd.f32 0.0, %v3473
    %v3475 = vpop.f32.mrb[0].mxu0
    %v3476 = vadd.f32 0.0, %v3475
    %3477 = vdwg.mxu0
    %vm3478 = vcmp.gt.f32.partialorder %v2835, 0.45
    %vm3479 = vcmp.gt.f32.partialorder %v2837, 0.45
    %vm3480 = vcmp.gt.f32.partialorder %v2906, 0.45
    %vm3481 = vcmp.gt.f32.partialorder %v2908, 0.45
    %vm3482 = vcmp.gt.f32.partialorder %v2977, 0.45
    %vm3483 = vcmp.gt.f32.partialorder %v2979, 0.45
    %vm3484 = vcmp.gt.f32.partialorder %v3048, 0.45
    %vm3485 = vcmp.gt.f32.partialorder %v3050, 0.45
    %vm3486 = vcmp.gt.f32.partialorder %v3119, 0.45
    %vm3487 = vcmp.gt.f32.partialorder %v3121, 0.45
    %vm3488 = vcmp.gt.f32.partialorder %v3190, 0.45
    %vm3489 = vcmp.gt.f32.partialorder %v3192, 0.45
    %vm3490 = vcmp.gt.f32.partialorder %v3261, 0.45
    %vm3491 = vcmp.gt.f32.partialorder %v3263, 0.45
    %vm3492 = vcmp.gt.f32.partialorder %v3332, 0.45
    %vm3493 = vcmp.gt.f32.partialorder %v3334, 0.45
    %vm3494 = vcmp.gt.f32.partialorder %v3403, 0.45
    %vm3495 = vcmp.gt.f32.partialorder %v3405, 0.45
    %vm3496 = vcmp.gt.f32.partialorder %v3474, 0.45
    %vm3497 = vcmp.gt.f32.partialorder %v3476, 0.45
    %v3498 = vsel %vm3478, 1, 0
    %v3499 = vsel %vm3479, 1, 0
    %v3500 = vsel %vm3480, 1, 0
    %v3501 = vsel %vm3481, 1, 0
    %v3502 = vsel %vm3482, 1, 0
    %v3503 = vsel %vm3483, 1, 0
    %v3504 = vsel %vm3484, 1, 0
    %v3505 = vsel %vm3485, 1, 0
    %v3506 = vsel %vm3486, 1, 0
    %v3507 = vsel %vm3487, 1, 0
    %v3508 = vsel %vm3488, 1, 0
    %v3509 = vsel %vm3489, 1, 0
    %v3510 = vsel %vm3490, 1, 0
    %v3511 = vsel %vm3491, 1, 0
    %v3512 = vsel %vm3492, 1, 0
    %v3513 = vsel %vm3493, 1, 0
    %v3514 = vsel %vm3494, 1, 0
    %v3515 = vsel %vm3495, 1, 0
    %v3516 = vsel %vm3496, 1, 0
    %v3517 = vsel %vm3497, 1, 0
    %3518 = vst [vmem:[#allocation4] sm:$0xff] %v3498
    %3519 = vst [vmem:[#allocation4 + $0x8] sm:$0xff] %v3499
    %3520 = vst [vmem:[#allocation4 + $0x10] sm:$0xff] %v3500
    %3521 = vst [vmem:[#allocation4 + $0x18] sm:$0xff] %v3501
    %3522 = vst [vmem:[#allocation4 + $0x20] sm:$0xff] %v3502
    %3523 = vst [vmem:[#allocation4 + $0x28] sm:$0xff] %v3503
    %3524 = vst [vmem:[#allocation4 + $0x30] sm:$0xff] %v3504
    %3525 = vst [vmem:[#allocation4 + $0x38] sm:$0xff] %v3505
    %3526 = vst [vmem:[#allocation4 + $0x40] sm:$0xff] %v3506
    %3527 = vst [vmem:[#allocation4 + $0x48] sm:$0xff] %v3507
    %3528 = vst [vmem:[#allocation4 + $0x50] sm:$0xff] %v3508
    %3529 = vst [vmem:[#allocation4 + $0x58] sm:$0xff] %v3509
    %3530 = vst [vmem:[#allocation4 + $0x60] sm:$0xff] %v3510
    %3531 = vst [vmem:[#allocation4 + $0x68] sm:$0xff] %v3511
    %3532 = vst [vmem:[#allocation4 + $0x70] sm:$0xff] %v3512
    %3533 = vst [vmem:[#allocation4 + $0x78] sm:$0xff] %v3513
    %3534 = vst [vmem:[#allocation4 + $0x80] sm:$0xff] %v3514
    %3535 = vst [vmem:[#allocation4 + $0x88] sm:$0xff] %v3515
    %3536 = vst [vmem:[#allocation4 + $0x90] sm:$0xff] %v3516
    %vm3537 = vcmask 523264
    %3538 = vst.msk [vmem:[#allocation4 + $0x98] sm:$0xff] %vm3537, %v3517
    // Predicated region
    $region30: #{tpu_custom_call.1} parent=1 // pred_check
      _
    $region31: #{tpu_custom_call.1} parent=1 // pred_check_branch
      %3540 = sbr.rel (0) target = $region33
    $region32: #{tpu_custom_call.1} parent=1 // pred_region
      %s3542 = ssub.s32 128, 128
      %3543 = vsyncadd [#allocation3], %s3542
      %s3545 = sshll.u32 [#allocation2], 4
      %s3546 = int_to_ptr.vmem [resolvable:$true] %s3545
      %3548 = dma.vmem_to_hbm [thread:$0]  %s3546, 128, %s7, [#allocation3]
    $region33: #{tpu_custom_call.1} parent=1 // pred_fallthru
      _
    // Predicated region
    $region34: #{tpu_custom_call.1} parent=1 // pred_check
      _
    $region35: #{tpu_custom_call.1} parent=1 // pred_check_branch
      %3550 = sbr.rel (0) target = $region37
    $region36: #{tpu_custom_call.1} parent=1 // pred_region
      %s3552 = ssub.s32 2560, 2560
      %3553 = vsyncadd [#allocation5], %s3552
      %s3555 = sshll.u32 [#allocation4], 4
      %s3556 = int_to_ptr.vmem [resolvable:$true] %s3555
      %3558 = dma.vmem_to_hbm [thread:$0]  %s3556, 2560, %s8, [#allocation5]
    $region37: #{tpu_custom_call.1} parent=1 // pred_fallthru
      _
    // Predicated region
    $region38: #{tpu_custom_call.1} parent=1 // pred_check
      _
    $region39: #{tpu_custom_call.1} parent=1 // pred_check_branch
      %3560 = sbr.rel (0) target = $region41
    $region40: #{tpu_custom_call.1} parent=1 // pred_region
      %3561 = dma.done [#allocation3], 128
    $region41: #{tpu_custom_call.1} parent=1 // pred_fallthru
      _
    // Predicated region
    $region42: #{tpu_custom_call.1} parent=1 // pred_check
      _
    $region43: #{tpu_custom_call.1} parent=1 // pred_check_branch
      %3563 = sbr.rel (0) target = $region45
    $region44: #{tpu_custom_call.1} parent=1 // pred_region
      %3564 = dma.done [#allocation5], 2560
    $region45: #{tpu_custom_call.1} parent=1 // pred_fallthru
      _
    %3565 = vsyncpa [#allocation3], 1
    %3566 = vsyncpa [#allocation5], 1

</llo_original>
